<compile_context>
chip_gen: v7x
topology: tpu7x:2x2x1
jax: 0.10.0
libtpu: 0.0.40
codegen_flags: <defaults>
</compile_context>

<pallas_src>
import functools

import jax
import jax.numpy as jnp
from jax import lax
from jax.experimental import pallas as pl
from jax.experimental.pallas import tpu as pltpu

NEG_SLOPE = 0.01     # nn.LeakyReLU() default negative_slope
BN_EPS = 1e-5        # nn.BatchNorm2d default eps
NEG_INF = -1e30      # mask value for padded j columns (exp -> 0 in f32)


def adj_kernel(xi_ref, xj_ref,
               w1, b1, w2, b2, w3, b3, w4, b4, w5, b5,
               out_ref, *, v_real):
    """One grid step: one batch element x one i-tile.

    xi_ref : (1, TI, D)  f32   rows i of x
    xj_ref : (1, Vp, D)  f32   all rows j (zero-padded to Vp, multiple of 128)
    w1..w4 : (Cin, Cout) bf16  BN-folded 1x1-conv weights
    b1..b4 : (1, Cout)   f32   BN-folded biases
    w5     : (1, C_last) f32   final single-channel 1x1 conv;  b5 : (1, 1)
    out_ref: (1, TI, 1, Vp) f32 row-softmax adjacency (lane-dense, sliced outside)
    """
    TI = xi_ref.shape[1]
    Vp = xj_ref.shape[1]
    D = xi_ref.shape[2]
    c_last = w5.shape[1]

    xi = xi_ref[0]                                            # (TI, D)
    xj = xj_ref[0]                                            # (Vp, D)
    phi = jnp.abs(xi[:, None, :] - xj[None, :, :])            # (TI, Vp, D)
    h = phi.reshape(TI * Vp, D).astype(jnp.bfloat16)          # pixel-major view

    def conv_act(h, w_ref, b_ref, out_dtype):
        # 1x1 conv over NCHW == per-pixel channel matmul; BN folded into w, b.
        y = jnp.dot(h, w_ref[...], preferred_element_type=jnp.float32)
        y = y + b_ref[...]
        y = jnp.maximum(y, NEG_SLOPE * y)                     # LeakyReLU
        return y.astype(out_dtype)

    h = conv_act(h, w1, b1, jnp.bfloat16)
    h = conv_act(h, w2, b2, jnp.bfloat16)
    h = conv_act(h, w3, b3, jnp.bfloat16)
    h = conv_act(h, w4, b4, jnp.float32)                      # feeds the f32 tail

    # final 1x1 conv -> single channel, batched over i so V_j stays on lanes.
    h3 = h.reshape(TI, Vp, c_last)
    w5b = jnp.broadcast_to(w5[...][None], (TI, 1, c_last))    # tiny (TI*C) bcast
    logits = jnp.einsum('iqc,ijc->iqj', w5b, h3,
                        preferred_element_type=jnp.float32) + b5[...]   # (TI,1,Vp)

    if Vp > v_real:                                           # mask padded columns
        col = lax.broadcasted_iota(jnp.int32, (TI, 1, Vp), 2)
        logits = jnp.where(col < v_real, logits, NEG_INF)

    # row softmax over j (lane axis), f32; approx reciprocal runs on the EUP.
    m = jnp.max(logits, axis=-1, keepdims=True)
    e = jnp.exp(logits - m)
    denom = jnp.sum(e, axis=-1, keepdims=True)
    out_ref[0] = e * pl.reciprocal(denom, approx=True)


def _choose_i_tile(V, v_pad, c_max, budget_bytes=8 << 20):
    """Largest i-tile (multiple of 8 dividing V, or V itself) whose per-step
    activation working set stays under budget_bytes -- comfortably inside the
    default scoped VMEM of every generation (v5e/v6e/v7x) incl. double-buffer
    headroom for the streamed xi / out blocks."""
    bytes_per_i_row = v_pad * (c_max * 6 + 8)     # bf16 h + f32 conv out + logits
    cap = max(int(budget_bytes // max(bytes_per_i_row, 1)), 1)
    if V <= 8 or V % 8 != 0:
        return V                                   # full-dim block is always legal
    ti = min(V, max(8, (cap // 8) * 8))
    while V % ti:
        ti -= 8
    return max(ti, 8)


def _attentive_topk_mask(A, beta):
    # plain-JAX glue for the args.model == 'Attentive_GNN' branch (top-k per row)
    # TODO(synk): tie-breaking may differ from torch.topk; rows are not
    #             renormalized (matches the PyTorch code, which also does not).
    B, V, _ = A.shape
    k = max(int(beta * V), 1)
    _, idx = lax.top_k(A, k)                       # (B, V, k)
    rows = jnp.arange(V)[:, None]

    def per_batch(a, ind):
        return jnp.zeros_like(a).at[rows, ind].set(a[rows, ind])

    return jax.vmap(per_batch)(A, idx)


def adj_layer_forward(x, params, *, model='GNN', beta=0.5):
    """x: (B, V, D) float32.  Returns A: (B, V, V) row-softmax adjacency."""
    B, V, D = x.shape
    v_pad = -(-V // 128) * 128                     # lane-dense j axis
    c_max = max(int(p.shape[-1]) for p in params[0::2])
    TI = _choose_i_tile(V, v_pad, c_max)
    n_i = V // TI

    x_j = x if v_pad == V else jnp.pad(x, ((0, 0), (0, v_pad - V), (0, 0)))

    param_specs = [pl.BlockSpec(p.shape, lambda b, i: (0, 0)) for p in params]
    kernel = functools.partial(adj_kernel, v_real=V)

    out = pl.pallas_call(
        kernel,
        out_shape=jax.ShapeDtypeStruct((B, V, 1, v_pad), jnp.float32),
        grid_spec=pltpu.PrefetchScalarGridSpec(
            num_scalar_prefetch=0,
            grid=(B, n_i),
            in_specs=[pl.BlockSpec((1, TI, D), lambda b, i: (b, i, 0)),
                      pl.BlockSpec((1, v_pad, D), lambda b, i: (b, 0, 0))]
                     + param_specs,
            out_specs=pl.BlockSpec((1, TI, 1, v_pad), lambda b, i: (b, i, 0, 0)),
        ),
        compiler_params=pltpu.CompilerParams(
            dimension_semantics=("parallel", "parallel")),
    )(x, x_j, *params)

    A = out[:, :, 0, :V]
    if model == 'Attentive_GNN':
        A = _attentive_topk_mask(A, beta)
    return A


def init_raw_params(key, in_dim, hidden_dim, ratio=(2, 2, 1, 1)):
    """Synthetic Conv2d(1x1) + BatchNorm2d parameters matching the module."""
    dims = [in_dim] + [hidden_dim * r for r in ratio]
    raw = []
    for i in range(len(ratio)):
        cin, cout = dims[i], dims[i + 1]
        key, kw, kb, kg, kbe, km, kv = jax.random.split(key, 7)
        w = jax.random.normal(kw, (cin, cout), jnp.float32) / jnp.sqrt(cin)
        b = 0.1 * jax.random.normal(kb, (1, cout), jnp.float32)
        gamma = 1.0 + 0.1 * jax.random.normal(kg, (1, cout), jnp.float32)
        beta = 0.1 * jax.random.normal(kbe, (1, cout), jnp.float32)
        mean = 0.1 * jax.random.normal(km, (1, cout), jnp.float32)
        var = 0.5 + jnp.abs(jax.random.normal(kv, (1, cout), jnp.float32))
        raw.append((w, b, gamma, beta, mean, var))
    key, kw, kb = jax.random.split(key, 3)
    c_last = dims[-1]
    w5 = jax.random.normal(kw, (1, c_last), jnp.float32) / jnp.sqrt(c_last)
    b5 = 0.1 * jax.random.normal(kb, (1, 1), jnp.float32)
    raw.append((w5, b5))
    return raw


def fold_params(raw):
    """Fold inference-mode BatchNorm into conv weights/biases; cast the matmul
    chain weights to bf16 (final 1-channel conv stays f32: it feeds the f32 tail)."""
    # TODO(synk): training-mode BatchNorm batch statistics are not reproduced.
    params = []
    for (w, b, gamma, beta, mean, var) in raw[:-1]:
        scale = gamma / jnp.sqrt(var + BN_EPS)                # (1, cout)
        shift = beta - mean * scale
        params.append((w * scale).astype(jnp.bfloat16))       # w' = w * scale
        params.append((b * scale + shift).astype(jnp.float32))
    w5, b5 = raw[-1]
    params += [w5.astype(jnp.float32), b5.astype(jnp.float32)]
    return params


def adj_layer_reference_f32(x, raw):
    """Pure-f32 reference with explicit (inference-mode) BatchNorm."""
    B, V, D = x.shape
    h = jnp.abs(x[:, :, None, :] - x[:, None, :, :]).reshape(B, V * V, D)
    for (w, b, gamma, beta, mean, var) in raw[:-1]:
        h = h @ w + b
        h = (h - mean) / jnp.sqrt(var + BN_EPS) * gamma + beta
        h = jnp.where(h >= 0, h, NEG_SLOPE * h)
    w5, b5 = raw[-1]
    logits = (h @ w5.T + b5).reshape(B, V, V)
    return jax.nn.softmax(logits, axis=-1)


def adj_layer_reference_matched(x, params):
    """Same numerics as the kernel (bf16 matmul chain, f32 elementwise/softmax)."""
    B, V, D = x.shape
    (w1, b1, w2, b2, w3, b3, w4, b4, w5, b5) = params
    h = jnp.abs(x[:, :, None, :] - x[:, None, :, :]).reshape(B, V * V, D)
    h = h.astype(jnp.bfloat16)

    def blk(h, w, b, out_dtype):
        y = jnp.dot(h, w, preferred_element_type=jnp.float32) + b
        y = jnp.maximum(y, NEG_SLOPE * y)
        return y.astype(out_dtype)

    h = blk(h, w1, b1, jnp.bfloat16)
    h = blk(h, w2, b2, jnp.bfloat16)
    h = blk(h, w3, b3, jnp.bfloat16)
    h = blk(h, w4, b4, jnp.float32)
    logits = jnp.dot(h, w5.T, preferred_element_type=jnp.float32) + b5
    logits = logits.reshape(B, V, V)
    return jax.nn.softmax(logits, axis=-1)


if __name__ == "__main__":
    key = jax.random.PRNGKey(0)
    B, V, in_dim, hidden_dim = 2, 8, 4, 32     # V = number of graph nodes
    kx, kp = jax.random.split(key)
    x = jax.random.normal(kx, (B, V, in_dim), jnp.float32)

    raw = init_raw_params(kp, in_dim, hidden_dim, ratio=(2, 2, 1, 1))
    params = fold_params(raw)

    A = adj_layer_forward(x, params)           # base path (args.model != 'Attentive_GNN')
    A = jax.block_until_ready(A)
    assert A.shape == (B, V, V)

    A_matched = adj_layer_reference_matched(x, params)
    A_f32 = adj_layer_reference_f32(x, raw)
    assert jnp.allclose(A, A_matched, atol=5e-3, rtol=1e-2), "mismatch vs bf16-matched ref"
    assert jnp.allclose(A, A_f32, atol=3e-2, rtol=1e-1), "mismatch vs f32 reference"
    assert jnp.allclose(A.sum(-1), 1.0, atol=5e-3), "rows do not sum to 1"

    # Attentive_GNN branch (top-k mask, plain-JAX glue)
    A_mask = jax.block_until_ready(
        adj_layer_forward(x, params, model='Attentive_GNN', beta=0.5))
    assert A_mask.shape == (B, V, V)

    print("KERNEL_OK")
</pallas_src>

<mosaic_0001>
module attributes {stable_mosaic.version = 11 : i64} {
  func.func @adj_kernel(%arg0: i32, %arg1: i32, %arg2: memref<1x8x4xf32, #tpu.memory_space<vmem>>, %arg3: memref<1x128x4xf32, #tpu.memory_space<vmem>>, %arg4: memref<4x64xbf16, #tpu.memory_space<vmem>>, %arg5: memref<1x64xf32, #tpu.memory_space<vmem>>, %arg6: memref<64x64xbf16, #tpu.memory_space<vmem>>, %arg7: memref<1x64xf32, #tpu.memory_space<vmem>>, %arg8: memref<64x32xbf16, #tpu.memory_space<vmem>>, %arg9: memref<1x32xf32, #tpu.memory_space<vmem>>, %arg10: memref<32x32xbf16, #tpu.memory_space<vmem>>, %arg11: memref<1x32xf32, #tpu.memory_space<vmem>>, %arg12: memref<1x32xf32, #tpu.memory_space<vmem>>, %arg13: memref<1x1xf32, #tpu.memory_space<vmem>>, %arg14: memref<1x8x1x128xf32, #tpu.memory_space<vmem>>) attributes {dimension_semantics = [#tpu.dimension_semantics<parallel>, #tpu.dimension_semantics<parallel>], iteration_bounds = array<i64: 2, 1>, scalar_prefetch = 0 : i64, scratch_operands = 0 : i64, tpu.core_type = #tpu.core_type<tc>, window_params = [{transform_indices = @transform_0, window_bounds = array<i64: 1, 8, 4>}, {transform_indices = @transform_1, window_bounds = array<i64: 1, 128, 4>}, {pipeline_mode = #tpu.pipeline_mode<synchronous>, transform_indices = @transform_2, window_bounds = array<i64: 4, 64>}, {pipeline_mode = #tpu.pipeline_mode<synchronous>, transform_indices = @transform_3, window_bounds = array<i64: 1, 64>}, {pipeline_mode = #tpu.pipeline_mode<synchronous>, transform_indices = @transform_4, window_bounds = array<i64: 64, 64>}, {pipeline_mode = #tpu.pipeline_mode<synchronous>, transform_indices = @transform_5, window_bounds = array<i64: 1, 64>}, {pipeline_mode = #tpu.pipeline_mode<synchronous>, transform_indices = @transform_6, window_bounds = array<i64: 64, 32>}, {pipeline_mode = #tpu.pipeline_mode<synchronous>, transform_indices = @transform_7, window_bounds = array<i64: 1, 32>}, {pipeline_mode = #tpu.pipeline_mode<synchronous>, transform_indices = @transform_8, window_bounds = array<i64: 32, 32>}, {pipeline_mode = #tpu.pipeline_mode<synchronous>, transform_indices = @transform_9, window_bounds = array<i64: 1, 32>}, {pipeline_mode = #tpu.pipeline_mode<synchronous>, transform_indices = @transform_10, window_bounds = array<i64: 1, 32>}, {pipeline_mode = #tpu.pipeline_mode<synchronous>, transform_indices = @transform_11, window_bounds = array<i64: 1, 1>}, {transform_indices = @transform_12, window_bounds = array<i64: 1, 8, 1, 128>}]} {
    %c0 = arith.constant 0 : index
    %c0_0 = arith.constant 0 : index
    %c0_1 = arith.constant 0 : index
    %0 = vector.load %arg2[%c0, %c0_0, %c0_1] : memref<1x8x4xf32, #tpu.memory_space<vmem>>, vector<1x8x4xf32>
    %1 = vector.shape_cast %0 : vector<1x8x4xf32> to vector<8x4xf32>
    %c0_2 = arith.constant 0 : index
    %c0_3 = arith.constant 0 : index
    %c0_4 = arith.constant 0 : index
    %2 = vector.load %arg3[%c0_2, %c0_3, %c0_4] : memref<1x128x4xf32, #tpu.memory_space<vmem>>, vector<1x128x4xf32>
    %3 = vector.shape_cast %2 : vector<1x128x4xf32> to vector<128x4xf32>
    %4 = vector.shape_cast %1 : vector<8x4xf32> to vector<8x1x4xf32>
    %5 = vector.shape_cast %3 : vector<128x4xf32> to vector<1x128x4xf32>
    %6 = vector.broadcast %4 : vector<8x1x4xf32> to vector<8x128x4xf32>
    %7 = vector.broadcast %5 : vector<1x128x4xf32> to vector<8x128x4xf32>
    %8 = arith.subf %6, %7 : vector<8x128x4xf32>
    %9 = math.absf %8 : vector<8x128x4xf32>
    %10 = vector.shape_cast %9 : vector<8x128x4xf32> to vector<1024x4xf32>
    %11 = arith.truncf %10 : vector<1024x4xf32> to vector<1024x4xbf16>
    %c0_5 = arith.constant 0 : index
    %c0_6 = arith.constant 0 : index
    %12 = vector.load %arg4[%c0_5, %c0_6] : memref<4x64xbf16, #tpu.memory_space<vmem>>, vector<4x64xbf16>
    %cst = arith.constant dense<0.000000e+00> : vector<1024x64xf32>
    %13 = tpu.matmul %11, %12, %cst {dimension_numbers = #tpu.dot_dimension_numbers<[1], [0], [0], [1], [0, 0, 1, 1], [], []>} : vector<1024x4xbf16>, vector<4x64xbf16>, vector<1024x64xf32> -> vector<1024x64xf32>
    %c0_7 = arith.constant 0 : index
    %c0_8 = arith.constant 0 : index
    %14 = vector.load %arg5[%c0_7, %c0_8] : memref<1x64xf32, #tpu.memory_space<vmem>>, vector<1x64xf32>
    %15 = vector.broadcast %14 : vector<1x64xf32> to vector<1024x64xf32>
    %16 = arith.addf %13, %15 : vector<1024x64xf32>
    %cst_9 = arith.constant 0.00999999977 : f32
    %17 = vector.broadcast %cst_9 : f32 to vector<1024x64xf32>
    %18 = arith.mulf %17, %16 : vector<1024x64xf32>
    %19 = arith.maximumf %16, %18 : vector<1024x64xf32>
    %20 = arith.truncf %19 : vector<1024x64xf32> to vector<1024x64xbf16>
    %c0_10 = arith.constant 0 : index
    %c0_11 = arith.constant 0 : index
    %21 = vector.load %arg6[%c0_10, %c0_11] : memref<64x64xbf16, #tpu.memory_space<vmem>>, vector<64x64xbf16>
    %cst_12 = arith.constant dense<0.000000e+00> : vector<1024x64xf32>
    %22 = tpu.matmul %20, %21, %cst_12 {dimension_numbers = #tpu.dot_dimension_numbers<[1], [0], [0], [1], [0, 0, 1, 1], [], []>} : vector<1024x64xbf16>, vector<64x64xbf16>, vector<1024x64xf32> -> vector<1024x64xf32>
    %c0_13 = arith.constant 0 : index
    %c0_14 = arith.constant 0 : index
    %23 = vector.load %arg7[%c0_13, %c0_14] : memref<1x64xf32, #tpu.memory_space<vmem>>, vector<1x64xf32>
    %24 = vector.broadcast %23 : vector<1x64xf32> to vector<1024x64xf32>
    %25 = arith.addf %22, %24 : vector<1024x64xf32>
    %cst_15 = arith.constant 0.00999999977 : f32
    %26 = vector.broadcast %cst_15 : f32 to vector<1024x64xf32>
    %27 = arith.mulf %26, %25 : vector<1024x64xf32>
    %28 = arith.maximumf %25, %27 : vector<1024x64xf32>
    %29 = arith.truncf %28 : vector<1024x64xf32> to vector<1024x64xbf16>
    %c0_16 = arith.constant 0 : index
    %c0_17 = arith.constant 0 : index
    %30 = vector.load %arg8[%c0_16, %c0_17] : memref<64x32xbf16, #tpu.memory_space<vmem>>, vector<64x32xbf16>
    %cst_18 = arith.constant dense<0.000000e+00> : vector<1024x32xf32>
    %31 = tpu.matmul %29, %30, %cst_18 {dimension_numbers = #tpu.dot_dimension_numbers<[1], [0], [0], [1], [0, 0, 1, 1], [], []>} : vector<1024x64xbf16>, vector<64x32xbf16>, vector<1024x32xf32> -> vector<1024x32xf32>
    %c0_19 = arith.constant 0 : index
    %c0_20 = arith.constant 0 : index
    %32 = vector.load %arg9[%c0_19, %c0_20] : memref<1x32xf32, #tpu.memory_space<vmem>>, vector<1x32xf32>
    %33 = vector.broadcast %32 : vector<1x32xf32> to vector<1024x32xf32>
    %34 = arith.addf %31, %33 : vector<1024x32xf32>
    %cst_21 = arith.constant 0.00999999977 : f32
    %35 = vector.broadcast %cst_21 : f32 to vector<1024x32xf32>
    %36 = arith.mulf %35, %34 : vector<1024x32xf32>
    %37 = arith.maximumf %34, %36 : vector<1024x32xf32>
    %38 = arith.truncf %37 : vector<1024x32xf32> to vector<1024x32xbf16>
    %c0_22 = arith.constant 0 : index
    %c0_23 = arith.constant 0 : index
    %39 = vector.load %arg10[%c0_22, %c0_23] : memref<32x32xbf16, #tpu.memory_space<vmem>>, vector<32x32xbf16>
    %cst_24 = arith.constant dense<0.000000e+00> : vector<1024x32xf32>
    %40 = tpu.matmul %38, %39, %cst_24 {dimension_numbers = #tpu.dot_dimension_numbers<[1], [0], [0], [1], [0, 0, 1, 1], [], []>} : vector<1024x32xbf16>, vector<32x32xbf16>, vector<1024x32xf32> -> vector<1024x32xf32>
    %c0_25 = arith.constant 0 : index
    %c0_26 = arith.constant 0 : index
    %41 = vector.load %arg11[%c0_25, %c0_26] : memref<1x32xf32, #tpu.memory_space<vmem>>, vector<1x32xf32>
    %42 = vector.broadcast %41 : vector<1x32xf32> to vector<1024x32xf32>
    %43 = arith.addf %40, %42 : vector<1024x32xf32>
    %cst_27 = arith.constant 0.00999999977 : f32
    %44 = vector.broadcast %cst_27 : f32 to vector<1024x32xf32>
    %45 = arith.mulf %44, %43 : vector<1024x32xf32>
    %46 = arith.maximumf %43, %45 : vector<1024x32xf32>
    %47 = vector.shape_cast %46 : vector<1024x32xf32> to vector<8x128x32xf32>
    %c0_28 = arith.constant 0 : index
    %c0_29 = arith.constant 0 : index
    %48 = vector.load %arg12[%c0_28, %c0_29] : memref<1x32xf32, #tpu.memory_space<vmem>>, vector<1x32xf32>
    %49 = vector.shape_cast %48 : vector<1x32xf32> to vector<1x1x32xf32>
    %50 = vector.shape_cast %49 : vector<1x1x32xf32> to vector<1x1x32xf32>
    %51 = vector.broadcast %50 : vector<1x1x32xf32> to vector<8x1x32xf32>
    "tpu.trace_start"() <{level = 10 : i32, message = "iqc,ijc->iqj"}> : () -> ()
    %cst_30 = arith.constant dense<0.000000e+00> : vector<8x1x128xf32>
    %52 = tpu.matmul %51, %47, %cst_30 {dimension_numbers = #tpu.dot_dimension_numbers<[2], [2], [1], [1], [0, 0, 0, 1, 1, 1], [0], [0]>} : vector<8x1x32xf32>, vector<8x128x32xf32>, vector<8x1x128xf32> -> vector<8x1x128xf32>
    "tpu.trace_stop"() : () -> ()
    %c0_31 = arith.constant 0 : index
    %c0_32 = arith.constant 0 : index
    %53 = vector.load %arg13[%c0_31, %c0_32] : memref<1x1xf32, #tpu.memory_space<vmem>>, vector<1x1xf32>
    %54 = vector.shape_cast %53 : vector<1x1xf32> to vector<1x1x1xf32>
    %55 = vector.broadcast %54 : vector<1x1x1xf32> to vector<8x1x128xf32>
    %56 = arith.addf %52, %55 : vector<8x1x128xf32>
    %57 = tpu.iota {dimensions = array<i32: 2>} : vector<8x1x128xi32>
    %c8_i32 = arith.constant 8 : i32
    %58 = vector.broadcast %c8_i32 : i32 to vector<8x1x128xi32>
    %59 = arith.cmpi slt, %57, %58 : vector<8x1x128xi32>
    %cst_33 = arith.constant -1.000000e+30 : f32
    %60 = vector.broadcast %cst_33 : f32 to vector<8x1x128xf32>
    %61 = arith.select %59, %56, %60 : vector<8x1x128xi1>, vector<8x1x128xf32>
    %cst_34 = arith.constant dense<0xFF800000> : vector<8x1xf32>
    %62 = vector.multi_reduction <maximumf>, %61, %cst_34 [2] : vector<8x1x128xf32> to vector<8x1xf32>
    %63 = vector.shape_cast %62 : vector<8x1xf32> to vector<8x1x1xf32>
    %64 = vector.broadcast %63 : vector<8x1x1xf32> to vector<8x1x128xf32>
    %65 = arith.subf %61, %64 : vector<8x1x128xf32>
    %66 = math.exp %65 : vector<8x1x128xf32>
    %cst_35 = arith.constant dense<0.000000e+00> : vector<8x1xf32>
    %67 = vector.multi_reduction <add>, %66, %cst_35 [2] : vector<8x1x128xf32> to vector<8x1xf32>
    %68 = vector.shape_cast %67 : vector<8x1xf32> to vector<8x1x1xf32>
    %69 = tpu.reciprocal %68 {approx = true} : vector<8x1x1xf32> -> vector<8x1x1xf32>
    %70 = vector.broadcast %69 : vector<8x1x1xf32> to vector<8x1x128xf32>
    %71 = arith.mulf %66, %70 : vector<8x1x128xf32>
    %c0_36 = arith.constant 0 : index
    %c0_37 = arith.constant 0 : index
    %c0_38 = arith.constant 0 : index
    %c0_39 = arith.constant 0 : index
    %72 = vector.load %arg14[%c0_36, %c0_37, %c0_38, %c0_39] : memref<1x8x1x128xf32, #tpu.memory_space<vmem>>, vector<1x8x1x128xf32>
    %73 = vector.shape_cast %72 : vector<1x8x1x128xf32> to vector<8x1x128xf32>
    %74 = vector.shape_cast %71 : vector<8x1x128xf32> to vector<1x8x1x128xf32>
    tpu.vector_store %arg14[%c0_36, %c0_37, %c0_38, %c0_39], %74 {strides = array<i32>} : memref<1x8x1x128xf32, #tpu.memory_space<vmem>>, vector<1x8x1x128xf32>,
    return
  }
  func.func @transform_0(%arg0: i32, %arg1: i32) -> (i32, i32, i32) {
    %c0_i32 = arith.constant 0 : i32
    %c0_i32_0 = arith.constant 0 : i32
    return %arg0, %arg1, %c0_i32 : i32, i32, i32
  }
  func.func @transform_1(%arg0: i32, %arg1: i32) -> (i32, i32, i32) {
    %c0_i32 = arith.constant 0 : i32
    %c0_i32_0 = arith.constant 0 : i32
    %c0_i32_1 = arith.constant 0 : i32
    return %arg0, %c0_i32, %c0_i32_0 : i32, i32, i32
  }
  func.func @transform_2(%arg0: i32, %arg1: i32) -> (i32, i32) {
    %c0_i32 = arith.constant 0 : i32
    %c0_i32_0 = arith.constant 0 : i32
    %c0_i32_1 = arith.constant 0 : i32
    return %c0_i32, %c0_i32_0 : i32, i32
  }
  func.func @transform_3(%arg0: i32, %arg1: i32) -> (i32, i32) {
    %c0_i32 = arith.constant 0 : i32
    %c0_i32_0 = arith.constant 0 : i32
    %c0_i32_1 = arith.constant 0 : i32
    return %c0_i32, %c0_i32_0 : i32, i32
  }
  func.func @transform_4(%arg0: i32, %arg1: i32) -> (i32, i32) {
    %c0_i32 = arith.constant 0 : i32
    %c0_i32_0 = arith.constant 0 : i32
    %c0_i32_1 = arith.constant 0 : i32
    return %c0_i32, %c0_i32_0 : i32, i32
  }
  func.func @transform_5(%arg0: i32, %arg1: i32) -> (i32, i32) {
    %c0_i32 = arith.constant 0 : i32
    %c0_i32_0 = arith.constant 0 : i32
    %c0_i32_1 = arith.constant 0 : i32
    return %c0_i32, %c0_i32_0 : i32, i32
  }
  func.func @transform_6(%arg0: i32, %arg1: i32) -> (i32, i32) {
    %c0_i32 = arith.constant 0 : i32
    %c0_i32_0 = arith.constant 0 : i32
    %c0_i32_1 = arith.constant 0 : i32
    return %c0_i32, %c0_i32_0 : i32, i32
  }
  func.func @transform_7(%arg0: i32, %arg1: i32) -> (i32, i32) {
    %c0_i32 = arith.constant 0 : i32
    %c0_i32_0 = arith.constant 0 : i32
    %c0_i32_1 = arith.constant 0 : i32
    return %c0_i32, %c0_i32_0 : i32, i32
  }
  func.func @transform_8(%arg0: i32, %arg1: i32) -> (i32, i32) {
    %c0_i32 = arith.constant 0 : i32
    %c0_i32_0 = arith.constant 0 : i32
    %c0_i32_1 = arith.constant 0 : i32
    return %c0_i32, %c0_i32_0 : i32, i32
  }
  func.func @transform_9(%arg0: i32, %arg1: i32) -> (i32, i32) {
    %c0_i32 = arith.constant 0 : i32
    %c0_i32_0 = arith.constant 0 : i32
    %c0_i32_1 = arith.constant 0 : i32
    return %c0_i32, %c0_i32_0 : i32, i32
  }
  func.func @transform_10(%arg0: i32, %arg1: i32) -> (i32, i32) {
    %c0_i32 = arith.constant 0 : i32
    %c0_i32_0 = arith.constant 0 : i32
    %c0_i32_1 = arith.constant 0 : i32
    return %c0_i32, %c0_i32_0 : i32, i32
  }
  func.func @transform_11(%arg0: i32, %arg1: i32) -> (i32, i32) {
    %c0_i32 = arith.constant 0 : i32
    %c0_i32_0 = arith.constant 0 : i32
    %c0_i32_1 = arith.constant 0 : i32
    return %c0_i32, %c0_i32_0 : i32, i32
  }
  func.func @transform_12(%arg0: i32, %arg1: i32) -> (i32, i32, i32, i32) {
    %c0_i32 = arith.constant 0 : i32
    %c0_i32_0 = arith.constant 0 : i32
    %c0_i32_1 = arith.constant 0 : i32
    return %arg0, %arg1, %c0_i32, %c0_i32_0 : i32, i32, i32, i32
  }
}

</mosaic_0001>

<llo_original>
// kernel: tpu_custom_call.1
$region0: #{tpu_custom_call.1}
  #allocation0 [shape = 'u32[]', space=smem, size = 0x4, offset = 0x4, fixed_abs, tag = 'smem constant byte address 0x4 - core index']
  #allocation1 [shape = 'u32[144,128]{1,0:T(1,128)}', space=vmem, size = 0x12000, scoped, tag = 'internal scratch']
  #allocation2 [shape = 'f32[1,1]{1,0:T(1,128)S(1)}', space=vmem, size = 0x200, scoped, tag = 'scoped memory for tpu_custom_call.1']
  %s0 = inlined_call_operand.vmem [shape: f32[2,8,4], index: 0, kind: input, shape index: {}]
  %s1 = inlined_call_operand.vmem [shape: f32[2,128,4], index: 1, kind: input, shape index: {}]
  %s2 = inlined_call_operand.vmem [shape: bf16[4,64], index: 2, kind: input, shape index: {}]
  %s3 = inlined_call_operand.vmem [shape: f32[1,64], index: 3, kind: input, shape index: {}]
  %s4 = inlined_call_operand.vmem [shape: bf16[64,64], index: 4, kind: input, shape index: {}]
  %s5 = inlined_call_operand.vmem [shape: f32[1,64], index: 5, kind: input, shape index: {}]
  %s6 = inlined_call_operand.vmem [shape: bf16[64,32], index: 6, kind: input, shape index: {}]
  %s7 = inlined_call_operand.vmem [shape: f32[1,32], index: 7, kind: input, shape index: {}]
  %s8 = inlined_call_operand.vmem [shape: bf16[32,32], index: 8, kind: input, shape index: {}]
  %s9 = inlined_call_operand.vmem [shape: f32[1,32], index: 9, kind: input, shape index: {}]
  %s10 = inlined_call_operand.vmem [shape: f32[1,32], index: 10, kind: input, shape index: {}]
  %s11 = inlined_call_operand.<no memory space> [shape: f32[1,1], index: 11, kind: input, shape index: {}]
  %s12 = inlined_call_operand.hbm [shape: f32[2,8,1,128], index: 12, kind: output, shape index: {}]
  %s13 = sld [smem:[#allocation0]]
  $region81: #{tpu_custom_call.1} parent=0
    _
  %s15 = ssub.s32 1, %s13
  %s16 = scalar_select 0, %s15, %s13
  %v17 = vstv %s11
  %18 = vst [vmem:[#allocation2] sm:$0x1] %v17
  $region1: #{tpu_custom_call.1} parent=0
    #allocation3 [shape = 'u8[8192]{0}', space=vmem, size = 0x2000, scoped, tag = 'output window, operand 0']
    #allocation4 [shape = 's32[2]{0}', space=sflag, size = 0x8, scoped, tag = 'scoped memory for tpu_custom_call.1']
    %19 = vsyncpa [#allocation4], 0
    %s20 = scalar_lea.sflag [#allocation4], 1
    %21 = vsyncpa %s20, 0
    loop: start=0, step=1, limit=4
    $region2: #{tpu_custom_call.1} parent=1 // loop_pre_header
      _
    $region3: #{tpu_custom_call.1} parent=1 // loop_header
      %s23 = sphi 0, %s27
      %p24 = scmp.ge.s32.totalorder %s23, 4
      %s30 = sphi 0, %s42
      %s31 = sphi 0, %s38
      %s32 = sphi 0, %s30
      %s33 = sphi 0, %s31
      %s34 = sphi 0, %s32
      %s35 = sphi 0, %s33
      %s47 = sphi 0, %s49
      %s50 = sphi 0, %s47
      %s51 = sphi 0, %s50
      %s67 = sphi 0, %s51
      %s73 = sphi 0, %s75
      %s76 = sphi 0, %s73
      %s77 = sphi 0, %s76
      %s93 = sphi 0, %s77
      %s97 = sphi 0, %s97
      %s99 = sphi 0, %s97
      %s100 = sphi 0, %s99
      %s114 = sphi 0, %s100
      %s118 = sphi 0, %s118
      %s120 = sphi 0, %s118
      %s121 = sphi 0, %s120
      %s135 = sphi 0, %s121
      %s139 = sphi 0, %s139
      %s141 = sphi 0, %s139
      %s142 = sphi 0, %s141
      %s156 = sphi 0, %s142
      %s160 = sphi 0, %s160
      %s162 = sphi 0, %s160
      %s163 = sphi 0, %s162
      %s177 = sphi 0, %s163
      %s181 = sphi 0, %s181
      %s183 = sphi 0, %s181
      %s184 = sphi 0, %s183
      %s198 = sphi 0, %s184
      %s202 = sphi 0, %s202
      %s204 = sphi 0, %s202
      %s205 = sphi 0, %s204
      %s219 = sphi 0, %s205
      %s223 = sphi 0, %s223
      %s225 = sphi 0, %s223
      %s226 = sphi 0, %s225
      %s240 = sphi 0, %s226
      %s244 = sphi 0, %s244
      %s246 = sphi 0, %s244
      %s247 = sphi 0, %s246
      %s261 = sphi 0, %s247
      %s265 = sphi 0, %s265
      %s267 = sphi 0, %s265
      %s268 = sphi 0, %s267
      %s282 = sphi 0, %s268
      %s286 = sphi 0, %s286
      %s288 = sphi 0, %s286
      %s289 = sphi 0, %s288
      %s303 = sphi 0, %s289
      %s311 = sphi 0, %s313
      %s314 = sphi 0, %s311
      %s315 = sphi 0, %s314
      %s331 = sphi 0, %s315
    $region4: #{tpu_custom_call.1} parent=1 // loop_header_branch
      %26 = sbr.rel (%p24) target = $region8
    $region5: #{tpu_custom_call.1} parent=1 // loop_body
      %s28 = ssub.s32 %s23, 1
      %s29 = ssub.s32 %s23, 2
      %s36 = sadd.s32 1, %s31
      %p37 = scmp.ge.s32.totalorder %s36, 1
      %s38 = scalar_select %p37, 0, %s36
      %s39 = sadd.s32 1, %s30
      %s40 = scalar_select %p37, %s39, %s30
      %p41 = scmp.ge.s32.totalorder %s40, 2
      %s42 = scalar_select %p41, 0, %s40
      %s43 = ssub.s32 %s30, %s42
      %s44 = ssub.s32 %s31, %s38
      %s45 = sor.u32 %s43, %s44
      %p46 = scmp.eq.s32.totalorder %s45, 0
      %s48 = sadd.s32 %s47, 1
      %s49 = scalar_select %p46, %s47, %s48
      %p52 = pneg %p46
      %p53 = scmp.eq.s32.totalorder %s23, 1
      %p54 = por %p52, %p53
      %p55 = scmp.ne.s32.totalorder %s47, %s50
      %p56 = scmp.eq.s32.totalorder %s23, 0
      %p57 = por %p55, %p56
      %p58 = scmp.ne.s32.totalorder %s47, %s50
      %p59 = scmp.eq.s32.totalorder %s28, 1
      %p60 = por %p58, %p59
      %p61 = scmp.ne.s32.totalorder %s50, %s51
      %p62 = scmp.eq.s32.totalorder %s28, 0
      %p63 = por %p61, %p62
      %p64 = scmp.ne.s32.totalorder %s50, %s51
      %p65 = scmp.eq.s32.totalorder %s29, 1
      %p66 = por %p64, %p65
      %p68 = scmp.ne.s32.totalorder %s51, %s67
      %p69 = scmp.eq.s32.totalorder %s29, 0
      %p70 = por %p68, %p69
      %s71 = ssub.s32 %s30, %s42
      %p72 = scmp.eq.s32.totalorder %s71, 0
      %s74 = sadd.s32 %s73, 1
      %s75 = scalar_select %p72, %s73, %s74
      %p78 = pneg %p72
      %p79 = scmp.eq.s32.totalorder %s23, 1
      %p80 = por %p78, %p79
      %p81 = scmp.ne.s32.totalorder %s73, %s76
      %p82 = scmp.eq.s32.totalorder %s23, 0
      %p83 = por %p81, %p82
      %p84 = scmp.ne.s32.totalorder %s73, %s76
      %p85 = scmp.eq.s32.totalorder %s28, 1
      %p86 = por %p84, %p85
      %p87 = scmp.ne.s32.totalorder %s76, %s77
      %p88 = scmp.eq.s32.totalorder %s28, 0
      %p89 = por %p87, %p88
      %p90 = scmp.ne.s32.totalorder %s76, %s77
      %p91 = scmp.eq.s32.totalorder %s29, 1
      %p92 = por %p90, %p91
      %p94 = scmp.ne.s32.totalorder %s77, %s93
      %p95 = scmp.eq.s32.totalorder %s29, 0
      %p96 = por %p94, %p95
      %s98 = sadd.s32 %s97, 1
      %p101 = scmp.eq.s32.totalorder %s23, 1
      %p102 = scmp.ne.s32.totalorder %s97, %s99
      %p103 = scmp.eq.s32.totalorder %s23, 0
      %p104 = por %p102, %p103
      %p105 = scmp.ne.s32.totalorder %s97, %s99
      %p106 = scmp.eq.s32.totalorder %s28, 1
      %p107 = por %p105, %p106
      %p108 = scmp.ne.s32.totalorder %s99, %s100
      %p109 = scmp.eq.s32.totalorder %s28, 0
      %p110 = por %p108, %p109
      %p111 = scmp.ne.s32.totalorder %s99, %s100
      %p112 = scmp.eq.s32.totalorder %s29, 1
      %p113 = por %p111, %p112
      %p115 = scmp.ne.s32.totalorder %s100, %s114
      %p116 = scmp.eq.s32.totalorder %s29, 0
      %p117 = por %p115, %p116
      %s119 = sadd.s32 %s118, 1
      %p122 = scmp.eq.s32.totalorder %s23, 1
      %p123 = scmp.ne.s32.totalorder %s118, %s120
      %p124 = scmp.eq.s32.totalorder %s23, 0
      %p125 = por %p123, %p124
      %p126 = scmp.ne.s32.totalorder %s118, %s120
      %p127 = scmp.eq.s32.totalorder %s28, 1
      %p128 = por %p126, %p127
      %p129 = scmp.ne.s32.totalorder %s120, %s121
      %p130 = scmp.eq.s32.totalorder %s28, 0
      %p131 = por %p129, %p130
      %p132 = scmp.ne.s32.totalorder %s120, %s121
      %p133 = scmp.eq.s32.totalorder %s29, 1
      %p134 = por %p132, %p133
      %p136 = scmp.ne.s32.totalorder %s121, %s135
      %p137 = scmp.eq.s32.totalorder %s29, 0
      %p138 = por %p136, %p137
      %s140 = sadd.s32 %s139, 1
      %p143 = scmp.eq.s32.totalorder %s23, 1
      %p144 = scmp.ne.s32.totalorder %s139, %s141
      %p145 = scmp.eq.s32.totalorder %s23, 0
      %p146 = por %p144, %p145
      %p147 = scmp.ne.s32.totalorder %s139, %s141
      %p148 = scmp.eq.s32.totalorder %s28, 1
      %p149 = por %p147, %p148
      %p150 = scmp.ne.s32.totalorder %s141, %s142
      %p151 = scmp.eq.s32.totalorder %s28, 0
      %p152 = por %p150, %p151
      %p153 = scmp.ne.s32.totalorder %s141, %s142
      %p154 = scmp.eq.s32.totalorder %s29, 1
      %p155 = por %p153, %p154
      %p157 = scmp.ne.s32.totalorder %s142, %s156
      %p158 = scmp.eq.s32.totalorder %s29, 0
      %p159 = por %p157, %p158
      %s161 = sadd.s32 %s160, 1
      %p164 = scmp.eq.s32.totalorder %s23, 1
      %p165 = scmp.ne.s32.totalorder %s160, %s162
      %p166 = scmp.eq.s32.totalorder %s23, 0
      %p167 = por %p165, %p166
      %p168 = scmp.ne.s32.totalorder %s160, %s162
      %p169 = scmp.eq.s32.totalorder %s28, 1
      %p170 = por %p168, %p169
      %p171 = scmp.ne.s32.totalorder %s162, %s163
      %p172 = scmp.eq.s32.totalorder %s28, 0
      %p173 = por %p171, %p172
      %p174 = scmp.ne.s32.totalorder %s162, %s163
      %p175 = scmp.eq.s32.totalorder %s29, 1
      %p176 = por %p174, %p175
      %p178 = scmp.ne.s32.totalorder %s163, %s177
      %p179 = scmp.eq.s32.totalorder %s29, 0
      %p180 = por %p178, %p179
      %s182 = sadd.s32 %s181, 1
      %p185 = scmp.eq.s32.totalorder %s23, 1
      %p186 = scmp.ne.s32.totalorder %s181, %s183
      %p187 = scmp.eq.s32.totalorder %s23, 0
      %p188 = por %p186, %p187
      %p189 = scmp.ne.s32.totalorder %s181, %s183
      %p190 = scmp.eq.s32.totalorder %s28, 1
      %p191 = por %p189, %p190
      %p192 = scmp.ne.s32.totalorder %s183, %s184
      %p193 = scmp.eq.s32.totalorder %s28, 0
      %p194 = por %p192, %p193
      %p195 = scmp.ne.s32.totalorder %s183, %s184
      %p196 = scmp.eq.s32.totalorder %s29, 1
      %p197 = por %p195, %p196
      %p199 = scmp.ne.s32.totalorder %s184, %s198
      %p200 = scmp.eq.s32.totalorder %s29, 0
      %p201 = por %p199, %p200
      %s203 = sadd.s32 %s202, 1
      %p206 = scmp.eq.s32.totalorder %s23, 1
      %p207 = scmp.ne.s32.totalorder %s202, %s204
      %p208 = scmp.eq.s32.totalorder %s23, 0
      %p209 = por %p207, %p208
      %p210 = scmp.ne.s32.totalorder %s202, %s204
      %p211 = scmp.eq.s32.totalorder %s28, 1
      %p212 = por %p210, %p211
      %p213 = scmp.ne.s32.totalorder %s204, %s205
      %p214 = scmp.eq.s32.totalorder %s28, 0
      %p215 = por %p213, %p214
      %p216 = scmp.ne.s32.totalorder %s204, %s205
      %p217 = scmp.eq.s32.totalorder %s29, 1
      %p218 = por %p216, %p217
      %p220 = scmp.ne.s32.totalorder %s205, %s219
      %p221 = scmp.eq.s32.totalorder %s29, 0
      %p222 = por %p220, %p221
      %s224 = sadd.s32 %s223, 1
      %p227 = scmp.eq.s32.totalorder %s23, 1
      %p228 = scmp.ne.s32.totalorder %s223, %s225
      %p229 = scmp.eq.s32.totalorder %s23, 0
      %p230 = por %p228, %p229
      %p231 = scmp.ne.s32.totalorder %s223, %s225
      %p232 = scmp.eq.s32.totalorder %s28, 1
      %p233 = por %p231, %p232
      %p234 = scmp.ne.s32.totalorder %s225, %s226
      %p235 = scmp.eq.s32.totalorder %s28, 0
      %p236 = por %p234, %p235
      %p237 = scmp.ne.s32.totalorder %s225, %s226
      %p238 = scmp.eq.s32.totalorder %s29, 1
      %p239 = por %p237, %p238
      %p241 = scmp.ne.s32.totalorder %s226, %s240
      %p242 = scmp.eq.s32.totalorder %s29, 0
      %p243 = por %p241, %p242
      %s245 = sadd.s32 %s244, 1
      %p248 = scmp.eq.s32.totalorder %s23, 1
      %p249 = scmp.ne.s32.totalorder %s244, %s246
      %p250 = scmp.eq.s32.totalorder %s23, 0
      %p251 = por %p249, %p250
      %p252 = scmp.ne.s32.totalorder %s244, %s246
      %p253 = scmp.eq.s32.totalorder %s28, 1
      %p254 = por %p252, %p253
      %p255 = scmp.ne.s32.totalorder %s246, %s247
      %p256 = scmp.eq.s32.totalorder %s28, 0
      %p257 = por %p255, %p256
      %p258 = scmp.ne.s32.totalorder %s246, %s247
      %p259 = scmp.eq.s32.totalorder %s29, 1
      %p260 = por %p258, %p259
      %p262 = scmp.ne.s32.totalorder %s247, %s261
      %p263 = scmp.eq.s32.totalorder %s29, 0
      %p264 = por %p262, %p263
      %s266 = sadd.s32 %s265, 1
      %p269 = scmp.eq.s32.totalorder %s23, 1
      %p270 = scmp.ne.s32.totalorder %s265, %s267
      %p271 = scmp.eq.s32.totalorder %s23, 0
      %p272 = por %p270, %p271
      %p273 = scmp.ne.s32.totalorder %s265, %s267
      %p274 = scmp.eq.s32.totalorder %s28, 1
      %p275 = por %p273, %p274
      %p276 = scmp.ne.s32.totalorder %s267, %s268
      %p277 = scmp.eq.s32.totalorder %s28, 0
      %p278 = por %p276, %p277
      %p279 = scmp.ne.s32.totalorder %s267, %s268
      %p280 = scmp.eq.s32.totalorder %s29, 1
      %p281 = por %p279, %p280
      %p283 = scmp.ne.s32.totalorder %s268, %s282
      %p284 = scmp.eq.s32.totalorder %s29, 0
      %p285 = por %p283, %p284
      %s287 = sadd.s32 %s286, 1
      %p290 = scmp.eq.s32.totalorder %s23, 1
      %p291 = scmp.ne.s32.totalorder %s286, %s288
      %p292 = scmp.eq.s32.totalorder %s23, 0
      %p293 = por %p291, %p292
      %p294 = scmp.ne.s32.totalorder %s286, %s288
      %p295 = scmp.eq.s32.totalorder %s28, 1
      %p296 = por %p294, %p295
      %p297 = scmp.ne.s32.totalorder %s288, %s289
      %p298 = scmp.eq.s32.totalorder %s28, 0
      %p299 = por %p297, %p298
      %p300 = scmp.ne.s32.totalorder %s288, %s289
      %p301 = scmp.eq.s32.totalorder %s29, 1
      %p302 = por %p300, %p301
      %p304 = scmp.ne.s32.totalorder %s289, %s303
      %p305 = scmp.eq.s32.totalorder %s29, 0
      %p306 = por %p304, %p305
      %s307 = ssub.s32 %s30, %s42
      %s308 = ssub.s32 %s31, %s38
      %s309 = sor.u32 %s307, %s308
      %p310 = scmp.eq.s32.totalorder %s309, 0
      %s312 = sadd.s32 %s311, 1
      %s313 = scalar_select %p310, %s311, %s312
      %p316 = pneg %p310
      %p317 = scmp.eq.s32.totalorder %s23, 1
      %p318 = por %p316, %p317
      %p319 = scmp.ne.s32.totalorder %s311, %s314
      %p320 = scmp.eq.s32.totalorder %s23, 0
      %p321 = por %p319, %p320
      %p322 = scmp.ne.s32.totalorder %s311, %s314
      %p323 = scmp.eq.s32.totalorder %s28, 1
      %p324 = por %p322, %p323
      %p325 = scmp.ne.s32.totalorder %s314, %s315
      %p326 = scmp.eq.s32.totalorder %s28, 0
      %p327 = por %p325, %p326
      %p328 = scmp.ne.s32.totalorder %s314, %s315
      %p329 = scmp.eq.s32.totalorder %s29, 1
      %p330 = por %p328, %p329
      %p332 = scmp.ne.s32.totalorder %s315, %s331
      %p333 = scmp.eq.s32.totalorder %s29, 0
      %p334 = por %p332, %p333
      %p335 = scmp.le.s32.totalorder 1, %s23
      %p336 = scmp.lt.s32.totalorder %s23, 3
      %p337 = pnand %p335, %p336
      %p338 = pneg %p337
      // Predicated region
      $region9: #{tpu_custom_call.1} parent=5 // pred_check
        _
      $region10: #{tpu_custom_call.1} parent=5 // pred_check_branch
        %340 = sbr.rel (%p337) target = $region12
      $region11: #{tpu_custom_call.1} parent=5 // pred_region
        %s341 = ssub.s32 %s23, 1
        // Predicated region
        $region13: #{tpu_custom_call.1} parent=11 // pred_check
          %p342 = pneg %p110
        $region14: #{tpu_custom_call.1} parent=11 // pred_check_branch
          %344 = sbr.rel (%p342) target = $region16
        $region15: #{tpu_custom_call.1} parent=11 // pred_region
          _
        $region16: #{tpu_custom_call.1} parent=11 // pred_fallthru
          _
        // Predicated region
        $region17: #{tpu_custom_call.1} parent=11 // pred_check
          %p345 = pneg %p131
        $region18: #{tpu_custom_call.1} parent=11 // pred_check_branch
          %347 = sbr.rel (%p345) target = $region20
        $region19: #{tpu_custom_call.1} parent=11 // pred_region
          _
        $region20: #{tpu_custom_call.1} parent=11 // pred_fallthru
          _
        // Predicated region
        $region21: #{tpu_custom_call.1} parent=11 // pred_check
          %p348 = pneg %p152
        $region22: #{tpu_custom_call.1} parent=11 // pred_check_branch
          %350 = sbr.rel (%p348) target = $region24
        $region23: #{tpu_custom_call.1} parent=11 // pred_region
          _
        $region24: #{tpu_custom_call.1} parent=11 // pred_fallthru
          _
        // Predicated region
        $region25: #{tpu_custom_call.1} parent=11 // pred_check
          %p351 = pneg %p173
        $region26: #{tpu_custom_call.1} parent=11 // pred_check_branch
          %353 = sbr.rel (%p351) target = $region28
        $region27: #{tpu_custom_call.1} parent=11 // pred_region
          _
        $region28: #{tpu_custom_call.1} parent=11 // pred_fallthru
          _
        // Predicated region
        $region29: #{tpu_custom_call.1} parent=11 // pred_check
          %p354 = pneg %p194
        $region30: #{tpu_custom_call.1} parent=11 // pred_check_branch
          %356 = sbr.rel (%p354) target = $region32
        $region31: #{tpu_custom_call.1} parent=11 // pred_region
          _
        $region32: #{tpu_custom_call.1} parent=11 // pred_fallthru
          _
        // Predicated region
        $region33: #{tpu_custom_call.1} parent=11 // pred_check
          %p357 = pneg %p215
        $region34: #{tpu_custom_call.1} parent=11 // pred_check_branch
          %359 = sbr.rel (%p357) target = $region36
        $region35: #{tpu_custom_call.1} parent=11 // pred_region
          _
        $region36: #{tpu_custom_call.1} parent=11 // pred_fallthru
          _
        // Predicated region
        $region37: #{tpu_custom_call.1} parent=11 // pred_check
          %p360 = pneg %p236
        $region38: #{tpu_custom_call.1} parent=11 // pred_check_branch
          %362 = sbr.rel (%p360) target = $region40
        $region39: #{tpu_custom_call.1} parent=11 // pred_region
          _
        $region40: #{tpu_custom_call.1} parent=11 // pred_fallthru
          _
        // Predicated region
        $region41: #{tpu_custom_call.1} parent=11 // pred_check
          %p363 = pneg %p257
        $region42: #{tpu_custom_call.1} parent=11 // pred_check_branch
          %365 = sbr.rel (%p363) target = $region44
        $region43: #{tpu_custom_call.1} parent=11 // pred_region
          _
        $region44: #{tpu_custom_call.1} parent=11 // pred_fallthru
          _
        // Predicated region
        $region45: #{tpu_custom_call.1} parent=11 // pred_check
          %p366 = pneg %p278
        $region46: #{tpu_custom_call.1} parent=11 // pred_check_branch
          %368 = sbr.rel (%p366) target = $region48
        $region47: #{tpu_custom_call.1} parent=11 // pred_region
          _
        $region48: #{tpu_custom_call.1} parent=11 // pred_fallthru
          _
        // Predicated region
        $region49: #{tpu_custom_call.1} parent=11 // pred_check
          %p369 = pneg %p299
        $region50: #{tpu_custom_call.1} parent=11 // pred_check_branch
          %371 = sbr.rel (%p369) target = $region52
        $region51: #{tpu_custom_call.1} parent=11 // pred_region
          _
        $region52: #{tpu_custom_call.1} parent=11 // pred_fallthru
          _
      $region12: #{tpu_custom_call.1} parent=5 // pred_fallthru
        _
      %p372 = scmp.lt.s32.totalorder %s23, 2
      // Predicated region
      $region53: #{tpu_custom_call.1} parent=5 // pred_check
        %p373 = pneg %p372
      $region54: #{tpu_custom_call.1} parent=5 // pred_check_branch
        %375 = sbr.rel (%p373) target = $region56
      $region55: #{tpu_custom_call.1} parent=5 // pred_region
        // Predicated region
        $region57: #{tpu_custom_call.1} parent=55 // pred_check
          %p376 = pneg %p57
        $region58: #{tpu_custom_call.1} parent=55 // pred_check_branch
          %378 = sbr.rel (%p376) target = $region60
        $region59: #{tpu_custom_call.1} parent=55 // pred_region
          %p379 = scmp.lt.s32.totalorder %s30, 1
          %s380 = scalar_select %p379, %s30, 1
          %p381 = scmp.lt.s32.totalorder %s31, 0
          %s382 = scalar_select %p381, %s31, 0
          %s383 = sadd.s32 %s382, %s380
          %s384 = smul.addr %s383, 8
          %s385 = scalar_lea.vmem %s0, %s384
        $region60: #{tpu_custom_call.1} parent=55 // pred_fallthru
          _
        // Predicated region
        $region61: #{tpu_custom_call.1} parent=55 // pred_check
          %p386 = pneg %p83
        $region62: #{tpu_custom_call.1} parent=55 // pred_check_branch
          %388 = sbr.rel (%p386) target = $region64
        $region63: #{tpu_custom_call.1} parent=55 // pred_region
          %p389 = scmp.lt.s32.totalorder %s30, 1
          %s390 = scalar_select %p389, %s30, 1
          %s391 = smul.addr %s390, 16
          %s392 = smul.addr %s391, 8
          %s393 = scalar_lea.vmem %s1, %s392
        $region64: #{tpu_custom_call.1} parent=55 // pred_fallthru
          _
      $region56: #{tpu_custom_call.1} parent=5 // pred_fallthru
        _
      %p394 = scmp.le.s32.totalorder 1, %s23
      %p395 = scmp.lt.s32.totalorder %s23, 3
      %p396 = pnand %p394, %p395
      %p397 = pneg %p396
      // Predicated region
      $region65: #{tpu_custom_call.1} parent=5 // pred_check
        _
      $region66: #{tpu_custom_call.1} parent=5 // pred_check_branch
        %399 = sbr.rel (%p396) target = $region68
      $region67: #{tpu_custom_call.1} parent=5 // pred_region
        %s400 = ssub.s32 %s23, 1
        %p401 = scmp.lt.s32.totalorder %s32, 1
        %s402 = scalar_select %p401, %s32, 1
        %p403 = scmp.lt.s32.totalorder %s33, 0
        %s404 = scalar_select %p403, %s33, 0
        %s405 = sadd.s32 %s404, %s402
        %s406 = smul.addr %s405, 8
        %s407 = scalar_lea.vmem %s0, %s406
        %p408 = pneg %p63
        %p409 = pneg %p60
        %p410 = scmp.lt.s32.totalorder %s32, 1
        %s411 = scalar_select %p410, %s32, 1
        %s412 = smul.addr %s411, 16
        %s413 = smul.addr %s412, 8
        %s414 = scalar_lea.vmem %s1, %s413
        %p415 = pneg %p89
        %p416 = pneg %p86
        %p417 = pneg %p110
        %p418 = pneg %p107
        %p419 = pneg %p131
        %p420 = pneg %p128
        %p421 = pneg %p152
        %p422 = pneg %p149
        %p423 = pneg %p173
        %p424 = pneg %p170
        %p425 = pneg %p194
        %p426 = pneg %p191
        %p427 = pneg %p215
        %p428 = pneg %p212
        %p429 = pneg %p236
        %p430 = pneg %p233
        %p431 = pneg %p257
        %p432 = pneg %p254
        %p433 = pneg %p278
        %p434 = pneg %p275
        %p435 = pneg %p299
        %p436 = pneg %p296
        %p437 = pneg %p327
        %p438 = pneg %p324
        %s439 = sand.u32 %s314, 1
        %s440 = scalar_lea.sflag [#allocation4], %s439
        %s441 = sand.u32 %s314, 1
        %s442 = smul.addr %s441, 8
        %s443 = scalar_lea.vmem [#allocation3], %s442
        %p444 = scmp.lt.s32.totalorder %s32, 1
        %s445 = scalar_select %p444, %s32, 1
        %p446 = scmp.lt.s32.totalorder %s33, 0
        %s447 = scalar_select %p446, %s33, 0
        %s448 = sadd.s32 %s447, %s445
        %s449 = smul.addr %s448, 8
        %s450 = scalar_lea.vmem %s0, %s449
        %p451 = scmp.lt.s32.totalorder %s32, 1
        %s452 = scalar_select %p451, %s32, 1
        %s453 = smul.addr %s452, 16
        %s454 = smul.addr %s453, 8
        %s455 = scalar_lea.vmem %s1, %s454
        %s456 = smul.u32 8, %s33
        %v458 = vld [vmem:[%s450] sm:$0xff]
        %v459 = vld [vmem:[%s455] sm:$0xff]
        %v460 = vld [vmem:[%s455 + $0x8] sm:$0xff]
        %v461 = vld [vmem:[%s455 + $0x10] sm:$0xff]
        %v462 = vld [vmem:[%s455 + $0x18] sm:$0xff]
        %v463 = vld [vmem:[%s455 + $0x20] sm:$0xff]
        %v464 = vld [vmem:[%s455 + $0x28] sm:$0xff]
        %v465 = vld [vmem:[%s455 + $0x30] sm:$0xff]
        %v466 = vld [vmem:[%s455 + $0x38] sm:$0xff]
        %v467 = vld [vmem:[%s455 + $0x40] sm:$0xff]
        %v468 = vld [vmem:[%s455 + $0x48] sm:$0xff]
        %v469 = vld [vmem:[%s455 + $0x50] sm:$0xff]
        %v470 = vld [vmem:[%s455 + $0x58] sm:$0xff]
        %v471 = vld [vmem:[%s455 + $0x60] sm:$0xff]
        %v472 = vld [vmem:[%s455 + $0x68] sm:$0xff]
        %v473 = vld [vmem:[%s455 + $0x70] sm:$0xff]
        %v474 = vld [vmem:[%s455 + $0x78] sm:$0xff]
        %v476 = vcombine.high %v458, %v458
        %v478 = vunpack.c.l.s4 1966171168
        %v479 = vunpack.c.0.s8 %v478
        %v480 = vlaneseq
        %v481 = vshrl.u32 %v480, 7
        %v482 = vsub.s32 %v479, %v481
        %v483 = vrot.slane %v458, %v482
        %v485 = vunpack.c.l.s4 1966171168
        %v486 = vunpack.c.0.s8 %v485
        %v487 = vlaneseq
        %v488 = vshrl.u32 %v487, 7
        %v489 = vsub.s32 %v486, %v488
        %v490 = vrot.slane %v476, %v489
        %v491 = vcombine.high %v483, %v483
        %v492 = vcombine.high %v490, %v490
        %v494 = vunpack.c.l.s4 1966171168
        %v495 = vunpack.c.0.s8 %v494
        %v496 = vlaneseq
        %v497 = vshrl.u32 %v496, 7
        %v498 = vsub.s32 %v495, %v497
        %v499 = vrot.slane %v483, %v498
        %v501 = vunpack.c.l.s4 1966171168
        %v502 = vunpack.c.0.s8 %v501
        %v503 = vlaneseq
        %v504 = vshrl.u32 %v503, 7
        %v505 = vsub.s32 %v502, %v504
        %v506 = vrot.slane %v490, %v505
        %v508 = vunpack.c.l.s4 1966171168
        %v509 = vunpack.c.0.s8 %v508
        %v510 = vlaneseq
        %v511 = vshrl.u32 %v510, 7
        %v512 = vsub.s32 %v509, %v511
        %v513 = vrot.slane %v491, %v512
        %v515 = vunpack.c.l.s4 1966171168
        %v516 = vunpack.c.0.s8 %v515
        %v517 = vlaneseq
        %v518 = vshrl.u32 %v517, 7
        %v519 = vsub.s32 %v516, %v518
        %v520 = vrot.slane %v492, %v519
        %v521 = vcombine.high %v499, %v499
        %v522 = vcombine.high %v506, %v506
        %v523 = vcombine.high %v513, %v513
        %v524 = vcombine.high %v520, %v520
        %v525 = vlaneseq
        %v526 = vshrl.u32 %v525, 7
        %v527 = vsub.s32 0, %v526
        %v528 = vrot.slane %v499, %v527
        %v529 = vlaneseq
        %v530 = vshrl.u32 %v529, 7
        %v531 = vsub.s32 0, %v530
        %v532 = vrot.slane %v513, %v531
        %v533 = vlaneseq
        %v534 = vshrl.u32 %v533, 7
        %v535 = vsub.s32 0, %v534
        %v536 = vrot.slane %v521, %v535
        %v537 = vlaneseq
        %v538 = vshrl.u32 %v537, 7
        %v539 = vsub.s32 0, %v538
        %v540 = vrot.slane %v523, %v539
        %v541 = vlaneseq
        %v542 = vshrl.u32 %v541, 7
        %v543 = vsub.s32 0, %v542
        %v544 = vrot.slane %v506, %v543
        %v545 = vlaneseq
        %v546 = vshrl.u32 %v545, 7
        %v547 = vsub.s32 0, %v546
        %v548 = vrot.slane %v520, %v547
        %v549 = vlaneseq
        %v550 = vshrl.u32 %v549, 7
        %v551 = vsub.s32 0, %v550
        %v552 = vrot.slane %v522, %v551
        %v553 = vlaneseq
        %v554 = vshrl.u32 %v553, 7
        %v555 = vsub.s32 0, %v554
        %v556 = vrot.slane %v524, %v555
        %v565 = vsub.f32 %v528, %v459
        %v566 = vsub.f32 %v528, %v460
        %v567 = vsub.f32 %v528, %v461
        %v568 = vsub.f32 %v528, %v462
        %v569 = vsub.f32 %v528, %v463
        %v570 = vsub.f32 %v528, %v464
        %v571 = vsub.f32 %v528, %v465
        %v572 = vsub.f32 %v528, %v466
        %v573 = vsub.f32 %v528, %v467
        %v574 = vsub.f32 %v528, %v468
        %v575 = vsub.f32 %v528, %v469
        %v576 = vsub.f32 %v528, %v470
        %v577 = vsub.f32 %v528, %v471
        %v578 = vsub.f32 %v528, %v472
        %v579 = vsub.f32 %v528, %v473
        %v580 = vsub.f32 %v528, %v474
        %v581 = vsub.f32 %v532, %v459
        %v582 = vsub.f32 %v532, %v460
        %v583 = vsub.f32 %v532, %v461
        %v584 = vsub.f32 %v532, %v462
        %v585 = vsub.f32 %v532, %v463
        %v586 = vsub.f32 %v532, %v464
        %v587 = vsub.f32 %v532, %v465
        %v588 = vsub.f32 %v532, %v466
        %v589 = vsub.f32 %v532, %v467
        %v590 = vsub.f32 %v532, %v468
        %v591 = vsub.f32 %v532, %v469
        %v592 = vsub.f32 %v532, %v470
        %v593 = vsub.f32 %v532, %v471
        %v594 = vsub.f32 %v532, %v472
        %v595 = vsub.f32 %v532, %v473
        %v596 = vsub.f32 %v532, %v474
        %v597 = vsub.f32 %v536, %v459
        %v598 = vsub.f32 %v536, %v460
        %v599 = vsub.f32 %v536, %v461
        %v600 = vsub.f32 %v536, %v462
        %v601 = vsub.f32 %v536, %v463
        %v602 = vsub.f32 %v536, %v464
        %v603 = vsub.f32 %v536, %v465
        %v604 = vsub.f32 %v536, %v466
        %v605 = vsub.f32 %v536, %v467
        %v606 = vsub.f32 %v536, %v468
        %v607 = vsub.f32 %v536, %v469
        %v608 = vsub.f32 %v536, %v470
        %v609 = vsub.f32 %v536, %v471
        %v610 = vsub.f32 %v536, %v472
        %v611 = vsub.f32 %v536, %v473
        %v612 = vsub.f32 %v536, %v474
        %v613 = vsub.f32 %v540, %v459
        %v614 = vsub.f32 %v540, %v460
        %v615 = vsub.f32 %v540, %v461
        %v616 = vsub.f32 %v540, %v462
        %v617 = vsub.f32 %v540, %v463
        %v618 = vsub.f32 %v540, %v464
        %v619 = vsub.f32 %v540, %v465
        %v620 = vsub.f32 %v540, %v466
        %v621 = vsub.f32 %v540, %v467
        %v622 = vsub.f32 %v540, %v468
        %v623 = vsub.f32 %v540, %v469
        %v624 = vsub.f32 %v540, %v470
        %v625 = vsub.f32 %v540, %v471
        %v626 = vsub.f32 %v540, %v472
        %v627 = vsub.f32 %v540, %v473
        %v628 = vsub.f32 %v540, %v474
        %v629 = vsub.f32 %v544, %v459
        %v630 = vsub.f32 %v544, %v460
        %v631 = vsub.f32 %v544, %v461
        %v632 = vsub.f32 %v544, %v462
        %v633 = vsub.f32 %v544, %v463
        %v634 = vsub.f32 %v544, %v464
        %v635 = vsub.f32 %v544, %v465
        %v636 = vsub.f32 %v544, %v466
        %v637 = vsub.f32 %v544, %v467
        %v638 = vsub.f32 %v544, %v468
        %v639 = vsub.f32 %v544, %v469
        %v640 = vsub.f32 %v544, %v470
        %v641 = vsub.f32 %v544, %v471
        %v642 = vsub.f32 %v544, %v472
        %v643 = vsub.f32 %v544, %v473
        %v644 = vsub.f32 %v544, %v474
        %v645 = vsub.f32 %v548, %v459
        %v646 = vsub.f32 %v548, %v460
        %v647 = vsub.f32 %v548, %v461
        %v648 = vsub.f32 %v548, %v462
        %v649 = vsub.f32 %v548, %v463
        %v650 = vsub.f32 %v548, %v464
        %v651 = vsub.f32 %v548, %v465
        %v652 = vsub.f32 %v548, %v466
        %v653 = vsub.f32 %v548, %v467
        %v654 = vsub.f32 %v548, %v468
        %v655 = vsub.f32 %v548, %v469
        %v656 = vsub.f32 %v548, %v470
        %v657 = vsub.f32 %v548, %v471
        %v658 = vsub.f32 %v548, %v472
        %v659 = vsub.f32 %v548, %v473
        %v660 = vsub.f32 %v548, %v474
        %v661 = vsub.f32 %v552, %v459
        %v662 = vsub.f32 %v552, %v460
        %v663 = vsub.f32 %v552, %v461
        %v664 = vsub.f32 %v552, %v462
        %v665 = vsub.f32 %v552, %v463
        %v666 = vsub.f32 %v552, %v464
        %v667 = vsub.f32 %v552, %v465
        %v668 = vsub.f32 %v552, %v466
        %v669 = vsub.f32 %v552, %v467
        %v670 = vsub.f32 %v552, %v468
        %v671 = vsub.f32 %v552, %v469
        %v672 = vsub.f32 %v552, %v470
        %v673 = vsub.f32 %v552, %v471
        %v674 = vsub.f32 %v552, %v472
        %v675 = vsub.f32 %v552, %v473
        %v676 = vsub.f32 %v552, %v474
        %v677 = vsub.f32 %v556, %v459
        %v678 = vsub.f32 %v556, %v460
        %v679 = vsub.f32 %v556, %v461
        %v680 = vsub.f32 %v556, %v462
        %v681 = vsub.f32 %v556, %v463
        %v682 = vsub.f32 %v556, %v464
        %v683 = vsub.f32 %v556, %v465
        %v684 = vsub.f32 %v556, %v466
        %v685 = vsub.f32 %v556, %v467
        %v686 = vsub.f32 %v556, %v468
        %v687 = vsub.f32 %v556, %v469
        %v688 = vsub.f32 %v556, %v470
        %v689 = vsub.f32 %v556, %v471
        %v690 = vsub.f32 %v556, %v472
        %v691 = vsub.f32 %v556, %v473
        %v692 = vsub.f32 %v556, %v474
        %v693 = vand.u32 2147483647, %v565
        %v694 = vand.u32 2147483647, %v566
        %v695 = vand.u32 2147483647, %v567
        %v696 = vand.u32 2147483647, %v568
        %v697 = vand.u32 2147483647, %v569
        %v698 = vand.u32 2147483647, %v570
        %v699 = vand.u32 2147483647, %v571
        %v700 = vand.u32 2147483647, %v572
        %v701 = vand.u32 2147483647, %v573
        %v702 = vand.u32 2147483647, %v574
        %v703 = vand.u32 2147483647, %v575
        %v704 = vand.u32 2147483647, %v576
        %v705 = vand.u32 2147483647, %v577
        %v706 = vand.u32 2147483647, %v578
        %v707 = vand.u32 2147483647, %v579
        %v708 = vand.u32 2147483647, %v580
        %v709 = vand.u32 2147483647, %v581
        %v710 = vand.u32 2147483647, %v582
        %v711 = vand.u32 2147483647, %v583
        %v712 = vand.u32 2147483647, %v584
        %v713 = vand.u32 2147483647, %v585
        %v714 = vand.u32 2147483647, %v586
        %v715 = vand.u32 2147483647, %v587
        %v716 = vand.u32 2147483647, %v588
        %v717 = vand.u32 2147483647, %v589
        %v718 = vand.u32 2147483647, %v590
        %v719 = vand.u32 2147483647, %v591
        %v720 = vand.u32 2147483647, %v592
        %v721 = vand.u32 2147483647, %v593
        %v722 = vand.u32 2147483647, %v594
        %v723 = vand.u32 2147483647, %v595
        %v724 = vand.u32 2147483647, %v596
        %v725 = vand.u32 2147483647, %v597
        %v726 = vand.u32 2147483647, %v598
        %v727 = vand.u32 2147483647, %v599
        %v728 = vand.u32 2147483647, %v600
        %v729 = vand.u32 2147483647, %v601
        %v730 = vand.u32 2147483647, %v602
        %v731 = vand.u32 2147483647, %v603
        %v732 = vand.u32 2147483647, %v604
        %v733 = vand.u32 2147483647, %v605
        %v734 = vand.u32 2147483647, %v606
        %v735 = vand.u32 2147483647, %v607
        %v736 = vand.u32 2147483647, %v608
        %v737 = vand.u32 2147483647, %v609
        %v738 = vand.u32 2147483647, %v610
        %v739 = vand.u32 2147483647, %v611
        %v740 = vand.u32 2147483647, %v612
        %v741 = vand.u32 2147483647, %v613
        %v742 = vand.u32 2147483647, %v614
        %v743 = vand.u32 2147483647, %v615
        %v744 = vand.u32 2147483647, %v616
        %v745 = vand.u32 2147483647, %v617
        %v746 = vand.u32 2147483647, %v618
        %v747 = vand.u32 2147483647, %v619
        %v748 = vand.u32 2147483647, %v620
        %v749 = vand.u32 2147483647, %v621
        %v750 = vand.u32 2147483647, %v622
        %v751 = vand.u32 2147483647, %v623
        %v752 = vand.u32 2147483647, %v624
        %v753 = vand.u32 2147483647, %v625
        %v754 = vand.u32 2147483647, %v626
        %v755 = vand.u32 2147483647, %v627
        %v756 = vand.u32 2147483647, %v628
        %v757 = vand.u32 2147483647, %v629
        %v758 = vand.u32 2147483647, %v630
        %v759 = vand.u32 2147483647, %v631
        %v760 = vand.u32 2147483647, %v632
        %v761 = vand.u32 2147483647, %v633
        %v762 = vand.u32 2147483647, %v634
        %v763 = vand.u32 2147483647, %v635
        %v764 = vand.u32 2147483647, %v636
        %v765 = vand.u32 2147483647, %v637
        %v766 = vand.u32 2147483647, %v638
        %v767 = vand.u32 2147483647, %v639
        %v768 = vand.u32 2147483647, %v640
        %v769 = vand.u32 2147483647, %v641
        %v770 = vand.u32 2147483647, %v642
        %v771 = vand.u32 2147483647, %v643
        %v772 = vand.u32 2147483647, %v644
        %v773 = vand.u32 2147483647, %v645
        %v774 = vand.u32 2147483647, %v646
        %v775 = vand.u32 2147483647, %v647
        %v776 = vand.u32 2147483647, %v648
        %v777 = vand.u32 2147483647, %v649
        %v778 = vand.u32 2147483647, %v650
        %v779 = vand.u32 2147483647, %v651
        %v780 = vand.u32 2147483647, %v652
        %v781 = vand.u32 2147483647, %v653
        %v782 = vand.u32 2147483647, %v654
        %v783 = vand.u32 2147483647, %v655
        %v784 = vand.u32 2147483647, %v656
        %v785 = vand.u32 2147483647, %v657
        %v786 = vand.u32 2147483647, %v658
        %v787 = vand.u32 2147483647, %v659
        %v788 = vand.u32 2147483647, %v660
        %v789 = vand.u32 2147483647, %v661
        %v790 = vand.u32 2147483647, %v662
        %v791 = vand.u32 2147483647, %v663
        %v792 = vand.u32 2147483647, %v664
        %v793 = vand.u32 2147483647, %v665
        %v794 = vand.u32 2147483647, %v666
        %v795 = vand.u32 2147483647, %v667
        %v796 = vand.u32 2147483647, %v668
        %v797 = vand.u32 2147483647, %v669
        %v798 = vand.u32 2147483647, %v670
        %v799 = vand.u32 2147483647, %v671
        %v800 = vand.u32 2147483647, %v672
        %v801 = vand.u32 2147483647, %v673
        %v802 = vand.u32 2147483647, %v674
        %v803 = vand.u32 2147483647, %v675
        %v804 = vand.u32 2147483647, %v676
        %v805 = vand.u32 2147483647, %v677
        %v806 = vand.u32 2147483647, %v678
        %v807 = vand.u32 2147483647, %v679
        %v808 = vand.u32 2147483647, %v680
        %v809 = vand.u32 2147483647, %v681
        %v810 = vand.u32 2147483647, %v682
        %v811 = vand.u32 2147483647, %v683
        %v812 = vand.u32 2147483647, %v684
        %v813 = vand.u32 2147483647, %v685
        %v814 = vand.u32 2147483647, %v686
        %v815 = vand.u32 2147483647, %v687
        %v816 = vand.u32 2147483647, %v688
        %v817 = vand.u32 2147483647, %v689
        %v818 = vand.u32 2147483647, %v690
        %v819 = vand.u32 2147483647, %v691
        %v820 = vand.u32 2147483647, %v692
        %v821 = vpack.c.bf16 %v694, %v693
        %v822 = vpack.c.bf16 %v696, %v695
        %v823 = vpack.c.bf16 %v698, %v697
        %v824 = vpack.c.bf16 %v700, %v699
        %v825 = vpack.c.bf16 %v702, %v701
        %v826 = vpack.c.bf16 %v704, %v703
        %v827 = vpack.c.bf16 %v706, %v705
        %v828 = vpack.c.bf16 %v708, %v707
        %v829 = vpack.c.bf16 %v710, %v709
        %v830 = vpack.c.bf16 %v712, %v711
        %v831 = vpack.c.bf16 %v714, %v713
        %v832 = vpack.c.bf16 %v716, %v715
        %v833 = vpack.c.bf16 %v718, %v717
        %v834 = vpack.c.bf16 %v720, %v719
        %v835 = vpack.c.bf16 %v722, %v721
        %v836 = vpack.c.bf16 %v724, %v723
        %v837 = vpack.c.bf16 %v726, %v725
        %v838 = vpack.c.bf16 %v728, %v727
        %v839 = vpack.c.bf16 %v730, %v729
        %v840 = vpack.c.bf16 %v732, %v731
        %v841 = vpack.c.bf16 %v734, %v733
        %v842 = vpack.c.bf16 %v736, %v735
        %v843 = vpack.c.bf16 %v738, %v737
        %v844 = vpack.c.bf16 %v740, %v739
        %v845 = vpack.c.bf16 %v742, %v741
        %v846 = vpack.c.bf16 %v744, %v743
        %v847 = vpack.c.bf16 %v746, %v745
        %v848 = vpack.c.bf16 %v748, %v747
        %v849 = vpack.c.bf16 %v750, %v749
        %v850 = vpack.c.bf16 %v752, %v751
        %v851 = vpack.c.bf16 %v754, %v753
        %v852 = vpack.c.bf16 %v756, %v755
        %v853 = vpack.c.bf16 %v758, %v757
        %v854 = vpack.c.bf16 %v760, %v759
        %v855 = vpack.c.bf16 %v762, %v761
        %v856 = vpack.c.bf16 %v764, %v763
        %v857 = vpack.c.bf16 %v766, %v765
        %v858 = vpack.c.bf16 %v768, %v767
        %v859 = vpack.c.bf16 %v770, %v769
        %v860 = vpack.c.bf16 %v772, %v771
        %v861 = vpack.c.bf16 %v774, %v773
        %v862 = vpack.c.bf16 %v776, %v775
        %v863 = vpack.c.bf16 %v778, %v777
        %v864 = vpack.c.bf16 %v780, %v779
        %v865 = vpack.c.bf16 %v782, %v781
        %v866 = vpack.c.bf16 %v784, %v783
        %v867 = vpack.c.bf16 %v786, %v785
        %v868 = vpack.c.bf16 %v788, %v787
        %v869 = vpack.c.bf16 %v790, %v789
        %v870 = vpack.c.bf16 %v792, %v791
        %v871 = vpack.c.bf16 %v794, %v793
        %v872 = vpack.c.bf16 %v796, %v795
        %v873 = vpack.c.bf16 %v798, %v797
        %v874 = vpack.c.bf16 %v800, %v799
        %v875 = vpack.c.bf16 %v802, %v801
        %v876 = vpack.c.bf16 %v804, %v803
        %v877 = vpack.c.bf16 %v806, %v805
        %v878 = vpack.c.bf16 %v808, %v807
        %v879 = vpack.c.bf16 %v810, %v809
        %v880 = vpack.c.bf16 %v812, %v811
        %v881 = vpack.c.bf16 %v814, %v813
        %v882 = vpack.c.bf16 %v816, %v815
        %v883 = vpack.c.bf16 %v818, %v817
        %v884 = vpack.c.bf16 %v820, %v819
        %v885 = vld [vmem:[%s2] sm:$0x3]
        %v886 = vld [vmem:[%s3] sm:$0x1]
        %v888 = vlaneseq
        %v889 = vshrl.u32 %v888, 7
        %v890 = vsub.s32 0, %v889
        %v891 = vrot.slane %v886, %v890
        %vm893 = vcmask 31744
        %v895 = vsel %vm893, %v821, 0
        %v898 = vsel %vm893, %v822, 0
        %v901 = vsel %vm893, %v823, 0
        %v904 = vsel %vm893, %v824, 0
        %v907 = vsel %vm893, %v825, 0
        %v910 = vsel %vm893, %v826, 0
        %v913 = vsel %vm893, %v827, 0
        %v916 = vsel %vm893, %v828, 0
        %v919 = vsel %vm893, %v829, 0
        %v922 = vsel %vm893, %v830, 0
        %v925 = vsel %vm893, %v831, 0
        %v928 = vsel %vm893, %v832, 0
        %v931 = vsel %vm893, %v833, 0
        %v934 = vsel %vm893, %v834, 0
        %v937 = vsel %vm893, %v835, 0
        %v940 = vsel %vm893, %v836, 0
        %v943 = vsel %vm893, %v837, 0
        %v946 = vsel %vm893, %v838, 0
        %v949 = vsel %vm893, %v839, 0
        %v952 = vsel %vm893, %v840, 0
        %v955 = vsel %vm893, %v841, 0
        %v958 = vsel %vm893, %v842, 0
        %v961 = vsel %vm893, %v843, 0
        %v964 = vsel %vm893, %v844, 0
        %v967 = vsel %vm893, %v845, 0
        %v970 = vsel %vm893, %v846, 0
        %v973 = vsel %vm893, %v847, 0
        %v976 = vsel %vm893, %v848, 0
        %v979 = vsel %vm893, %v849, 0
        %v982 = vsel %vm893, %v850, 0
        %v985 = vsel %vm893, %v851, 0
        %v988 = vsel %vm893, %v852, 0
        %v991 = vsel %vm893, %v853, 0
        %v994 = vsel %vm893, %v854, 0
        %v997 = vsel %vm893, %v855, 0
        %v1000 = vsel %vm893, %v856, 0
        %v1003 = vsel %vm893, %v857, 0
        %v1006 = vsel %vm893, %v858, 0
        %v1009 = vsel %vm893, %v859, 0
        %v1012 = vsel %vm893, %v860, 0
        %v1015 = vsel %vm893, %v861, 0
        %v1018 = vsel %vm893, %v862, 0
        %v1021 = vsel %vm893, %v863, 0
        %v1024 = vsel %vm893, %v864, 0
        %v1027 = vsel %vm893, %v865, 0
        %v1030 = vsel %vm893, %v866, 0
        %v1033 = vsel %vm893, %v867, 0
        %v1036 = vsel %vm893, %v868, 0
        %v1039 = vsel %vm893, %v869, 0
        %v1042 = vsel %vm893, %v870, 0
        %v1045 = vsel %vm893, %v871, 0
        %v1048 = vsel %vm893, %v872, 0
        %v1051 = vsel %vm893, %v873, 0
        %v1054 = vsel %vm893, %v874, 0
        %v1057 = vsel %vm893, %v875, 0
        %v1060 = vsel %vm893, %v876, 0
        %v1063 = vsel %vm893, %v877, 0
        %v1066 = vsel %vm893, %v878, 0
        %v1069 = vsel %vm893, %v879, 0
        %v1072 = vsel %vm893, %v880, 0
        %v1075 = vsel %vm893, %v881, 0
        %v1078 = vsel %vm893, %v882, 0
        %v1081 = vsel %vm893, %v883, 0
        %v1084 = vsel %vm893, %v884, 0
        %vm1086 = vcmask 1041408
        %v1088 = vsel %vm1086, %v885, 0
        %1090 = vmatprep.subr.bf16.mxu0 0
        %1091 = vmatpush1.bf16.msra.mxu0 %v1088
        %1092 = vmatprep.subr.bf16.mxu0 0
        %1093 = vmatpush1.bf16.msra.mxu0 0
        %1094 = vmatprep.subr.bf16.mxu0 0
        %1095 = vmatpush1.bf16.msra.mxu0 0
        %1096 = vmatprep.subr.bf16.mxu0 0
        %1097 = vmatpush1.bf16.msra.mxu0 0
        %1098 = vmatprep.subr.bf16.mxu0 0
        %1099 = vmatpush1.bf16.msra.mxu0 0
        %1100 = vmatprep.subr.bf16.mxu0 0
        %1101 = vmatpush1.bf16.msra.mxu0 0
        %1102 = vmatprep.subr.bf16.mxu0 0
        %1103 = vmatpush1.bf16.msra.mxu0 0
        %1104 = vmatprep.subr.bf16.mxu0 0
        %1105 = vmatpush1.bf16.msra.mxu0 0
        %1106 = vmatprep.subr.bf16.mxu0 0
        %1107 = vmatpush1.bf16.msra.mxu0 0
        %1108 = vmatprep.subr.bf16.mxu0 0
        %1109 = vmatpush1.bf16.msra.mxu0 0
        %1110 = vmatprep.subr.bf16.mxu0 0
        %1111 = vmatpush1.bf16.msra.mxu0 0
        %1112 = vmatprep.subr.bf16.mxu0 0
        %1113 = vmatpush1.bf16.msra.mxu0 0
        %1114 = vmatprep.subr.bf16.mxu0 0
        %1115 = vmatpush1.bf16.msra.mxu0 0
        %1116 = vmatprep.subr.bf16.mxu0 0
        %1117 = vmatpush1.bf16.msra.mxu0 0
        %1118 = vmatprep.subr.bf16.mxu0 0
        %1119 = vmatpush1.bf16.msra.mxu0 0
        %1120 = vmatprep.subr.bf16.mxu0 0
        %1121 = vmatpush1.bf16.msra.mxu0 0
        %1122 = vmatprep.mubr.bf16.mxu0 0
        %1123 = vmatmul.mubr.bf16.gmra.mrb[0].mxu0 %v895
        %v1124 = vpop.f32.mrb[0].mxu0
        %v1125 = vadd.f32 %v891, %v1124
        %v1126 = vpop.f32.mrb[0].mxu0
        %v1127 = vpop.f32.mrb[0].mxu0
        %v1128 = vadd.f32 %v891, %v1127
        %v1129 = vpop.f32.mrb[0].mxu0
        %1130 = vmatprep.mubr.bf16.mxu0 0
        %1131 = vmatmul.mubr.bf16.gmra.mrb[0].mxu0 %v898
        %v1132 = vpop.f32.mrb[0].mxu0
        %v1133 = vadd.f32 %v891, %v1132
        %v1134 = vpop.f32.mrb[0].mxu0
        %v1135 = vpop.f32.mrb[0].mxu0
        %v1136 = vadd.f32 %v891, %v1135
        %v1137 = vpop.f32.mrb[0].mxu0
        %1138 = vmatprep.mubr.bf16.mxu0 0
        %1139 = vmatmul.mubr.bf16.gmra.mrb[0].mxu0 %v901
        %v1140 = vpop.f32.mrb[0].mxu0
        %v1141 = vadd.f32 %v891, %v1140
        %v1142 = vpop.f32.mrb[0].mxu0
        %v1143 = vpop.f32.mrb[0].mxu0
        %v1144 = vadd.f32 %v891, %v1143
        %v1145 = vpop.f32.mrb[0].mxu0
        %1146 = vmatprep.mubr.bf16.mxu0 0
        %1147 = vmatmul.mubr.bf16.gmra.mrb[0].mxu0 %v904
        %v1148 = vpop.f32.mrb[0].mxu0
        %v1149 = vadd.f32 %v891, %v1148
        %v1150 = vpop.f32.mrb[0].mxu0
        %v1151 = vpop.f32.mrb[0].mxu0
        %v1152 = vadd.f32 %v891, %v1151
        %v1153 = vpop.f32.mrb[0].mxu0
        %1154 = vmatprep.mubr.bf16.mxu0 0
        %1155 = vmatmul.mubr.bf16.gmra.mrb[0].mxu0 %v907
        %v1156 = vpop.f32.mrb[0].mxu0
        %v1157 = vadd.f32 %v891, %v1156
        %v1158 = vpop.f32.mrb[0].mxu0
        %v1159 = vpop.f32.mrb[0].mxu0
        %v1160 = vadd.f32 %v891, %v1159
        %v1161 = vpop.f32.mrb[0].mxu0
        %1162 = vmatprep.mubr.bf16.mxu0 0
        %1163 = vmatmul.mubr.bf16.gmra.mrb[0].mxu0 %v910
        %v1164 = vpop.f32.mrb[0].mxu0
        %v1165 = vadd.f32 %v891, %v1164
        %v1166 = vpop.f32.mrb[0].mxu0
        %v1167 = vpop.f32.mrb[0].mxu0
        %v1168 = vadd.f32 %v891, %v1167
        %v1169 = vpop.f32.mrb[0].mxu0
        %1170 = vmatprep.mubr.bf16.mxu0 0
        %1171 = vmatmul.mubr.bf16.gmra.mrb[0].mxu0 %v913
        %v1172 = vpop.f32.mrb[0].mxu0
        %v1173 = vadd.f32 %v891, %v1172
        %v1174 = vpop.f32.mrb[0].mxu0
        %v1175 = vpop.f32.mrb[0].mxu0
        %v1176 = vadd.f32 %v891, %v1175
        %v1177 = vpop.f32.mrb[0].mxu0
        %1178 = vmatprep.mubr.bf16.mxu0 0
        %1179 = vmatmul.mubr.bf16.gmra.mrb[0].mxu0 %v916
        %v1180 = vpop.f32.mrb[0].mxu0
        %v1181 = vadd.f32 %v891, %v1180
        %v1182 = vpop.f32.mrb[0].mxu0
        %v1183 = vpop.f32.mrb[0].mxu0
        %v1184 = vadd.f32 %v891, %v1183
        %v1185 = vpop.f32.mrb[0].mxu0
        %1186 = vmatprep.mubr.bf16.mxu0 0
        %1187 = vmatmul.mubr.bf16.gmra.mrb[0].mxu0 %v919
        %v1188 = vpop.f32.mrb[0].mxu0
        %v1189 = vadd.f32 %v891, %v1188
        %v1190 = vpop.f32.mrb[0].mxu0
        %v1191 = vpop.f32.mrb[0].mxu0
        %v1192 = vadd.f32 %v891, %v1191
        %v1193 = vpop.f32.mrb[0].mxu0
        %1194 = vmatprep.mubr.bf16.mxu0 0
        %1195 = vmatmul.mubr.bf16.gmra.mrb[0].mxu0 %v922
        %v1196 = vpop.f32.mrb[0].mxu0
        %v1197 = vadd.f32 %v891, %v1196
        %v1198 = vpop.f32.mrb[0].mxu0
        %v1199 = vpop.f32.mrb[0].mxu0
        %v1200 = vadd.f32 %v891, %v1199
        %v1201 = vpop.f32.mrb[0].mxu0
        %1202 = vmatprep.mubr.bf16.mxu0 0
        %1203 = vmatmul.mubr.bf16.gmra.mrb[0].mxu0 %v925
        %v1204 = vpop.f32.mrb[0].mxu0
        %v1205 = vadd.f32 %v891, %v1204
        %v1206 = vpop.f32.mrb[0].mxu0
        %v1207 = vpop.f32.mrb[0].mxu0
        %v1208 = vadd.f32 %v891, %v1207
        %v1209 = vpop.f32.mrb[0].mxu0
        %1210 = vmatprep.mubr.bf16.mxu0 0
        %1211 = vmatmul.mubr.bf16.gmra.mrb[0].mxu0 %v928
        %v1212 = vpop.f32.mrb[0].mxu0
        %v1213 = vadd.f32 %v891, %v1212
        %v1214 = vpop.f32.mrb[0].mxu0
        %v1215 = vpop.f32.mrb[0].mxu0
        %v1216 = vadd.f32 %v891, %v1215
        %v1217 = vpop.f32.mrb[0].mxu0
        %1218 = vmatprep.mubr.bf16.mxu0 0
        %1219 = vmatmul.mubr.bf16.gmra.mrb[0].mxu0 %v931
        %v1220 = vpop.f32.mrb[0].mxu0
        %v1221 = vadd.f32 %v891, %v1220
        %v1222 = vpop.f32.mrb[0].mxu0
        %v1223 = vpop.f32.mrb[0].mxu0
        %v1224 = vadd.f32 %v891, %v1223
        %v1225 = vpop.f32.mrb[0].mxu0
        %1226 = vmatprep.mubr.bf16.mxu0 0
        %1227 = vmatmul.mubr.bf16.gmra.mrb[0].mxu0 %v934
        %v1228 = vpop.f32.mrb[0].mxu0
        %v1229 = vadd.f32 %v891, %v1228
        %v1230 = vpop.f32.mrb[0].mxu0
        %v1231 = vpop.f32.mrb[0].mxu0
        %v1232 = vadd.f32 %v891, %v1231
        %v1233 = vpop.f32.mrb[0].mxu0
        %1234 = vmatprep.mubr.bf16.mxu0 0
        %1235 = vmatmul.mubr.bf16.gmra.mrb[0].mxu0 %v937
        %v1236 = vpop.f32.mrb[0].mxu0
        %v1237 = vadd.f32 %v891, %v1236
        %v1238 = vpop.f32.mrb[0].mxu0
        %v1239 = vpop.f32.mrb[0].mxu0
        %v1240 = vadd.f32 %v891, %v1239
        %v1241 = vpop.f32.mrb[0].mxu0
        %1242 = vmatprep.mubr.bf16.mxu0 0
        %1243 = vmatmul.mubr.bf16.gmra.mrb[0].mxu0 %v940
        %v1244 = vpop.f32.mrb[0].mxu0
        %v1245 = vadd.f32 %v891, %v1244
        %v1246 = vpop.f32.mrb[0].mxu0
        %v1247 = vpop.f32.mrb[0].mxu0
        %v1248 = vadd.f32 %v891, %v1247
        %v1249 = vpop.f32.mrb[0].mxu0
        %1250 = vmatprep.mubr.bf16.mxu0 0
        %1251 = vmatmul.mubr.bf16.gmra.mrb[0].mxu0 %v943
        %v1252 = vpop.f32.mrb[0].mxu0
        %v1253 = vadd.f32 %v891, %v1252
        %v1254 = vpop.f32.mrb[0].mxu0
        %v1255 = vpop.f32.mrb[0].mxu0
        %v1256 = vadd.f32 %v891, %v1255
        %v1257 = vpop.f32.mrb[0].mxu0
        %1258 = vmatprep.mubr.bf16.mxu0 0
        %1259 = vmatmul.mubr.bf16.gmra.mrb[0].mxu0 %v946
        %v1260 = vpop.f32.mrb[0].mxu0
        %v1261 = vadd.f32 %v891, %v1260
        %v1262 = vpop.f32.mrb[0].mxu0
        %v1263 = vpop.f32.mrb[0].mxu0
        %v1264 = vadd.f32 %v891, %v1263
        %v1265 = vpop.f32.mrb[0].mxu0
        %1266 = vmatprep.mubr.bf16.mxu0 0
        %1267 = vmatmul.mubr.bf16.gmra.mrb[0].mxu0 %v949
        %v1268 = vpop.f32.mrb[0].mxu0
        %v1269 = vadd.f32 %v891, %v1268
        %v1270 = vpop.f32.mrb[0].mxu0
        %v1271 = vpop.f32.mrb[0].mxu0
        %v1272 = vadd.f32 %v891, %v1271
        %v1273 = vpop.f32.mrb[0].mxu0
        %1274 = vmatprep.mubr.bf16.mxu0 0
        %1275 = vmatmul.mubr.bf16.gmra.mrb[0].mxu0 %v952
        %v1276 = vpop.f32.mrb[0].mxu0
        %v1277 = vadd.f32 %v891, %v1276
        %v1278 = vpop.f32.mrb[0].mxu0
        %v1279 = vpop.f32.mrb[0].mxu0
        %v1280 = vadd.f32 %v891, %v1279
        %v1281 = vpop.f32.mrb[0].mxu0
        %1282 = vmatprep.mubr.bf16.mxu0 0
        %1283 = vmatmul.mubr.bf16.gmra.mrb[0].mxu0 %v955
        %v1284 = vpop.f32.mrb[0].mxu0
        %v1285 = vadd.f32 %v891, %v1284
        %v1286 = vpop.f32.mrb[0].mxu0
        %v1287 = vpop.f32.mrb[0].mxu0
        %v1288 = vadd.f32 %v891, %v1287
        %v1289 = vpop.f32.mrb[0].mxu0
        %1290 = vmatprep.mubr.bf16.mxu0 0
        %1291 = vmatmul.mubr.bf16.gmra.mrb[0].mxu0 %v958
        %v1292 = vpop.f32.mrb[0].mxu0
        %v1293 = vadd.f32 %v891, %v1292
        %v1294 = vpop.f32.mrb[0].mxu0
        %v1295 = vpop.f32.mrb[0].mxu0
        %v1296 = vadd.f32 %v891, %v1295
        %v1297 = vpop.f32.mrb[0].mxu0
        %1298 = vmatprep.mubr.bf16.mxu0 0
        %1299 = vmatmul.mubr.bf16.gmra.mrb[0].mxu0 %v961
        %v1300 = vpop.f32.mrb[0].mxu0
        %v1301 = vadd.f32 %v891, %v1300
        %v1302 = vpop.f32.mrb[0].mxu0
        %v1303 = vpop.f32.mrb[0].mxu0
        %v1304 = vadd.f32 %v891, %v1303
        %v1305 = vpop.f32.mrb[0].mxu0
        %1306 = vmatprep.mubr.bf16.mxu0 0
        %1307 = vmatmul.mubr.bf16.gmra.mrb[0].mxu0 %v964
        %v1308 = vpop.f32.mrb[0].mxu0
        %v1309 = vadd.f32 %v891, %v1308
        %v1310 = vpop.f32.mrb[0].mxu0
        %v1311 = vpop.f32.mrb[0].mxu0
        %v1312 = vadd.f32 %v891, %v1311
        %v1313 = vpop.f32.mrb[0].mxu0
        %1314 = vmatprep.mubr.bf16.mxu0 0
        %1315 = vmatmul.mubr.bf16.gmra.mrb[0].mxu0 %v967
        %v1316 = vpop.f32.mrb[0].mxu0
        %v1317 = vadd.f32 %v891, %v1316
        %v1318 = vpop.f32.mrb[0].mxu0
        %v1319 = vpop.f32.mrb[0].mxu0
        %v1320 = vadd.f32 %v891, %v1319
        %v1321 = vpop.f32.mrb[0].mxu0
        %1322 = vmatprep.mubr.bf16.mxu0 0
        %1323 = vmatmul.mubr.bf16.gmra.mrb[0].mxu0 %v970
        %v1324 = vpop.f32.mrb[0].mxu0
        %v1325 = vadd.f32 %v891, %v1324
        %v1326 = vpop.f32.mrb[0].mxu0
        %v1327 = vpop.f32.mrb[0].mxu0
        %v1328 = vadd.f32 %v891, %v1327
        %v1329 = vpop.f32.mrb[0].mxu0
        %1330 = vmatprep.mubr.bf16.mxu0 0
        %1331 = vmatmul.mubr.bf16.gmra.mrb[0].mxu0 %v973
        %v1332 = vpop.f32.mrb[0].mxu0
        %v1333 = vadd.f32 %v891, %v1332
        %v1334 = vpop.f32.mrb[0].mxu0
        %v1335 = vpop.f32.mrb[0].mxu0
        %v1336 = vadd.f32 %v891, %v1335
        %v1337 = vpop.f32.mrb[0].mxu0
        %1338 = vmatprep.mubr.bf16.mxu0 0
        %1339 = vmatmul.mubr.bf16.gmra.mrb[0].mxu0 %v976
        %v1340 = vpop.f32.mrb[0].mxu0
        %v1341 = vadd.f32 %v891, %v1340
        %v1342 = vpop.f32.mrb[0].mxu0
        %v1343 = vpop.f32.mrb[0].mxu0
        %v1344 = vadd.f32 %v891, %v1343
        %v1345 = vpop.f32.mrb[0].mxu0
        %1346 = vmatprep.mubr.bf16.mxu0 0
        %1347 = vmatmul.mubr.bf16.gmra.mrb[0].mxu0 %v979
        %v1348 = vpop.f32.mrb[0].mxu0
        %v1349 = vadd.f32 %v891, %v1348
        %v1350 = vpop.f32.mrb[0].mxu0
        %v1351 = vpop.f32.mrb[0].mxu0
        %v1352 = vadd.f32 %v891, %v1351
        %v1353 = vpop.f32.mrb[0].mxu0
        %1354 = vmatprep.mubr.bf16.mxu0 0
        %1355 = vmatmul.mubr.bf16.gmra.mrb[0].mxu0 %v982
        %v1356 = vpop.f32.mrb[0].mxu0
        %v1357 = vadd.f32 %v891, %v1356
        %v1358 = vpop.f32.mrb[0].mxu0
        %v1359 = vpop.f32.mrb[0].mxu0
        %v1360 = vadd.f32 %v891, %v1359
        %v1361 = vpop.f32.mrb[0].mxu0
        %1362 = vmatprep.mubr.bf16.mxu0 0
        %1363 = vmatmul.mubr.bf16.gmra.mrb[0].mxu0 %v985
        %v1364 = vpop.f32.mrb[0].mxu0
        %v1365 = vadd.f32 %v891, %v1364
        %v1366 = vpop.f32.mrb[0].mxu0
        %v1367 = vpop.f32.mrb[0].mxu0
        %v1368 = vadd.f32 %v891, %v1367
        %v1369 = vpop.f32.mrb[0].mxu0
        %1370 = vmatprep.mubr.bf16.mxu0 0
        %1371 = vmatmul.mubr.bf16.gmra.mrb[0].mxu0 %v988
        %v1372 = vpop.f32.mrb[0].mxu0
        %v1373 = vadd.f32 %v891, %v1372
        %v1374 = vpop.f32.mrb[0].mxu0
        %v1375 = vpop.f32.mrb[0].mxu0
        %v1376 = vadd.f32 %v891, %v1375
        %v1377 = vpop.f32.mrb[0].mxu0
        %1378 = vmatprep.mubr.bf16.mxu0 0
        %1379 = vmatmul.mubr.bf16.gmra.mrb[0].mxu0 %v991
        %v1380 = vpop.f32.mrb[0].mxu0
        %v1381 = vadd.f32 %v891, %v1380
        %v1382 = vpop.f32.mrb[0].mxu0
        %v1383 = vpop.f32.mrb[0].mxu0
        %v1384 = vadd.f32 %v891, %v1383
        %v1385 = vpop.f32.mrb[0].mxu0
        %1386 = vmatprep.mubr.bf16.mxu0 0
        %1387 = vmatmul.mubr.bf16.gmra.mrb[0].mxu0 %v994
        %v1388 = vpop.f32.mrb[0].mxu0
        %v1389 = vadd.f32 %v891, %v1388
        %v1390 = vpop.f32.mrb[0].mxu0
        %v1391 = vpop.f32.mrb[0].mxu0
        %v1392 = vadd.f32 %v891, %v1391
        %v1393 = vpop.f32.mrb[0].mxu0
        %1394 = vmatprep.mubr.bf16.mxu0 0
        %1395 = vmatmul.mubr.bf16.gmra.mrb[0].mxu0 %v997
        %v1396 = vpop.f32.mrb[0].mxu0
        %v1397 = vadd.f32 %v891, %v1396
        %v1398 = vpop.f32.mrb[0].mxu0
        %v1399 = vpop.f32.mrb[0].mxu0
        %v1400 = vadd.f32 %v891, %v1399
        %v1401 = vpop.f32.mrb[0].mxu0
        %1402 = vmatprep.mubr.bf16.mxu0 0
        %1403 = vmatmul.mubr.bf16.gmra.mrb[0].mxu0 %v1000
        %v1404 = vpop.f32.mrb[0].mxu0
        %v1405 = vadd.f32 %v891, %v1404
        %v1406 = vpop.f32.mrb[0].mxu0
        %v1407 = vpop.f32.mrb[0].mxu0
        %v1408 = vadd.f32 %v891, %v1407
        %v1409 = vpop.f32.mrb[0].mxu0
        %1410 = vmatprep.mubr.bf16.mxu0 0
        %1411 = vmatmul.mubr.bf16.gmra.mrb[0].mxu0 %v1003
        %v1412 = vpop.f32.mrb[0].mxu0
        %v1413 = vadd.f32 %v891, %v1412
        %v1414 = vpop.f32.mrb[0].mxu0
        %v1415 = vpop.f32.mrb[0].mxu0
        %v1416 = vadd.f32 %v891, %v1415
        %v1417 = vpop.f32.mrb[0].mxu0
        %1418 = vmatprep.mubr.bf16.mxu0 0
        %1419 = vmatmul.mubr.bf16.gmra.mrb[0].mxu0 %v1006
        %v1420 = vpop.f32.mrb[0].mxu0
        %v1421 = vadd.f32 %v891, %v1420
        %v1422 = vpop.f32.mrb[0].mxu0
        %v1423 = vpop.f32.mrb[0].mxu0
        %v1424 = vadd.f32 %v891, %v1423
        %v1425 = vpop.f32.mrb[0].mxu0
        %1426 = vmatprep.mubr.bf16.mxu0 0
        %1427 = vmatmul.mubr.bf16.gmra.mrb[0].mxu0 %v1009
        %v1428 = vpop.f32.mrb[0].mxu0
        %v1429 = vadd.f32 %v891, %v1428
        %v1430 = vpop.f32.mrb[0].mxu0
        %v1431 = vpop.f32.mrb[0].mxu0
        %v1432 = vadd.f32 %v891, %v1431
        %v1433 = vpop.f32.mrb[0].mxu0
        %1434 = vmatprep.mubr.bf16.mxu0 0
        %1435 = vmatmul.mubr.bf16.gmra.mrb[0].mxu0 %v1012
        %v1436 = vpop.f32.mrb[0].mxu0
        %v1437 = vadd.f32 %v891, %v1436
        %v1438 = vpop.f32.mrb[0].mxu0
        %v1439 = vpop.f32.mrb[0].mxu0
        %v1440 = vadd.f32 %v891, %v1439
        %v1441 = vpop.f32.mrb[0].mxu0
        %1442 = vmatprep.mubr.bf16.mxu0 0
        %1443 = vmatmul.mubr.bf16.gmra.mrb[0].mxu0 %v1015
        %v1444 = vpop.f32.mrb[0].mxu0
        %v1445 = vadd.f32 %v891, %v1444
        %v1446 = vpop.f32.mrb[0].mxu0
        %v1447 = vpop.f32.mrb[0].mxu0
        %v1448 = vadd.f32 %v891, %v1447
        %v1449 = vpop.f32.mrb[0].mxu0
        %1450 = vmatprep.mubr.bf16.mxu0 0
        %1451 = vmatmul.mubr.bf16.gmra.mrb[0].mxu0 %v1018
        %v1452 = vpop.f32.mrb[0].mxu0
        %v1453 = vadd.f32 %v891, %v1452
        %v1454 = vpop.f32.mrb[0].mxu0
        %v1455 = vpop.f32.mrb[0].mxu0
        %v1456 = vadd.f32 %v891, %v1455
        %v1457 = vpop.f32.mrb[0].mxu0
        %1458 = vmatprep.mubr.bf16.mxu0 0
        %1459 = vmatmul.mubr.bf16.gmra.mrb[0].mxu0 %v1021
        %v1460 = vpop.f32.mrb[0].mxu0
        %v1461 = vadd.f32 %v891, %v1460
        %v1462 = vpop.f32.mrb[0].mxu0
        %v1463 = vpop.f32.mrb[0].mxu0
        %v1464 = vadd.f32 %v891, %v1463
        %v1465 = vpop.f32.mrb[0].mxu0
        %1466 = vmatprep.mubr.bf16.mxu0 0
        %1467 = vmatmul.mubr.bf16.gmra.mrb[0].mxu0 %v1024
        %v1468 = vpop.f32.mrb[0].mxu0
        %v1469 = vadd.f32 %v891, %v1468
        %v1470 = vpop.f32.mrb[0].mxu0
        %v1471 = vpop.f32.mrb[0].mxu0
        %v1472 = vadd.f32 %v891, %v1471
        %v1473 = vpop.f32.mrb[0].mxu0
        %1474 = vmatprep.mubr.bf16.mxu0 0
        %1475 = vmatmul.mubr.bf16.gmra.mrb[0].mxu0 %v1027
        %v1476 = vpop.f32.mrb[0].mxu0
        %v1477 = vadd.f32 %v891, %v1476
        %v1478 = vpop.f32.mrb[0].mxu0
        %v1479 = vpop.f32.mrb[0].mxu0
        %v1480 = vadd.f32 %v891, %v1479
        %v1481 = vpop.f32.mrb[0].mxu0
        %1482 = vmatprep.mubr.bf16.mxu0 0
        %1483 = vmatmul.mubr.bf16.gmra.mrb[0].mxu0 %v1030
        %v1484 = vpop.f32.mrb[0].mxu0
        %v1485 = vadd.f32 %v891, %v1484
        %v1486 = vpop.f32.mrb[0].mxu0
        %v1487 = vpop.f32.mrb[0].mxu0
        %v1488 = vadd.f32 %v891, %v1487
        %v1489 = vpop.f32.mrb[0].mxu0
        %1490 = vmatprep.mubr.bf16.mxu0 0
        %1491 = vmatmul.mubr.bf16.gmra.mrb[0].mxu0 %v1033
        %v1492 = vpop.f32.mrb[0].mxu0
        %v1493 = vadd.f32 %v891, %v1492
        %v1494 = vpop.f32.mrb[0].mxu0
        %v1495 = vpop.f32.mrb[0].mxu0
        %v1496 = vadd.f32 %v891, %v1495
        %v1497 = vpop.f32.mrb[0].mxu0
        %1498 = vmatprep.mubr.bf16.mxu0 0
        %1499 = vmatmul.mubr.bf16.gmra.mrb[0].mxu0 %v1036
        %v1500 = vpop.f32.mrb[0].mxu0
        %v1501 = vadd.f32 %v891, %v1500
        %v1502 = vpop.f32.mrb[0].mxu0
        %v1503 = vpop.f32.mrb[0].mxu0
        %v1504 = vadd.f32 %v891, %v1503
        %v1505 = vpop.f32.mrb[0].mxu0
        %1506 = vmatprep.mubr.bf16.mxu0 0
        %1507 = vmatmul.mubr.bf16.gmra.mrb[0].mxu0 %v1039
        %v1508 = vpop.f32.mrb[0].mxu0
        %v1509 = vadd.f32 %v891, %v1508
        %v1510 = vpop.f32.mrb[0].mxu0
        %v1511 = vpop.f32.mrb[0].mxu0
        %v1512 = vadd.f32 %v891, %v1511
        %v1513 = vpop.f32.mrb[0].mxu0
        %1514 = vmatprep.mubr.bf16.mxu0 0
        %1515 = vmatmul.mubr.bf16.gmra.mrb[0].mxu0 %v1042
        %v1516 = vpop.f32.mrb[0].mxu0
        %v1517 = vadd.f32 %v891, %v1516
        %v1518 = vpop.f32.mrb[0].mxu0
        %v1519 = vpop.f32.mrb[0].mxu0
        %v1520 = vadd.f32 %v891, %v1519
        %v1521 = vpop.f32.mrb[0].mxu0
        %1522 = vmatprep.mubr.bf16.mxu0 0
        %1523 = vmatmul.mubr.bf16.gmra.mrb[0].mxu0 %v1045
        %v1524 = vpop.f32.mrb[0].mxu0
        %v1525 = vadd.f32 %v891, %v1524
        %v1526 = vpop.f32.mrb[0].mxu0
        %v1527 = vpop.f32.mrb[0].mxu0
        %v1528 = vadd.f32 %v891, %v1527
        %v1529 = vpop.f32.mrb[0].mxu0
        %1530 = vmatprep.mubr.bf16.mxu0 0
        %1531 = vmatmul.mubr.bf16.gmra.mrb[0].mxu0 %v1048
        %v1532 = vpop.f32.mrb[0].mxu0
        %v1533 = vadd.f32 %v891, %v1532
        %v1534 = vpop.f32.mrb[0].mxu0
        %v1535 = vpop.f32.mrb[0].mxu0
        %v1536 = vadd.f32 %v891, %v1535
        %v1537 = vpop.f32.mrb[0].mxu0
        %1538 = vmatprep.mubr.bf16.mxu0 0
        %1539 = vmatmul.mubr.bf16.gmra.mrb[0].mxu0 %v1051
        %v1540 = vpop.f32.mrb[0].mxu0
        %v1541 = vadd.f32 %v891, %v1540
        %v1542 = vpop.f32.mrb[0].mxu0
        %v1543 = vpop.f32.mrb[0].mxu0
        %v1544 = vadd.f32 %v891, %v1543
        %v1545 = vpop.f32.mrb[0].mxu0
        %1546 = vmatprep.mubr.bf16.mxu0 0
        %1547 = vmatmul.mubr.bf16.gmra.mrb[0].mxu0 %v1054
        %v1548 = vpop.f32.mrb[0].mxu0
        %v1549 = vadd.f32 %v891, %v1548
        %v1550 = vpop.f32.mrb[0].mxu0
        %v1551 = vpop.f32.mrb[0].mxu0
        %v1552 = vadd.f32 %v891, %v1551
        %v1553 = vpop.f32.mrb[0].mxu0
        %1554 = vmatprep.mubr.bf16.mxu0 0
        %1555 = vmatmul.mubr.bf16.gmra.mrb[0].mxu0 %v1057
        %v1556 = vpop.f32.mrb[0].mxu0
        %v1557 = vadd.f32 %v891, %v1556
        %v1558 = vpop.f32.mrb[0].mxu0
        %v1559 = vpop.f32.mrb[0].mxu0
        %v1560 = vadd.f32 %v891, %v1559
        %v1561 = vpop.f32.mrb[0].mxu0
        %1562 = vmatprep.mubr.bf16.mxu0 0
        %1563 = vmatmul.mubr.bf16.gmra.mrb[0].mxu0 %v1060
        %v1564 = vpop.f32.mrb[0].mxu0
        %v1565 = vadd.f32 %v891, %v1564
        %v1566 = vpop.f32.mrb[0].mxu0
        %v1567 = vpop.f32.mrb[0].mxu0
        %v1568 = vadd.f32 %v891, %v1567
        %v1569 = vpop.f32.mrb[0].mxu0
        %1570 = vmatprep.mubr.bf16.mxu0 0
        %1571 = vmatmul.mubr.bf16.gmra.mrb[0].mxu0 %v1063
        %v1572 = vpop.f32.mrb[0].mxu0
        %v1573 = vadd.f32 %v891, %v1572
        %v1574 = vpop.f32.mrb[0].mxu0
        %v1575 = vpop.f32.mrb[0].mxu0
        %v1576 = vadd.f32 %v891, %v1575
        %v1577 = vpop.f32.mrb[0].mxu0
        %1578 = vmatprep.mubr.bf16.mxu0 0
        %1579 = vmatmul.mubr.bf16.gmra.mrb[0].mxu0 %v1066
        %v1580 = vpop.f32.mrb[0].mxu0
        %v1581 = vadd.f32 %v891, %v1580
        %v1582 = vpop.f32.mrb[0].mxu0
        %v1583 = vpop.f32.mrb[0].mxu0
        %v1584 = vadd.f32 %v891, %v1583
        %v1585 = vpop.f32.mrb[0].mxu0
        %1586 = vmatprep.mubr.bf16.mxu0 0
        %1587 = vmatmul.mubr.bf16.gmra.mrb[0].mxu0 %v1069
        %v1588 = vpop.f32.mrb[0].mxu0
        %v1589 = vadd.f32 %v891, %v1588
        %v1590 = vpop.f32.mrb[0].mxu0
        %v1591 = vpop.f32.mrb[0].mxu0
        %v1592 = vadd.f32 %v891, %v1591
        %v1593 = vpop.f32.mrb[0].mxu0
        %1594 = vmatprep.mubr.bf16.mxu0 0
        %1595 = vmatmul.mubr.bf16.gmra.mrb[0].mxu0 %v1072
        %v1596 = vpop.f32.mrb[0].mxu0
        %v1597 = vadd.f32 %v891, %v1596
        %v1598 = vpop.f32.mrb[0].mxu0
        %v1599 = vpop.f32.mrb[0].mxu0
        %v1600 = vadd.f32 %v891, %v1599
        %v1601 = vpop.f32.mrb[0].mxu0
        %1602 = vmatprep.mubr.bf16.mxu0 0
        %1603 = vmatmul.mubr.bf16.gmra.mrb[0].mxu0 %v1075
        %v1604 = vpop.f32.mrb[0].mxu0
        %v1605 = vadd.f32 %v891, %v1604
        %v1606 = vpop.f32.mrb[0].mxu0
        %v1607 = vpop.f32.mrb[0].mxu0
        %v1608 = vadd.f32 %v891, %v1607
        %v1609 = vpop.f32.mrb[0].mxu0
        %1610 = vmatprep.mubr.bf16.mxu0 0
        %1611 = vmatmul.mubr.bf16.gmra.mrb[0].mxu0 %v1078
        %v1612 = vpop.f32.mrb[0].mxu0
        %v1613 = vadd.f32 %v891, %v1612
        %v1614 = vpop.f32.mrb[0].mxu0
        %v1615 = vpop.f32.mrb[0].mxu0
        %v1616 = vadd.f32 %v891, %v1615
        %v1617 = vpop.f32.mrb[0].mxu0
        %1618 = vmatprep.mubr.bf16.mxu0 0
        %1619 = vmatmul.mubr.bf16.gmra.mrb[0].mxu0 %v1081
        %v1620 = vpop.f32.mrb[0].mxu0
        %v1621 = vadd.f32 %v891, %v1620
        %v1622 = vpop.f32.mrb[0].mxu0
        %v1623 = vpop.f32.mrb[0].mxu0
        %v1624 = vadd.f32 %v891, %v1623
        %v1625 = vpop.f32.mrb[0].mxu0
        %1626 = vmatprep.mubr.bf16.mxu0 0
        %1627 = vmatmul.mubr.bf16.gmra.mrb[0].mxu0 %v1084
        %v1628 = vpop.f32.mrb[0].mxu0
        %v1629 = vadd.f32 %v891, %v1628
        %v1630 = vpop.f32.mrb[0].mxu0
        %v1631 = vpop.f32.mrb[0].mxu0
        %v1632 = vadd.f32 %v891, %v1631
        %v1633 = vpop.f32.mrb[0].mxu0
        %1634 = vdwg.mxu0
        %v1635 = vmul.f32 %v1125, 0.01
        %v1636 = vmul.f32 %v1128, 0.01
        %v1637 = vmul.f32 %v1133, 0.01
        %v1638 = vmul.f32 %v1136, 0.01
        %v1639 = vmul.f32 %v1141, 0.01
        %v1640 = vmul.f32 %v1144, 0.01
        %v1641 = vmul.f32 %v1149, 0.01
        %v1642 = vmul.f32 %v1152, 0.01
        %v1643 = vmul.f32 %v1157, 0.01
        %v1644 = vmul.f32 %v1160, 0.01
        %v1645 = vmul.f32 %v1165, 0.01
        %v1646 = vmul.f32 %v1168, 0.01
        %v1647 = vmul.f32 %v1173, 0.01
        %v1648 = vmul.f32 %v1176, 0.01
        %v1649 = vmul.f32 %v1181, 0.01
        %v1650 = vmul.f32 %v1184, 0.01
        %v1651 = vmul.f32 %v1189, 0.01
        %v1652 = vmul.f32 %v1192, 0.01
        %v1653 = vmul.f32 %v1197, 0.01
        %v1654 = vmul.f32 %v1200, 0.01
        %v1655 = vmul.f32 %v1205, 0.01
        %v1656 = vmul.f32 %v1208, 0.01
        %v1657 = vmul.f32 %v1213, 0.01
        %v1658 = vmul.f32 %v1216, 0.01
        %v1659 = vmul.f32 %v1221, 0.01
        %v1660 = vmul.f32 %v1224, 0.01
        %v1661 = vmul.f32 %v1229, 0.01
        %v1662 = vmul.f32 %v1232, 0.01
        %v1663 = vmul.f32 %v1237, 0.01
        %v1664 = vmul.f32 %v1240, 0.01
        %v1665 = vmul.f32 %v1245, 0.01
        %v1666 = vmul.f32 %v1248, 0.01
        %v1667 = vmul.f32 %v1253, 0.01
        %v1668 = vmul.f32 %v1256, 0.01
        %v1669 = vmul.f32 %v1261, 0.01
        %v1670 = vmul.f32 %v1264, 0.01
        %v1671 = vmul.f32 %v1269, 0.01
        %v1672 = vmul.f32 %v1272, 0.01
        %v1673 = vmul.f32 %v1277, 0.01
        %v1674 = vmul.f32 %v1280, 0.01
        %v1675 = vmul.f32 %v1285, 0.01
        %v1676 = vmul.f32 %v1288, 0.01
        %v1677 = vmul.f32 %v1293, 0.01
        %v1678 = vmul.f32 %v1296, 0.01
        %v1679 = vmul.f32 %v1301, 0.01
        %v1680 = vmul.f32 %v1304, 0.01
        %v1681 = vmul.f32 %v1309, 0.01
        %v1682 = vmul.f32 %v1312, 0.01
        %v1683 = vmul.f32 %v1317, 0.01
        %v1684 = vmul.f32 %v1320, 0.01
        %v1685 = vmul.f32 %v1325, 0.01
        %v1686 = vmul.f32 %v1328, 0.01
        %v1687 = vmul.f32 %v1333, 0.01
        %v1688 = vmul.f32 %v1336, 0.01
        %v1689 = vmul.f32 %v1341, 0.01
        %v1690 = vmul.f32 %v1344, 0.01
        %v1691 = vmul.f32 %v1349, 0.01
        %v1692 = vmul.f32 %v1352, 0.01
        %v1693 = vmul.f32 %v1357, 0.01
        %v1694 = vmul.f32 %v1360, 0.01
        %v1695 = vmul.f32 %v1365, 0.01
        %v1696 = vmul.f32 %v1368, 0.01
        %v1697 = vmul.f32 %v1373, 0.01
        %v1698 = vmul.f32 %v1376, 0.01
        %v1699 = vmul.f32 %v1381, 0.01
        %v1700 = vmul.f32 %v1384, 0.01
        %v1701 = vmul.f32 %v1389, 0.01
        %v1702 = vmul.f32 %v1392, 0.01
        %v1703 = vmul.f32 %v1397, 0.01
        %v1704 = vmul.f32 %v1400, 0.01
        %v1705 = vmul.f32 %v1405, 0.01
        %v1706 = vmul.f32 %v1408, 0.01
        %v1707 = vmul.f32 %v1413, 0.01
        %v1708 = vmul.f32 %v1416, 0.01
        %v1709 = vmul.f32 %v1421, 0.01
        %v1710 = vmul.f32 %v1424, 0.01
        %v1711 = vmul.f32 %v1429, 0.01
        %v1712 = vmul.f32 %v1432, 0.01
        %v1713 = vmul.f32 %v1437, 0.01
        %v1714 = vmul.f32 %v1440, 0.01
        %v1715 = vmul.f32 %v1445, 0.01
        %v1716 = vmul.f32 %v1448, 0.01
        %v1717 = vmul.f32 %v1453, 0.01
        %v1718 = vmul.f32 %v1456, 0.01
        %v1719 = vmul.f32 %v1461, 0.01
        %v1720 = vmul.f32 %v1464, 0.01
        %v1721 = vmul.f32 %v1469, 0.01
        %v1722 = vmul.f32 %v1472, 0.01
        %v1723 = vmul.f32 %v1477, 0.01
        %v1724 = vmul.f32 %v1480, 0.01
        %v1725 = vmul.f32 %v1485, 0.01
        %v1726 = vmul.f32 %v1488, 0.01
        %v1727 = vmul.f32 %v1493, 0.01
        %v1728 = vmul.f32 %v1496, 0.01
        %v1729 = vmul.f32 %v1501, 0.01
        %v1730 = vmul.f32 %v1504, 0.01
        %v1731 = vmul.f32 %v1509, 0.01
        %v1732 = vmul.f32 %v1512, 0.01
        %v1733 = vmul.f32 %v1517, 0.01
        %v1734 = vmul.f32 %v1520, 0.01
        %v1735 = vmul.f32 %v1525, 0.01
        %v1736 = vmul.f32 %v1528, 0.01
        %v1737 = vmul.f32 %v1533, 0.01
        %v1738 = vmul.f32 %v1536, 0.01
        %v1739 = vmul.f32 %v1541, 0.01
        %v1740 = vmul.f32 %v1544, 0.01
        %v1741 = vmul.f32 %v1549, 0.01
        %v1742 = vmul.f32 %v1552, 0.01
        %v1743 = vmul.f32 %v1557, 0.01
        %v1744 = vmul.f32 %v1560, 0.01
        %v1745 = vmul.f32 %v1565, 0.01
        %v1746 = vmul.f32 %v1568, 0.01
        %v1747 = vmul.f32 %v1573, 0.01
        %v1748 = vmul.f32 %v1576, 0.01
        %v1749 = vmul.f32 %v1581, 0.01
        %v1750 = vmul.f32 %v1584, 0.01
        %v1751 = vmul.f32 %v1589, 0.01
        %v1752 = vmul.f32 %v1592, 0.01
        %v1753 = vmul.f32 %v1597, 0.01
        %v1754 = vmul.f32 %v1600, 0.01
        %v1755 = vmul.f32 %v1605, 0.01
        %v1756 = vmul.f32 %v1608, 0.01
        %v1757 = vmul.f32 %v1613, 0.01
        %v1758 = vmul.f32 %v1616, 0.01
        %v1759 = vmul.f32 %v1621, 0.01
        %v1760 = vmul.f32 %v1624, 0.01
        %v1761 = vmul.f32 %v1629, 0.01
        %v1762 = vmul.f32 %v1632, 0.01
        %v1763 = vmax.f32 %v1125, %v1635
        %v1764 = vmax.f32 %v1128, %v1636
        %v1765 = vmax.f32 %v1133, %v1637
        %v1766 = vmax.f32 %v1136, %v1638
        %v1767 = vmax.f32 %v1141, %v1639
        %v1768 = vmax.f32 %v1144, %v1640
        %v1769 = vmax.f32 %v1149, %v1641
        %v1770 = vmax.f32 %v1152, %v1642
        %v1771 = vmax.f32 %v1157, %v1643
        %v1772 = vmax.f32 %v1160, %v1644
        %v1773 = vmax.f32 %v1165, %v1645
        %v1774 = vmax.f32 %v1168, %v1646
        %v1775 = vmax.f32 %v1173, %v1647
        %v1776 = vmax.f32 %v1176, %v1648
        %v1777 = vmax.f32 %v1181, %v1649
        %v1778 = vmax.f32 %v1184, %v1650
        %v1779 = vmax.f32 %v1189, %v1651
        %v1780 = vmax.f32 %v1192, %v1652
        %v1781 = vmax.f32 %v1197, %v1653
        %v1782 = vmax.f32 %v1200, %v1654
        %v1783 = vmax.f32 %v1205, %v1655
        %v1784 = vmax.f32 %v1208, %v1656
        %v1785 = vmax.f32 %v1213, %v1657
        %v1786 = vmax.f32 %v1216, %v1658
        %v1787 = vmax.f32 %v1221, %v1659
        %v1788 = vmax.f32 %v1224, %v1660
        %v1789 = vmax.f32 %v1229, %v1661
        %v1790 = vmax.f32 %v1232, %v1662
        %v1791 = vmax.f32 %v1237, %v1663
        %v1792 = vmax.f32 %v1240, %v1664
        %v1793 = vmax.f32 %v1245, %v1665
        %v1794 = vmax.f32 %v1248, %v1666
        %v1795 = vmax.f32 %v1253, %v1667
        %v1796 = vmax.f32 %v1256, %v1668
        %v1797 = vmax.f32 %v1261, %v1669
        %v1798 = vmax.f32 %v1264, %v1670
        %v1799 = vmax.f32 %v1269, %v1671
        %v1800 = vmax.f32 %v1272, %v1672
        %v1801 = vmax.f32 %v1277, %v1673
        %v1802 = vmax.f32 %v1280, %v1674
        %v1803 = vmax.f32 %v1285, %v1675
        %v1804 = vmax.f32 %v1288, %v1676
        %v1805 = vmax.f32 %v1293, %v1677
        %v1806 = vmax.f32 %v1296, %v1678
        %v1807 = vmax.f32 %v1301, %v1679
        %v1808 = vmax.f32 %v1304, %v1680
        %v1809 = vmax.f32 %v1309, %v1681
        %v1810 = vmax.f32 %v1312, %v1682
        %v1811 = vmax.f32 %v1317, %v1683
        %v1812 = vmax.f32 %v1320, %v1684
        %v1813 = vmax.f32 %v1325, %v1685
        %v1814 = vmax.f32 %v1328, %v1686
        %v1815 = vmax.f32 %v1333, %v1687
        %v1816 = vmax.f32 %v1336, %v1688
        %v1817 = vmax.f32 %v1341, %v1689
        %v1818 = vmax.f32 %v1344, %v1690
        %v1819 = vmax.f32 %v1349, %v1691
        %v1820 = vmax.f32 %v1352, %v1692
        %v1821 = vmax.f32 %v1357, %v1693
        %v1822 = vmax.f32 %v1360, %v1694
        %v1823 = vmax.f32 %v1365, %v1695
        %v1824 = vmax.f32 %v1368, %v1696
        %v1825 = vmax.f32 %v1373, %v1697
        %v1826 = vmax.f32 %v1376, %v1698
        %v1827 = vmax.f32 %v1381, %v1699
        %v1828 = vmax.f32 %v1384, %v1700
        %v1829 = vmax.f32 %v1389, %v1701
        %v1830 = vmax.f32 %v1392, %v1702
        %v1831 = vmax.f32 %v1397, %v1703
        %v1832 = vmax.f32 %v1400, %v1704
        %v1833 = vmax.f32 %v1405, %v1705
        %v1834 = vmax.f32 %v1408, %v1706
        %v1835 = vmax.f32 %v1413, %v1707
        %v1836 = vmax.f32 %v1416, %v1708
        %v1837 = vmax.f32 %v1421, %v1709
        %v1838 = vmax.f32 %v1424, %v1710
        %v1839 = vmax.f32 %v1429, %v1711
        %v1840 = vmax.f32 %v1432, %v1712
        %v1841 = vmax.f32 %v1437, %v1713
        %v1842 = vmax.f32 %v1440, %v1714
        %v1843 = vmax.f32 %v1445, %v1715
        %v1844 = vmax.f32 %v1448, %v1716
        %v1845 = vmax.f32 %v1453, %v1717
        %v1846 = vmax.f32 %v1456, %v1718
        %v1847 = vmax.f32 %v1461, %v1719
        %v1848 = vmax.f32 %v1464, %v1720
        %v1849 = vmax.f32 %v1469, %v1721
        %v1850 = vmax.f32 %v1472, %v1722
        %v1851 = vmax.f32 %v1477, %v1723
        %v1852 = vmax.f32 %v1480, %v1724
        %v1853 = vmax.f32 %v1485, %v1725
        %v1854 = vmax.f32 %v1488, %v1726
        %v1855 = vmax.f32 %v1493, %v1727
        %v1856 = vmax.f32 %v1496, %v1728
        %v1857 = vmax.f32 %v1501, %v1729
        %v1858 = vmax.f32 %v1504, %v1730
        %v1859 = vmax.f32 %v1509, %v1731
        %v1860 = vmax.f32 %v1512, %v1732
        %v1861 = vmax.f32 %v1517, %v1733
        %v1862 = vmax.f32 %v1520, %v1734
        %v1863 = vmax.f32 %v1525, %v1735
        %v1864 = vmax.f32 %v1528, %v1736
        %v1865 = vmax.f32 %v1533, %v1737
        %v1866 = vmax.f32 %v1536, %v1738
        %v1867 = vmax.f32 %v1541, %v1739
        %v1868 = vmax.f32 %v1544, %v1740
        %v1869 = vmax.f32 %v1549, %v1741
        %v1870 = vmax.f32 %v1552, %v1742
        %v1871 = vmax.f32 %v1557, %v1743
        %v1872 = vmax.f32 %v1560, %v1744
        %v1873 = vmax.f32 %v1565, %v1745
        %v1874 = vmax.f32 %v1568, %v1746
        %v1875 = vmax.f32 %v1573, %v1747
        %v1876 = vmax.f32 %v1576, %v1748
        %v1877 = vmax.f32 %v1581, %v1749
        %v1878 = vmax.f32 %v1584, %v1750
        %v1879 = vmax.f32 %v1589, %v1751
        %v1880 = vmax.f32 %v1592, %v1752
        %v1881 = vmax.f32 %v1597, %v1753
        %v1882 = vmax.f32 %v1600, %v1754
        %v1883 = vmax.f32 %v1605, %v1755
        %v1884 = vmax.f32 %v1608, %v1756
        %v1885 = vmax.f32 %v1613, %v1757
        %v1886 = vmax.f32 %v1616, %v1758
        %v1887 = vmax.f32 %v1621, %v1759
        %v1888 = vmax.f32 %v1624, %v1760
        %v1889 = vmax.f32 %v1629, %v1761
        %v1890 = vmax.f32 %v1632, %v1762
        %v1891 = vpack.c.bf16 %v1764, %v1763
        %v1892 = vpack.c.bf16 %v1766, %v1765
        %v1893 = vpack.c.bf16 %v1768, %v1767
        %v1894 = vpack.c.bf16 %v1770, %v1769
        %v1895 = vpack.c.bf16 %v1772, %v1771
        %v1896 = vpack.c.bf16 %v1774, %v1773
        %v1897 = vpack.c.bf16 %v1776, %v1775
        %v1898 = vpack.c.bf16 %v1778, %v1777
        %v1899 = vpack.c.bf16 %v1780, %v1779
        %v1900 = vpack.c.bf16 %v1782, %v1781
        %v1901 = vpack.c.bf16 %v1784, %v1783
        %v1902 = vpack.c.bf16 %v1786, %v1785
        %v1903 = vpack.c.bf16 %v1788, %v1787
        %v1904 = vpack.c.bf16 %v1790, %v1789
        %v1905 = vpack.c.bf16 %v1792, %v1791
        %v1906 = vpack.c.bf16 %v1794, %v1793
        %v1907 = vpack.c.bf16 %v1796, %v1795
        %v1908 = vpack.c.bf16 %v1798, %v1797
        %v1909 = vpack.c.bf16 %v1800, %v1799
        %v1910 = vpack.c.bf16 %v1802, %v1801
        %v1911 = vpack.c.bf16 %v1804, %v1803
        %v1912 = vpack.c.bf16 %v1806, %v1805
        %v1913 = vpack.c.bf16 %v1808, %v1807
        %v1914 = vpack.c.bf16 %v1810, %v1809
        %v1915 = vpack.c.bf16 %v1812, %v1811
        %v1916 = vpack.c.bf16 %v1814, %v1813
        %v1917 = vpack.c.bf16 %v1816, %v1815
        %v1918 = vpack.c.bf16 %v1818, %v1817
        %v1919 = vpack.c.bf16 %v1820, %v1819
        %v1920 = vpack.c.bf16 %v1822, %v1821
        %v1921 = vpack.c.bf16 %v1824, %v1823
        %v1922 = vpack.c.bf16 %v1826, %v1825
        %v1923 = vpack.c.bf16 %v1828, %v1827
        %v1924 = vpack.c.bf16 %v1830, %v1829
        %v1925 = vpack.c.bf16 %v1832, %v1831
        %v1926 = vpack.c.bf16 %v1834, %v1833
        %v1927 = vpack.c.bf16 %v1836, %v1835
        %v1928 = vpack.c.bf16 %v1838, %v1837
        %v1929 = vpack.c.bf16 %v1840, %v1839
        %v1930 = vpack.c.bf16 %v1842, %v1841
        %v1931 = vpack.c.bf16 %v1844, %v1843
        %v1932 = vpack.c.bf16 %v1846, %v1845
        %v1933 = vpack.c.bf16 %v1848, %v1847
        %v1934 = vpack.c.bf16 %v1850, %v1849
        %v1935 = vpack.c.bf16 %v1852, %v1851
        %v1936 = vpack.c.bf16 %v1854, %v1853
        %v1937 = vpack.c.bf16 %v1856, %v1855
        %v1938 = vpack.c.bf16 %v1858, %v1857
        %v1939 = vpack.c.bf16 %v1860, %v1859
        %v1940 = vpack.c.bf16 %v1862, %v1861
        %v1941 = vpack.c.bf16 %v1864, %v1863
        %v1942 = vpack.c.bf16 %v1866, %v1865
        %v1943 = vpack.c.bf16 %v1868, %v1867
        %v1944 = vpack.c.bf16 %v1870, %v1869
        %v1945 = vpack.c.bf16 %v1872, %v1871
        %v1946 = vpack.c.bf16 %v1874, %v1873
        %v1947 = vpack.c.bf16 %v1876, %v1875
        %v1948 = vpack.c.bf16 %v1878, %v1877
        %v1949 = vpack.c.bf16 %v1880, %v1879
        %v1950 = vpack.c.bf16 %v1882, %v1881
        %v1951 = vpack.c.bf16 %v1884, %v1883
        %v1952 = vpack.c.bf16 %v1886, %v1885
        %v1953 = vpack.c.bf16 %v1888, %v1887
        %v1954 = vpack.c.bf16 %v1890, %v1889
        %v1955 = vld [vmem:[%s4] sm:$0xf]
        %v1956 = vld [vmem:[%s4 + $0x4] sm:$0xf]
        %v1957 = vld [vmem:[%s4 + $0x8] sm:$0xf]
        %v1958 = vld [vmem:[%s4 + $0xc] sm:$0xf]
        %v1959 = vld [vmem:[%s4 + $0x10] sm:$0xf]
        %v1960 = vld [vmem:[%s4 + $0x14] sm:$0xf]
        %v1961 = vld [vmem:[%s4 + $0x18] sm:$0xf]
        %v1962 = vld [vmem:[%s4 + $0x1c] sm:$0xf]
        %v1963 = vld [vmem:[%s5] sm:$0x1]
        %v1965 = vlaneseq
        %v1966 = vshrl.u32 %v1965, 7
        %v1967 = vsub.s32 0, %v1966
        %v1968 = vrot.slane %v1963, %v1967
        %v1978 = vunpack.c.l.b16 %v1955
        %v1979 = vunpack.c.l.b16 %v1956
        %v1980 = vunpack.c.l.b16 %v1957
        %v1981 = vunpack.c.l.b16 %v1958
        %v1982 = vunpack.c.l.b16 %v1959
        %v1983 = vunpack.c.l.b16 %v1960
        %v1984 = vunpack.c.l.b16 %v1961
        %v1985 = vunpack.c.l.b16 %v1962
        %v1986 = vpack.c.b16 %v1979, %v1978
        %v1987 = vpack.c.b16 %v1981, %v1980
        %v1988 = vpack.c.b16 %v1983, %v1982
        %v1989 = vpack.c.b16 %v1985, %v1984
        %vm1994 = vcmask 523264
        %v1996 = vsel %vm1994, %v1891, 0
        %v1999 = vsel %vm1994, %v1892, 0
        %v2002 = vsel %vm1994, %v1893, 0
        %v2005 = vsel %vm1994, %v1894, 0
        %v2008 = vsel %vm1994, %v1895, 0
        %v2011 = vsel %vm1994, %v1896, 0
        %v2014 = vsel %vm1994, %v1897, 0
        %v2017 = vsel %vm1994, %v1898, 0
        %v2020 = vsel %vm1994, %v1899, 0
        %v2023 = vsel %vm1994, %v1900, 0
        %v2026 = vsel %vm1994, %v1901, 0
        %v2029 = vsel %vm1994, %v1902, 0
        %v2032 = vsel %vm1994, %v1903, 0
        %v2035 = vsel %vm1994, %v1904, 0
        %v2038 = vsel %vm1994, %v1905, 0
        %v2041 = vsel %vm1994, %v1906, 0
        %v2044 = vsel %vm1994, %v1907, 0
        %v2047 = vsel %vm1994, %v1908, 0
        %v2050 = vsel %vm1994, %v1909, 0
        %v2053 = vsel %vm1994, %v1910, 0
        %v2056 = vsel %vm1994, %v1911, 0
        %v2059 = vsel %vm1994, %v1912, 0
        %v2062 = vsel %vm1994, %v1913, 0
        %v2065 = vsel %vm1994, %v1914, 0
        %v2068 = vsel %vm1994, %v1915, 0
        %v2071 = vsel %vm1994, %v1916, 0
        %v2074 = vsel %vm1994, %v1917, 0
        %v2077 = vsel %vm1994, %v1918, 0
        %v2080 = vsel %vm1994, %v1919, 0
        %v2083 = vsel %vm1994, %v1920, 0
        %v2086 = vsel %vm1994, %v1921, 0
        %v2089 = vsel %vm1994, %v1922, 0
        %v2092 = vsel %vm1994, %v1923, 0
        %v2095 = vsel %vm1994, %v1924, 0
        %v2098 = vsel %vm1994, %v1925, 0
        %v2101 = vsel %vm1994, %v1926, 0
        %v2104 = vsel %vm1994, %v1927, 0
        %v2107 = vsel %vm1994, %v1928, 0
        %v2110 = vsel %vm1994, %v1929, 0
        %v2113 = vsel %vm1994, %v1930, 0
        %v2116 = vsel %vm1994, %v1931, 0
        %v2119 = vsel %vm1994, %v1932, 0
        %v2122 = vsel %vm1994, %v1933, 0
        %v2125 = vsel %vm1994, %v1934, 0
        %v2128 = vsel %vm1994, %v1935, 0
        %v2131 = vsel %vm1994, %v1936, 0
        %v2134 = vsel %vm1994, %v1937, 0
        %v2137 = vsel %vm1994, %v1938, 0
        %v2140 = vsel %vm1994, %v1939, 0
        %v2143 = vsel %vm1994, %v1940, 0
        %v2146 = vsel %vm1994, %v1941, 0
        %v2149 = vsel %vm1994, %v1942, 0
        %v2152 = vsel %vm1994, %v1943, 0
        %v2155 = vsel %vm1994, %v1944, 0
        %v2158 = vsel %vm1994, %v1945, 0
        %v2161 = vsel %vm1994, %v1946, 0
        %v2164 = vsel %vm1994, %v1947, 0
        %v2167 = vsel %vm1994, %v1948, 0
        %v2170 = vsel %vm1994, %v1949, 0
        %v2173 = vsel %vm1994, %v1950, 0
        %v2176 = vsel %vm1994, %v1951, 0
        %v2179 = vsel %vm1994, %v1952, 0
        %v2182 = vsel %vm1994, %v1953, 0
        %v2185 = vsel %vm1994, %v1954, 0
        %2187 = vmatprep.subr.bf16.mxu0 0
        %2188 = vmatpush1.bf16.msra.mxu0 %v1986
        %2189 = vmatprep.subr.bf16.mxu0 0
        %2190 = vmatpush1.bf16.msra.mxu0 %v1987
        %2191 = vmatprep.subr.bf16.mxu0 0
        %2192 = vmatpush1.bf16.msra.mxu0 %v1988
        %2193 = vmatprep.subr.bf16.mxu0 0
        %2194 = vmatpush1.bf16.msra.mxu0 %v1989
        %2195 = vmatprep.subr.bf16.mxu0 0
        %2196 = vmatpush1.bf16.msra.mxu0 0
        %2197 = vmatprep.subr.bf16.mxu0 0
        %2198 = vmatpush1.bf16.msra.mxu0 0
        %2199 = vmatprep.subr.bf16.mxu0 0
        %2200 = vmatpush1.bf16.msra.mxu0 0
        %2201 = vmatprep.subr.bf16.mxu0 0
        %2202 = vmatpush1.bf16.msra.mxu0 0
        %2203 = vmatprep.subr.bf16.mxu0 0
        %2204 = vmatpush1.bf16.msra.mxu0 0
        %2205 = vmatprep.subr.bf16.mxu0 0
        %2206 = vmatpush1.bf16.msra.mxu0 0
        %2207 = vmatprep.subr.bf16.mxu0 0
        %2208 = vmatpush1.bf16.msra.mxu0 0
        %2209 = vmatprep.subr.bf16.mxu0 0
        %2210 = vmatpush1.bf16.msra.mxu0 0
        %2211 = vmatprep.subr.bf16.mxu0 0
        %2212 = vmatpush1.bf16.msra.mxu0 0
        %2213 = vmatprep.subr.bf16.mxu0 0
        %2214 = vmatpush1.bf16.msra.mxu0 0
        %2215 = vmatprep.subr.bf16.mxu0 0
        %2216 = vmatpush1.bf16.msra.mxu0 0
        %2217 = vmatprep.subr.bf16.mxu0 0
        %2218 = vmatpush1.bf16.msra.mxu0 0
        %2219 = vmatprep.mubr.bf16.mxu0 0
        %2220 = vmatmul.mubr.bf16.gmra.mrb[0].mxu0 %v1996
        %v2221 = vpop.f32.mrb[0].mxu0
        %v2222 = vadd.f32 %v1968, %v2221
        %v2223 = vpop.f32.mrb[0].mxu0
        %v2224 = vpop.f32.mrb[0].mxu0
        %v2225 = vadd.f32 %v1968, %v2224
        %v2226 = vpop.f32.mrb[0].mxu0
        %2227 = vmatprep.mubr.bf16.mxu0 0
        %2228 = vmatmul.mubr.bf16.gmra.mrb[0].mxu0 %v1999
        %v2229 = vpop.f32.mrb[0].mxu0
        %v2230 = vadd.f32 %v1968, %v2229
        %v2231 = vpop.f32.mrb[0].mxu0
        %v2232 = vpop.f32.mrb[0].mxu0
        %v2233 = vadd.f32 %v1968, %v2232
        %v2234 = vpop.f32.mrb[0].mxu0
        %2235 = vmatprep.mubr.bf16.mxu0 0
        %2236 = vmatmul.mubr.bf16.gmra.mrb[0].mxu0 %v2002
        %v2237 = vpop.f32.mrb[0].mxu0
        %v2238 = vadd.f32 %v1968, %v2237
        %v2239 = vpop.f32.mrb[0].mxu0
        %v2240 = vpop.f32.mrb[0].mxu0
        %v2241 = vadd.f32 %v1968, %v2240
        %v2242 = vpop.f32.mrb[0].mxu0
        %2243 = vmatprep.mubr.bf16.mxu0 0
        %2244 = vmatmul.mubr.bf16.gmra.mrb[0].mxu0 %v2005
        %v2245 = vpop.f32.mrb[0].mxu0
        %v2246 = vadd.f32 %v1968, %v2245
        %v2247 = vpop.f32.mrb[0].mxu0
        %v2248 = vpop.f32.mrb[0].mxu0
        %v2249 = vadd.f32 %v1968, %v2248
        %v2250 = vpop.f32.mrb[0].mxu0
        %2251 = vmatprep.mubr.bf16.mxu0 0
        %2252 = vmatmul.mubr.bf16.gmra.mrb[0].mxu0 %v2008
        %v2253 = vpop.f32.mrb[0].mxu0
        %v2254 = vadd.f32 %v1968, %v2253
        %v2255 = vpop.f32.mrb[0].mxu0
        %v2256 = vpop.f32.mrb[0].mxu0
        %v2257 = vadd.f32 %v1968, %v2256
        %v2258 = vpop.f32.mrb[0].mxu0
        %2259 = vmatprep.mubr.bf16.mxu0 0
        %2260 = vmatmul.mubr.bf16.gmra.mrb[0].mxu0 %v2011
        %v2261 = vpop.f32.mrb[0].mxu0
        %v2262 = vadd.f32 %v1968, %v2261
        %v2263 = vpop.f32.mrb[0].mxu0
        %v2264 = vpop.f32.mrb[0].mxu0
        %v2265 = vadd.f32 %v1968, %v2264
        %v2266 = vpop.f32.mrb[0].mxu0
        %2267 = vmatprep.mubr.bf16.mxu0 0
        %2268 = vmatmul.mubr.bf16.gmra.mrb[0].mxu0 %v2014
        %v2269 = vpop.f32.mrb[0].mxu0
        %v2270 = vadd.f32 %v1968, %v2269
        %v2271 = vpop.f32.mrb[0].mxu0
        %v2272 = vpop.f32.mrb[0].mxu0
        %v2273 = vadd.f32 %v1968, %v2272
        %v2274 = vpop.f32.mrb[0].mxu0
        %2275 = vmatprep.mubr.bf16.mxu0 0
        %2276 = vmatmul.mubr.bf16.gmra.mrb[0].mxu0 %v2017
        %v2277 = vpop.f32.mrb[0].mxu0
        %v2278 = vadd.f32 %v1968, %v2277
        %v2279 = vpop.f32.mrb[0].mxu0
        %v2280 = vpop.f32.mrb[0].mxu0
        %v2281 = vadd.f32 %v1968, %v2280
        %v2282 = vpop.f32.mrb[0].mxu0
        %2283 = vmatprep.mubr.bf16.mxu0 0
        %2284 = vmatmul.mubr.bf16.gmra.mrb[0].mxu0 %v2020
        %v2285 = vpop.f32.mrb[0].mxu0
        %v2286 = vadd.f32 %v1968, %v2285
        %v2287 = vpop.f32.mrb[0].mxu0
        %v2288 = vpop.f32.mrb[0].mxu0
        %v2289 = vadd.f32 %v1968, %v2288
        %v2290 = vpop.f32.mrb[0].mxu0
        %2291 = vmatprep.mubr.bf16.mxu0 0
        %2292 = vmatmul.mubr.bf16.gmra.mrb[0].mxu0 %v2023
        %v2293 = vpop.f32.mrb[0].mxu0
        %v2294 = vadd.f32 %v1968, %v2293
        %v2295 = vpop.f32.mrb[0].mxu0
        %v2296 = vpop.f32.mrb[0].mxu0
        %v2297 = vadd.f32 %v1968, %v2296
        %v2298 = vpop.f32.mrb[0].mxu0
        %2299 = vmatprep.mubr.bf16.mxu0 0
        %2300 = vmatmul.mubr.bf16.gmra.mrb[0].mxu0 %v2026
        %v2301 = vpop.f32.mrb[0].mxu0
        %v2302 = vadd.f32 %v1968, %v2301
        %v2303 = vpop.f32.mrb[0].mxu0
        %v2304 = vpop.f32.mrb[0].mxu0
        %v2305 = vadd.f32 %v1968, %v2304
        %v2306 = vpop.f32.mrb[0].mxu0
        %2307 = vmatprep.mubr.bf16.mxu0 0
        %2308 = vmatmul.mubr.bf16.gmra.mrb[0].mxu0 %v2029
        %v2309 = vpop.f32.mrb[0].mxu0
        %v2310 = vadd.f32 %v1968, %v2309
        %v2311 = vpop.f32.mrb[0].mxu0
        %v2312 = vpop.f32.mrb[0].mxu0
        %v2313 = vadd.f32 %v1968, %v2312
        %v2314 = vpop.f32.mrb[0].mxu0
        %2315 = vmatprep.mubr.bf16.mxu0 0
        %2316 = vmatmul.mubr.bf16.gmra.mrb[0].mxu0 %v2032
        %v2317 = vpop.f32.mrb[0].mxu0
        %v2318 = vadd.f32 %v1968, %v2317
        %v2319 = vpop.f32.mrb[0].mxu0
        %v2320 = vpop.f32.mrb[0].mxu0
        %v2321 = vadd.f32 %v1968, %v2320
        %v2322 = vpop.f32.mrb[0].mxu0
        %2323 = vmatprep.mubr.bf16.mxu0 0
        %2324 = vmatmul.mubr.bf16.gmra.mrb[0].mxu0 %v2035
        %v2325 = vpop.f32.mrb[0].mxu0
        %v2326 = vadd.f32 %v1968, %v2325
        %v2327 = vpop.f32.mrb[0].mxu0
        %v2328 = vpop.f32.mrb[0].mxu0
        %v2329 = vadd.f32 %v1968, %v2328
        %v2330 = vpop.f32.mrb[0].mxu0
        %2331 = vmatprep.mubr.bf16.mxu0 0
        %2332 = vmatmul.mubr.bf16.gmra.mrb[0].mxu0 %v2038
        %v2333 = vpop.f32.mrb[0].mxu0
        %v2334 = vadd.f32 %v1968, %v2333
        %v2335 = vpop.f32.mrb[0].mxu0
        %v2336 = vpop.f32.mrb[0].mxu0
        %v2337 = vadd.f32 %v1968, %v2336
        %v2338 = vpop.f32.mrb[0].mxu0
        %2339 = vmatprep.mubr.bf16.mxu0 0
        %2340 = vmatmul.mubr.bf16.gmra.mrb[0].mxu0 %v2041
        %v2341 = vpop.f32.mrb[0].mxu0
        %v2342 = vadd.f32 %v1968, %v2341
        %v2343 = vpop.f32.mrb[0].mxu0
        %v2344 = vpop.f32.mrb[0].mxu0
        %v2345 = vadd.f32 %v1968, %v2344
        %v2346 = vpop.f32.mrb[0].mxu0
        %2347 = vmatprep.mubr.bf16.mxu0 0
        %2348 = vmatmul.mubr.bf16.gmra.mrb[0].mxu0 %v2044
        %v2349 = vpop.f32.mrb[0].mxu0
        %v2350 = vadd.f32 %v1968, %v2349
        %v2351 = vpop.f32.mrb[0].mxu0
        %v2352 = vpop.f32.mrb[0].mxu0
        %v2353 = vadd.f32 %v1968, %v2352
        %v2354 = vpop.f32.mrb[0].mxu0
        %2355 = vmatprep.mubr.bf16.mxu0 0
        %2356 = vmatmul.mubr.bf16.gmra.mrb[0].mxu0 %v2047
        %v2357 = vpop.f32.mrb[0].mxu0
        %v2358 = vadd.f32 %v1968, %v2357
        %v2359 = vpop.f32.mrb[0].mxu0
        %v2360 = vpop.f32.mrb[0].mxu0
        %v2361 = vadd.f32 %v1968, %v2360
        %v2362 = vpop.f32.mrb[0].mxu0
        %2363 = vmatprep.mubr.bf16.mxu0 0
        %2364 = vmatmul.mubr.bf16.gmra.mrb[0].mxu0 %v2050
        %v2365 = vpop.f32.mrb[0].mxu0
        %v2366 = vadd.f32 %v1968, %v2365
        %v2367 = vpop.f32.mrb[0].mxu0
        %v2368 = vpop.f32.mrb[0].mxu0
        %v2369 = vadd.f32 %v1968, %v2368
        %v2370 = vpop.f32.mrb[0].mxu0
        %2371 = vmatprep.mubr.bf16.mxu0 0
        %2372 = vmatmul.mubr.bf16.gmra.mrb[0].mxu0 %v2053
        %v2373 = vpop.f32.mrb[0].mxu0
        %v2374 = vadd.f32 %v1968, %v2373
        %v2375 = vpop.f32.mrb[0].mxu0
        %v2376 = vpop.f32.mrb[0].mxu0
        %v2377 = vadd.f32 %v1968, %v2376
        %v2378 = vpop.f32.mrb[0].mxu0
        %2379 = vmatprep.mubr.bf16.mxu0 0
        %2380 = vmatmul.mubr.bf16.gmra.mrb[0].mxu0 %v2056
        %v2381 = vpop.f32.mrb[0].mxu0
        %v2382 = vadd.f32 %v1968, %v2381
        %v2383 = vpop.f32.mrb[0].mxu0
        %v2384 = vpop.f32.mrb[0].mxu0
        %v2385 = vadd.f32 %v1968, %v2384
        %v2386 = vpop.f32.mrb[0].mxu0
        %2387 = vmatprep.mubr.bf16.mxu0 0
        %2388 = vmatmul.mubr.bf16.gmra.mrb[0].mxu0 %v2059
        %v2389 = vpop.f32.mrb[0].mxu0
        %v2390 = vadd.f32 %v1968, %v2389
        %v2391 = vpop.f32.mrb[0].mxu0
        %v2392 = vpop.f32.mrb[0].mxu0
        %v2393 = vadd.f32 %v1968, %v2392
        %v2394 = vpop.f32.mrb[0].mxu0
        %2395 = vmatprep.mubr.bf16.mxu0 0
        %2396 = vmatmul.mubr.bf16.gmra.mrb[0].mxu0 %v2062
        %v2397 = vpop.f32.mrb[0].mxu0
        %v2398 = vadd.f32 %v1968, %v2397
        %v2399 = vpop.f32.mrb[0].mxu0
        %v2400 = vpop.f32.mrb[0].mxu0
        %v2401 = vadd.f32 %v1968, %v2400
        %v2402 = vpop.f32.mrb[0].mxu0
        %2403 = vmatprep.mubr.bf16.mxu0 0
        %2404 = vmatmul.mubr.bf16.gmra.mrb[0].mxu0 %v2065
        %v2405 = vpop.f32.mrb[0].mxu0
        %v2406 = vadd.f32 %v1968, %v2405
        %v2407 = vpop.f32.mrb[0].mxu0
        %v2408 = vpop.f32.mrb[0].mxu0
        %v2409 = vadd.f32 %v1968, %v2408
        %v2410 = vpop.f32.mrb[0].mxu0
        %2411 = vmatprep.mubr.bf16.mxu0 0
        %2412 = vmatmul.mubr.bf16.gmra.mrb[0].mxu0 %v2068
        %v2413 = vpop.f32.mrb[0].mxu0
        %v2414 = vadd.f32 %v1968, %v2413
        %v2415 = vpop.f32.mrb[0].mxu0
        %v2416 = vpop.f32.mrb[0].mxu0
        %v2417 = vadd.f32 %v1968, %v2416
        %v2418 = vpop.f32.mrb[0].mxu0
        %2419 = vmatprep.mubr.bf16.mxu0 0
        %2420 = vmatmul.mubr.bf16.gmra.mrb[0].mxu0 %v2071
        %v2421 = vpop.f32.mrb[0].mxu0
        %v2422 = vadd.f32 %v1968, %v2421
        %v2423 = vpop.f32.mrb[0].mxu0
        %v2424 = vpop.f32.mrb[0].mxu0
        %v2425 = vadd.f32 %v1968, %v2424
        %v2426 = vpop.f32.mrb[0].mxu0
        %2427 = vmatprep.mubr.bf16.mxu0 0
        %2428 = vmatmul.mubr.bf16.gmra.mrb[0].mxu0 %v2074
        %v2429 = vpop.f32.mrb[0].mxu0
        %v2430 = vadd.f32 %v1968, %v2429
        %v2431 = vpop.f32.mrb[0].mxu0
        %v2432 = vpop.f32.mrb[0].mxu0
        %v2433 = vadd.f32 %v1968, %v2432
        %v2434 = vpop.f32.mrb[0].mxu0
        %2435 = vmatprep.mubr.bf16.mxu0 0
        %2436 = vmatmul.mubr.bf16.gmra.mrb[0].mxu0 %v2077
        %v2437 = vpop.f32.mrb[0].mxu0
        %v2438 = vadd.f32 %v1968, %v2437
        %v2439 = vpop.f32.mrb[0].mxu0
        %v2440 = vpop.f32.mrb[0].mxu0
        %v2441 = vadd.f32 %v1968, %v2440
        %v2442 = vpop.f32.mrb[0].mxu0
        %2443 = vmatprep.mubr.bf16.mxu0 0
        %2444 = vmatmul.mubr.bf16.gmra.mrb[0].mxu0 %v2080
        %v2445 = vpop.f32.mrb[0].mxu0
        %v2446 = vadd.f32 %v1968, %v2445
        %v2447 = vpop.f32.mrb[0].mxu0
        %v2448 = vpop.f32.mrb[0].mxu0
        %v2449 = vadd.f32 %v1968, %v2448
        %v2450 = vpop.f32.mrb[0].mxu0
        %2451 = vmatprep.mubr.bf16.mxu0 0
        %2452 = vmatmul.mubr.bf16.gmra.mrb[0].mxu0 %v2083
        %v2453 = vpop.f32.mrb[0].mxu0
        %v2454 = vadd.f32 %v1968, %v2453
        %v2455 = vpop.f32.mrb[0].mxu0
        %v2456 = vpop.f32.mrb[0].mxu0
        %v2457 = vadd.f32 %v1968, %v2456
        %v2458 = vpop.f32.mrb[0].mxu0
        %2459 = vmatprep.mubr.bf16.mxu0 0
        %2460 = vmatmul.mubr.bf16.gmra.mrb[0].mxu0 %v2086
        %v2461 = vpop.f32.mrb[0].mxu0
        %v2462 = vadd.f32 %v1968, %v2461
        %v2463 = vpop.f32.mrb[0].mxu0
        %v2464 = vpop.f32.mrb[0].mxu0
        %v2465 = vadd.f32 %v1968, %v2464
        %v2466 = vpop.f32.mrb[0].mxu0
        %2467 = vmatprep.mubr.bf16.mxu0 0
        %2468 = vmatmul.mubr.bf16.gmra.mrb[0].mxu0 %v2089
        %v2469 = vpop.f32.mrb[0].mxu0
        %v2470 = vadd.f32 %v1968, %v2469
        %v2471 = vpop.f32.mrb[0].mxu0
        %v2472 = vpop.f32.mrb[0].mxu0
        %v2473 = vadd.f32 %v1968, %v2472
        %v2474 = vpop.f32.mrb[0].mxu0
        %2475 = vmatprep.mubr.bf16.mxu0 0
        %2476 = vmatmul.mubr.bf16.gmra.mrb[0].mxu0 %v2092
        %v2477 = vpop.f32.mrb[0].mxu0
        %v2478 = vadd.f32 %v1968, %v2477
        %v2479 = vpop.f32.mrb[0].mxu0
        %v2480 = vpop.f32.mrb[0].mxu0
        %v2481 = vadd.f32 %v1968, %v2480
        %v2482 = vpop.f32.mrb[0].mxu0
        %2483 = vmatprep.mubr.bf16.mxu0 0
        %2484 = vmatmul.mubr.bf16.gmra.mrb[0].mxu0 %v2095
        %v2485 = vpop.f32.mrb[0].mxu0
        %v2486 = vadd.f32 %v1968, %v2485
        %v2487 = vpop.f32.mrb[0].mxu0
        %v2488 = vpop.f32.mrb[0].mxu0
        %v2489 = vadd.f32 %v1968, %v2488
        %v2490 = vpop.f32.mrb[0].mxu0
        %2491 = vmatprep.mubr.bf16.mxu0 0
        %2492 = vmatmul.mubr.bf16.gmra.mrb[0].mxu0 %v2098
        %v2493 = vpop.f32.mrb[0].mxu0
        %v2494 = vadd.f32 %v1968, %v2493
        %v2495 = vpop.f32.mrb[0].mxu0
        %v2496 = vpop.f32.mrb[0].mxu0
        %v2497 = vadd.f32 %v1968, %v2496
        %v2498 = vpop.f32.mrb[0].mxu0
        %2499 = vmatprep.mubr.bf16.mxu0 0
        %2500 = vmatmul.mubr.bf16.gmra.mrb[0].mxu0 %v2101
        %v2501 = vpop.f32.mrb[0].mxu0
        %v2502 = vadd.f32 %v1968, %v2501
        %v2503 = vpop.f32.mrb[0].mxu0
        %v2504 = vpop.f32.mrb[0].mxu0
        %v2505 = vadd.f32 %v1968, %v2504
        %v2506 = vpop.f32.mrb[0].mxu0
        %2507 = vmatprep.mubr.bf16.mxu0 0
        %2508 = vmatmul.mubr.bf16.gmra.mrb[0].mxu0 %v2104
        %v2509 = vpop.f32.mrb[0].mxu0
        %v2510 = vadd.f32 %v1968, %v2509
        %v2511 = vpop.f32.mrb[0].mxu0
        %v2512 = vpop.f32.mrb[0].mxu0
        %v2513 = vadd.f32 %v1968, %v2512
        %v2514 = vpop.f32.mrb[0].mxu0
        %2515 = vmatprep.mubr.bf16.mxu0 0
        %2516 = vmatmul.mubr.bf16.gmra.mrb[0].mxu0 %v2107
        %v2517 = vpop.f32.mrb[0].mxu0
        %v2518 = vadd.f32 %v1968, %v2517
        %v2519 = vpop.f32.mrb[0].mxu0
        %v2520 = vpop.f32.mrb[0].mxu0
        %v2521 = vadd.f32 %v1968, %v2520
        %v2522 = vpop.f32.mrb[0].mxu0
        %2523 = vmatprep.mubr.bf16.mxu0 0
        %2524 = vmatmul.mubr.bf16.gmra.mrb[0].mxu0 %v2110
        %v2525 = vpop.f32.mrb[0].mxu0
        %v2526 = vadd.f32 %v1968, %v2525
        %v2527 = vpop.f32.mrb[0].mxu0
        %v2528 = vpop.f32.mrb[0].mxu0
        %v2529 = vadd.f32 %v1968, %v2528
        %v2530 = vpop.f32.mrb[0].mxu0
        %2531 = vmatprep.mubr.bf16.mxu0 0
        %2532 = vmatmul.mubr.bf16.gmra.mrb[0].mxu0 %v2113
        %v2533 = vpop.f32.mrb[0].mxu0
        %v2534 = vadd.f32 %v1968, %v2533
        %v2535 = vpop.f32.mrb[0].mxu0
        %v2536 = vpop.f32.mrb[0].mxu0
        %v2537 = vadd.f32 %v1968, %v2536
        %v2538 = vpop.f32.mrb[0].mxu0
        %2539 = vmatprep.mubr.bf16.mxu0 0
        %2540 = vmatmul.mubr.bf16.gmra.mrb[0].mxu0 %v2116
        %v2541 = vpop.f32.mrb[0].mxu0
        %v2542 = vadd.f32 %v1968, %v2541
        %v2543 = vpop.f32.mrb[0].mxu0
        %v2544 = vpop.f32.mrb[0].mxu0
        %v2545 = vadd.f32 %v1968, %v2544
        %v2546 = vpop.f32.mrb[0].mxu0
        %2547 = vmatprep.mubr.bf16.mxu0 0
        %2548 = vmatmul.mubr.bf16.gmra.mrb[0].mxu0 %v2119
        %v2549 = vpop.f32.mrb[0].mxu0
        %v2550 = vadd.f32 %v1968, %v2549
        %v2551 = vpop.f32.mrb[0].mxu0
        %v2552 = vpop.f32.mrb[0].mxu0
        %v2553 = vadd.f32 %v1968, %v2552
        %v2554 = vpop.f32.mrb[0].mxu0
        %2555 = vmatprep.mubr.bf16.mxu0 0
        %2556 = vmatmul.mubr.bf16.gmra.mrb[0].mxu0 %v2122
        %v2557 = vpop.f32.mrb[0].mxu0
        %v2558 = vadd.f32 %v1968, %v2557
        %v2559 = vpop.f32.mrb[0].mxu0
        %v2560 = vpop.f32.mrb[0].mxu0
        %v2561 = vadd.f32 %v1968, %v2560
        %v2562 = vpop.f32.mrb[0].mxu0
        %2563 = vmatprep.mubr.bf16.mxu0 0
        %2564 = vmatmul.mubr.bf16.gmra.mrb[0].mxu0 %v2125
        %v2565 = vpop.f32.mrb[0].mxu0
        %v2566 = vadd.f32 %v1968, %v2565
        %v2567 = vpop.f32.mrb[0].mxu0
        %v2568 = vpop.f32.mrb[0].mxu0
        %v2569 = vadd.f32 %v1968, %v2568
        %v2570 = vpop.f32.mrb[0].mxu0
        %2571 = vmatprep.mubr.bf16.mxu0 0
        %2572 = vmatmul.mubr.bf16.gmra.mrb[0].mxu0 %v2128
        %v2573 = vpop.f32.mrb[0].mxu0
        %v2574 = vadd.f32 %v1968, %v2573
        %v2575 = vpop.f32.mrb[0].mxu0
        %v2576 = vpop.f32.mrb[0].mxu0
        %v2577 = vadd.f32 %v1968, %v2576
        %v2578 = vpop.f32.mrb[0].mxu0
        %2579 = vmatprep.mubr.bf16.mxu0 0
        %2580 = vmatmul.mubr.bf16.gmra.mrb[0].mxu0 %v2131
        %v2581 = vpop.f32.mrb[0].mxu0
        %v2582 = vadd.f32 %v1968, %v2581
        %v2583 = vpop.f32.mrb[0].mxu0
        %v2584 = vpop.f32.mrb[0].mxu0
        %v2585 = vadd.f32 %v1968, %v2584
        %v2586 = vpop.f32.mrb[0].mxu0
        %2587 = vmatprep.mubr.bf16.mxu0 0
        %2588 = vmatmul.mubr.bf16.gmra.mrb[0].mxu0 %v2134
        %v2589 = vpop.f32.mrb[0].mxu0
        %v2590 = vadd.f32 %v1968, %v2589
        %v2591 = vpop.f32.mrb[0].mxu0
        %v2592 = vpop.f32.mrb[0].mxu0
        %v2593 = vadd.f32 %v1968, %v2592
        %v2594 = vpop.f32.mrb[0].mxu0
        %2595 = vmatprep.mubr.bf16.mxu0 0
        %2596 = vmatmul.mubr.bf16.gmra.mrb[0].mxu0 %v2137
        %v2597 = vpop.f32.mrb[0].mxu0
        %v2598 = vadd.f32 %v1968, %v2597
        %v2599 = vpop.f32.mrb[0].mxu0
        %v2600 = vpop.f32.mrb[0].mxu0
        %v2601 = vadd.f32 %v1968, %v2600
        %v2602 = vpop.f32.mrb[0].mxu0
        %2603 = vmatprep.mubr.bf16.mxu0 0
        %2604 = vmatmul.mubr.bf16.gmra.mrb[0].mxu0 %v2140
        %v2605 = vpop.f32.mrb[0].mxu0
        %v2606 = vadd.f32 %v1968, %v2605
        %v2607 = vpop.f32.mrb[0].mxu0
        %v2608 = vpop.f32.mrb[0].mxu0
        %v2609 = vadd.f32 %v1968, %v2608
        %v2610 = vpop.f32.mrb[0].mxu0
        %2611 = vmatprep.mubr.bf16.mxu0 0
        %2612 = vmatmul.mubr.bf16.gmra.mrb[0].mxu0 %v2143
        %v2613 = vpop.f32.mrb[0].mxu0
        %v2614 = vadd.f32 %v1968, %v2613
        %v2615 = vpop.f32.mrb[0].mxu0
        %v2616 = vpop.f32.mrb[0].mxu0
        %v2617 = vadd.f32 %v1968, %v2616
        %v2618 = vpop.f32.mrb[0].mxu0
        %2619 = vmatprep.mubr.bf16.mxu0 0
        %2620 = vmatmul.mubr.bf16.gmra.mrb[0].mxu0 %v2146
        %v2621 = vpop.f32.mrb[0].mxu0
        %v2622 = vadd.f32 %v1968, %v2621
        %v2623 = vpop.f32.mrb[0].mxu0
        %v2624 = vpop.f32.mrb[0].mxu0
        %v2625 = vadd.f32 %v1968, %v2624
        %v2626 = vpop.f32.mrb[0].mxu0
        %2627 = vmatprep.mubr.bf16.mxu0 0
        %2628 = vmatmul.mubr.bf16.gmra.mrb[0].mxu0 %v2149
        %v2629 = vpop.f32.mrb[0].mxu0
        %v2630 = vadd.f32 %v1968, %v2629
        %v2631 = vpop.f32.mrb[0].mxu0
        %v2632 = vpop.f32.mrb[0].mxu0
        %v2633 = vadd.f32 %v1968, %v2632
        %v2634 = vpop.f32.mrb[0].mxu0
        %2635 = vmatprep.mubr.bf16.mxu0 0
        %2636 = vmatmul.mubr.bf16.gmra.mrb[0].mxu0 %v2152
        %v2637 = vpop.f32.mrb[0].mxu0
        %v2638 = vadd.f32 %v1968, %v2637
        %v2639 = vpop.f32.mrb[0].mxu0
        %v2640 = vpop.f32.mrb[0].mxu0
        %v2641 = vadd.f32 %v1968, %v2640
        %v2642 = vpop.f32.mrb[0].mxu0
        %2643 = vmatprep.mubr.bf16.mxu0 0
        %2644 = vmatmul.mubr.bf16.gmra.mrb[0].mxu0 %v2155
        %v2645 = vpop.f32.mrb[0].mxu0
        %v2646 = vadd.f32 %v1968, %v2645
        %v2647 = vpop.f32.mrb[0].mxu0
        %v2648 = vpop.f32.mrb[0].mxu0
        %v2649 = vadd.f32 %v1968, %v2648
        %v2650 = vpop.f32.mrb[0].mxu0
        %2651 = vmatprep.mubr.bf16.mxu0 0
        %2652 = vmatmul.mubr.bf16.gmra.mrb[0].mxu0 %v2158
        %v2653 = vpop.f32.mrb[0].mxu0
        %v2654 = vadd.f32 %v1968, %v2653
        %v2655 = vpop.f32.mrb[0].mxu0
        %v2656 = vpop.f32.mrb[0].mxu0
        %v2657 = vadd.f32 %v1968, %v2656
        %v2658 = vpop.f32.mrb[0].mxu0
        %2659 = vmatprep.mubr.bf16.mxu0 0
        %2660 = vmatmul.mubr.bf16.gmra.mrb[0].mxu0 %v2161
        %v2661 = vpop.f32.mrb[0].mxu0
        %v2662 = vadd.f32 %v1968, %v2661
        %v2663 = vpop.f32.mrb[0].mxu0
        %v2664 = vpop.f32.mrb[0].mxu0
        %v2665 = vadd.f32 %v1968, %v2664
        %v2666 = vpop.f32.mrb[0].mxu0
        %2667 = vmatprep.mubr.bf16.mxu0 0
        %2668 = vmatmul.mubr.bf16.gmra.mrb[0].mxu0 %v2164
        %v2669 = vpop.f32.mrb[0].mxu0
        %v2670 = vadd.f32 %v1968, %v2669
        %v2671 = vpop.f32.mrb[0].mxu0
        %v2672 = vpop.f32.mrb[0].mxu0
        %v2673 = vadd.f32 %v1968, %v2672
        %v2674 = vpop.f32.mrb[0].mxu0
        %2675 = vmatprep.mubr.bf16.mxu0 0
        %2676 = vmatmul.mubr.bf16.gmra.mrb[0].mxu0 %v2167
        %v2677 = vpop.f32.mrb[0].mxu0
        %v2678 = vadd.f32 %v1968, %v2677
        %v2679 = vpop.f32.mrb[0].mxu0
        %v2680 = vpop.f32.mrb[0].mxu0
        %v2681 = vadd.f32 %v1968, %v2680
        %v2682 = vpop.f32.mrb[0].mxu0
        %2683 = vmatprep.mubr.bf16.mxu0 0
        %2684 = vmatmul.mubr.bf16.gmra.mrb[0].mxu0 %v2170
        %v2685 = vpop.f32.mrb[0].mxu0
        %v2686 = vadd.f32 %v1968, %v2685
        %v2687 = vpop.f32.mrb[0].mxu0
        %v2688 = vpop.f32.mrb[0].mxu0
        %v2689 = vadd.f32 %v1968, %v2688
        %v2690 = vpop.f32.mrb[0].mxu0
        %2691 = vmatprep.mubr.bf16.mxu0 0
        %2692 = vmatmul.mubr.bf16.gmra.mrb[0].mxu0 %v2173
        %v2693 = vpop.f32.mrb[0].mxu0
        %v2694 = vadd.f32 %v1968, %v2693
        %v2695 = vpop.f32.mrb[0].mxu0
        %v2696 = vpop.f32.mrb[0].mxu0
        %v2697 = vadd.f32 %v1968, %v2696
        %v2698 = vpop.f32.mrb[0].mxu0
        %2699 = vmatprep.mubr.bf16.mxu0 0
        %2700 = vmatmul.mubr.bf16.gmra.mrb[0].mxu0 %v2176
        %v2701 = vpop.f32.mrb[0].mxu0
        %v2702 = vadd.f32 %v1968, %v2701
        %v2703 = vpop.f32.mrb[0].mxu0
        %v2704 = vpop.f32.mrb[0].mxu0
        %v2705 = vadd.f32 %v1968, %v2704
        %v2706 = vpop.f32.mrb[0].mxu0
        %2707 = vmatprep.mubr.bf16.mxu0 0
        %2708 = vmatmul.mubr.bf16.gmra.mrb[0].mxu0 %v2179
        %v2709 = vpop.f32.mrb[0].mxu0
        %v2710 = vadd.f32 %v1968, %v2709
        %v2711 = vpop.f32.mrb[0].mxu0
        %v2712 = vpop.f32.mrb[0].mxu0
        %v2713 = vadd.f32 %v1968, %v2712
        %v2714 = vpop.f32.mrb[0].mxu0
        %2715 = vmatprep.mubr.bf16.mxu0 0
        %2716 = vmatmul.mubr.bf16.gmra.mrb[0].mxu0 %v2182
        %v2717 = vpop.f32.mrb[0].mxu0
        %v2718 = vadd.f32 %v1968, %v2717
        %v2719 = vpop.f32.mrb[0].mxu0
        %v2720 = vpop.f32.mrb[0].mxu0
        %v2721 = vadd.f32 %v1968, %v2720
        %v2722 = vpop.f32.mrb[0].mxu0
        %2723 = vmatprep.mubr.bf16.mxu0 0
        %2724 = vmatmul.mubr.bf16.gmra.mrb[0].mxu0 %v2185
        %v2725 = vpop.f32.mrb[0].mxu0
        %v2726 = vadd.f32 %v1968, %v2725
        %v2727 = vpop.f32.mrb[0].mxu0
        %v2728 = vpop.f32.mrb[0].mxu0
        %v2729 = vadd.f32 %v1968, %v2728
        %v2730 = vpop.f32.mrb[0].mxu0
        %2731 = vdwg.mxu0
        %v2732 = vmul.f32 %v2222, 0.01
        %v2733 = vmul.f32 %v2225, 0.01
        %v2734 = vmul.f32 %v2230, 0.01
        %v2735 = vmul.f32 %v2233, 0.01
        %v2736 = vmul.f32 %v2238, 0.01
        %v2737 = vmul.f32 %v2241, 0.01
        %v2738 = vmul.f32 %v2246, 0.01
        %v2739 = vmul.f32 %v2249, 0.01
        %v2740 = vmul.f32 %v2254, 0.01
        %v2741 = vmul.f32 %v2257, 0.01
        %v2742 = vmul.f32 %v2262, 0.01
        %v2743 = vmul.f32 %v2265, 0.01
        %v2744 = vmul.f32 %v2270, 0.01
        %v2745 = vmul.f32 %v2273, 0.01
        %v2746 = vmul.f32 %v2278, 0.01
        %v2747 = vmul.f32 %v2281, 0.01
        %v2748 = vmul.f32 %v2286, 0.01
        %v2749 = vmul.f32 %v2289, 0.01
        %v2750 = vmul.f32 %v2294, 0.01
        %v2751 = vmul.f32 %v2297, 0.01
        %v2752 = vmul.f32 %v2302, 0.01
        %v2753 = vmul.f32 %v2305, 0.01
        %v2754 = vmul.f32 %v2310, 0.01
        %v2755 = vmul.f32 %v2313, 0.01
        %v2756 = vmul.f32 %v2318, 0.01
        %v2757 = vmul.f32 %v2321, 0.01
        %v2758 = vmul.f32 %v2326, 0.01
        %v2759 = vmul.f32 %v2329, 0.01
        %v2760 = vmul.f32 %v2334, 0.01
        %v2761 = vmul.f32 %v2337, 0.01
        %v2762 = vmul.f32 %v2342, 0.01
        %v2763 = vmul.f32 %v2345, 0.01
        %v2764 = vmul.f32 %v2350, 0.01
        %v2765 = vmul.f32 %v2353, 0.01
        %v2766 = vmul.f32 %v2358, 0.01
        %v2767 = vmul.f32 %v2361, 0.01
        %v2768 = vmul.f32 %v2366, 0.01
        %v2769 = vmul.f32 %v2369, 0.01
        %v2770 = vmul.f32 %v2374, 0.01
        %v2771 = vmul.f32 %v2377, 0.01
        %v2772 = vmul.f32 %v2382, 0.01
        %v2773 = vmul.f32 %v2385, 0.01
        %v2774 = vmul.f32 %v2390, 0.01
        %v2775 = vmul.f32 %v2393, 0.01
        %v2776 = vmul.f32 %v2398, 0.01
        %v2777 = vmul.f32 %v2401, 0.01
        %v2778 = vmul.f32 %v2406, 0.01
        %v2779 = vmul.f32 %v2409, 0.01
        %v2780 = vmul.f32 %v2414, 0.01
        %v2781 = vmul.f32 %v2417, 0.01
        %v2782 = vmul.f32 %v2422, 0.01
        %v2783 = vmul.f32 %v2425, 0.01
        %v2784 = vmul.f32 %v2430, 0.01
        %v2785 = vmul.f32 %v2433, 0.01
        %v2786 = vmul.f32 %v2438, 0.01
        %v2787 = vmul.f32 %v2441, 0.01
        %v2788 = vmul.f32 %v2446, 0.01
        %v2789 = vmul.f32 %v2449, 0.01
        %v2790 = vmul.f32 %v2454, 0.01
        %v2791 = vmul.f32 %v2457, 0.01
        %v2792 = vmul.f32 %v2462, 0.01
        %v2793 = vmul.f32 %v2465, 0.01
        %v2794 = vmul.f32 %v2470, 0.01
        %v2795 = vmul.f32 %v2473, 0.01
        %v2796 = vmul.f32 %v2478, 0.01
        %v2797 = vmul.f32 %v2481, 0.01
        %v2798 = vmul.f32 %v2486, 0.01
        %v2799 = vmul.f32 %v2489, 0.01
        %v2800 = vmul.f32 %v2494, 0.01
        %v2801 = vmul.f32 %v2497, 0.01
        %v2802 = vmul.f32 %v2502, 0.01
        %v2803 = vmul.f32 %v2505, 0.01
        %v2804 = vmul.f32 %v2510, 0.01
        %v2805 = vmul.f32 %v2513, 0.01
        %v2806 = vmul.f32 %v2518, 0.01
        %v2807 = vmul.f32 %v2521, 0.01
        %v2808 = vmul.f32 %v2526, 0.01
        %v2809 = vmul.f32 %v2529, 0.01
        %v2810 = vmul.f32 %v2534, 0.01
        %v2811 = vmul.f32 %v2537, 0.01
        %v2812 = vmul.f32 %v2542, 0.01
        %v2813 = vmul.f32 %v2545, 0.01
        %v2814 = vmul.f32 %v2550, 0.01
        %v2815 = vmul.f32 %v2553, 0.01
        %v2816 = vmul.f32 %v2558, 0.01
        %v2817 = vmul.f32 %v2561, 0.01
        %v2818 = vmul.f32 %v2566, 0.01
        %v2819 = vmul.f32 %v2569, 0.01
        %v2820 = vmul.f32 %v2574, 0.01
        %v2821 = vmul.f32 %v2577, 0.01
        %v2822 = vmul.f32 %v2582, 0.01
        %v2823 = vmul.f32 %v2585, 0.01
        %v2824 = vmul.f32 %v2590, 0.01
        %v2825 = vmul.f32 %v2593, 0.01
        %v2826 = vmul.f32 %v2598, 0.01
        %v2827 = vmul.f32 %v2601, 0.01
        %v2828 = vmul.f32 %v2606, 0.01
        %v2829 = vmul.f32 %v2609, 0.01
        %v2830 = vmul.f32 %v2614, 0.01
        %v2831 = vmul.f32 %v2617, 0.01
        %v2832 = vmul.f32 %v2622, 0.01
        %v2833 = vmul.f32 %v2625, 0.01
        %v2834 = vmul.f32 %v2630, 0.01
        %v2835 = vmul.f32 %v2633, 0.01
        %v2836 = vmul.f32 %v2638, 0.01
        %v2837 = vmul.f32 %v2641, 0.01
        %v2838 = vmul.f32 %v2646, 0.01
        %v2839 = vmul.f32 %v2649, 0.01
        %v2840 = vmul.f32 %v2654, 0.01
        %v2841 = vmul.f32 %v2657, 0.01
        %v2842 = vmul.f32 %v2662, 0.01
        %v2843 = vmul.f32 %v2665, 0.01
        %v2844 = vmul.f32 %v2670, 0.01
        %v2845 = vmul.f32 %v2673, 0.01
        %v2846 = vmul.f32 %v2678, 0.01
        %v2847 = vmul.f32 %v2681, 0.01
        %v2848 = vmul.f32 %v2686, 0.01
        %v2849 = vmul.f32 %v2689, 0.01
        %v2850 = vmul.f32 %v2694, 0.01
        %v2851 = vmul.f32 %v2697, 0.01
        %v2852 = vmul.f32 %v2702, 0.01
        %v2853 = vmul.f32 %v2705, 0.01
        %v2854 = vmul.f32 %v2710, 0.01
        %v2855 = vmul.f32 %v2713, 0.01
        %v2856 = vmul.f32 %v2718, 0.01
        %v2857 = vmul.f32 %v2721, 0.01
        %v2858 = vmul.f32 %v2726, 0.01
        %v2859 = vmul.f32 %v2729, 0.01
        %v2860 = vmax.f32 %v2222, %v2732
        %v2861 = vmax.f32 %v2225, %v2733
        %v2862 = vmax.f32 %v2230, %v2734
        %v2863 = vmax.f32 %v2233, %v2735
        %v2864 = vmax.f32 %v2238, %v2736
        %v2865 = vmax.f32 %v2241, %v2737
        %v2866 = vmax.f32 %v2246, %v2738
        %v2867 = vmax.f32 %v2249, %v2739
        %v2868 = vmax.f32 %v2254, %v2740
        %v2869 = vmax.f32 %v2257, %v2741
        %v2870 = vmax.f32 %v2262, %v2742
        %v2871 = vmax.f32 %v2265, %v2743
        %v2872 = vmax.f32 %v2270, %v2744
        %v2873 = vmax.f32 %v2273, %v2745
        %v2874 = vmax.f32 %v2278, %v2746
        %v2875 = vmax.f32 %v2281, %v2747
        %v2876 = vmax.f32 %v2286, %v2748
        %v2877 = vmax.f32 %v2289, %v2749
        %v2878 = vmax.f32 %v2294, %v2750
        %v2879 = vmax.f32 %v2297, %v2751
        %v2880 = vmax.f32 %v2302, %v2752
        %v2881 = vmax.f32 %v2305, %v2753
        %v2882 = vmax.f32 %v2310, %v2754
        %v2883 = vmax.f32 %v2313, %v2755
        %v2884 = vmax.f32 %v2318, %v2756
        %v2885 = vmax.f32 %v2321, %v2757
        %v2886 = vmax.f32 %v2326, %v2758
        %v2887 = vmax.f32 %v2329, %v2759
        %v2888 = vmax.f32 %v2334, %v2760
        %v2889 = vmax.f32 %v2337, %v2761
        %v2890 = vmax.f32 %v2342, %v2762
        %v2891 = vmax.f32 %v2345, %v2763
        %v2892 = vmax.f32 %v2350, %v2764
        %v2893 = vmax.f32 %v2353, %v2765
        %v2894 = vmax.f32 %v2358, %v2766
        %v2895 = vmax.f32 %v2361, %v2767
        %v2896 = vmax.f32 %v2366, %v2768
        %v2897 = vmax.f32 %v2369, %v2769
        %v2898 = vmax.f32 %v2374, %v2770
        %v2899 = vmax.f32 %v2377, %v2771
        %v2900 = vmax.f32 %v2382, %v2772
        %v2901 = vmax.f32 %v2385, %v2773
        %v2902 = vmax.f32 %v2390, %v2774
        %v2903 = vmax.f32 %v2393, %v2775
        %v2904 = vmax.f32 %v2398, %v2776
        %v2905 = vmax.f32 %v2401, %v2777
        %v2906 = vmax.f32 %v2406, %v2778
        %v2907 = vmax.f32 %v2409, %v2779
        %v2908 = vmax.f32 %v2414, %v2780
        %v2909 = vmax.f32 %v2417, %v2781
        %v2910 = vmax.f32 %v2422, %v2782
        %v2911 = vmax.f32 %v2425, %v2783
        %v2912 = vmax.f32 %v2430, %v2784
        %v2913 = vmax.f32 %v2433, %v2785
        %v2914 = vmax.f32 %v2438, %v2786
        %v2915 = vmax.f32 %v2441, %v2787
        %v2916 = vmax.f32 %v2446, %v2788
        %v2917 = vmax.f32 %v2449, %v2789
        %v2918 = vmax.f32 %v2454, %v2790
        %v2919 = vmax.f32 %v2457, %v2791
        %v2920 = vmax.f32 %v2462, %v2792
        %v2921 = vmax.f32 %v2465, %v2793
        %v2922 = vmax.f32 %v2470, %v2794
        %v2923 = vmax.f32 %v2473, %v2795
        %v2924 = vmax.f32 %v2478, %v2796
        %v2925 = vmax.f32 %v2481, %v2797
        %v2926 = vmax.f32 %v2486, %v2798
        %v2927 = vmax.f32 %v2489, %v2799
        %v2928 = vmax.f32 %v2494, %v2800
        %v2929 = vmax.f32 %v2497, %v2801
        %v2930 = vmax.f32 %v2502, %v2802
        %v2931 = vmax.f32 %v2505, %v2803
        %v2932 = vmax.f32 %v2510, %v2804
        %v2933 = vmax.f32 %v2513, %v2805
        %v2934 = vmax.f32 %v2518, %v2806
        %v2935 = vmax.f32 %v2521, %v2807
        %v2936 = vmax.f32 %v2526, %v2808
        %v2937 = vmax.f32 %v2529, %v2809
        %v2938 = vmax.f32 %v2534, %v2810
        %v2939 = vmax.f32 %v2537, %v2811
        %v2940 = vmax.f32 %v2542, %v2812
        %v2941 = vmax.f32 %v2545, %v2813
        %v2942 = vmax.f32 %v2550, %v2814
        %v2943 = vmax.f32 %v2553, %v2815
        %v2944 = vmax.f32 %v2558, %v2816
        %v2945 = vmax.f32 %v2561, %v2817
        %v2946 = vmax.f32 %v2566, %v2818
        %v2947 = vmax.f32 %v2569, %v2819
        %v2948 = vmax.f32 %v2574, %v2820
        %v2949 = vmax.f32 %v2577, %v2821
        %v2950 = vmax.f32 %v2582, %v2822
        %v2951 = vmax.f32 %v2585, %v2823
        %v2952 = vmax.f32 %v2590, %v2824
        %v2953 = vmax.f32 %v2593, %v2825
        %v2954 = vmax.f32 %v2598, %v2826
        %v2955 = vmax.f32 %v2601, %v2827
        %v2956 = vmax.f32 %v2606, %v2828
        %v2957 = vmax.f32 %v2609, %v2829
        %v2958 = vmax.f32 %v2614, %v2830
        %v2959 = vmax.f32 %v2617, %v2831
        %v2960 = vmax.f32 %v2622, %v2832
        %v2961 = vmax.f32 %v2625, %v2833
        %v2962 = vmax.f32 %v2630, %v2834
        %v2963 = vmax.f32 %v2633, %v2835
        %v2964 = vmax.f32 %v2638, %v2836
        %v2965 = vmax.f32 %v2641, %v2837
        %v2966 = vmax.f32 %v2646, %v2838
        %v2967 = vmax.f32 %v2649, %v2839
        %v2968 = vmax.f32 %v2654, %v2840
        %v2969 = vmax.f32 %v2657, %v2841
        %v2970 = vmax.f32 %v2662, %v2842
        %v2971 = vmax.f32 %v2665, %v2843
        %v2972 = vmax.f32 %v2670, %v2844
        %v2973 = vmax.f32 %v2673, %v2845
        %v2974 = vmax.f32 %v2678, %v2846
        %v2975 = vmax.f32 %v2681, %v2847
        %v2976 = vmax.f32 %v2686, %v2848
        %v2977 = vmax.f32 %v2689, %v2849
        %v2978 = vmax.f32 %v2694, %v2850
        %v2979 = vmax.f32 %v2697, %v2851
        %v2980 = vmax.f32 %v2702, %v2852
        %v2981 = vmax.f32 %v2705, %v2853
        %v2982 = vmax.f32 %v2710, %v2854
        %v2983 = vmax.f32 %v2713, %v2855
        %v2984 = vmax.f32 %v2718, %v2856
        %v2985 = vmax.f32 %v2721, %v2857
        %v2986 = vmax.f32 %v2726, %v2858
        %v2987 = vmax.f32 %v2729, %v2859
        %v2988 = vpack.c.bf16 %v2861, %v2860
        %v2989 = vpack.c.bf16 %v2863, %v2862
        %v2990 = vpack.c.bf16 %v2865, %v2864
        %v2991 = vpack.c.bf16 %v2867, %v2866
        %v2992 = vpack.c.bf16 %v2869, %v2868
        %v2993 = vpack.c.bf16 %v2871, %v2870
        %v2994 = vpack.c.bf16 %v2873, %v2872
        %v2995 = vpack.c.bf16 %v2875, %v2874
        %v2996 = vpack.c.bf16 %v2877, %v2876
        %v2997 = vpack.c.bf16 %v2879, %v2878
        %v2998 = vpack.c.bf16 %v2881, %v2880
        %v2999 = vpack.c.bf16 %v2883, %v2882
        %v3000 = vpack.c.bf16 %v2885, %v2884
        %v3001 = vpack.c.bf16 %v2887, %v2886
        %v3002 = vpack.c.bf16 %v2889, %v2888
        %v3003 = vpack.c.bf16 %v2891, %v2890
        %v3004 = vpack.c.bf16 %v2893, %v2892
        %v3005 = vpack.c.bf16 %v2895, %v2894
        %v3006 = vpack.c.bf16 %v2897, %v2896
        %v3007 = vpack.c.bf16 %v2899, %v2898
        %v3008 = vpack.c.bf16 %v2901, %v2900
        %v3009 = vpack.c.bf16 %v2903, %v2902
        %v3010 = vpack.c.bf16 %v2905, %v2904
        %v3011 = vpack.c.bf16 %v2907, %v2906
        %v3012 = vpack.c.bf16 %v2909, %v2908
        %v3013 = vpack.c.bf16 %v2911, %v2910
        %v3014 = vpack.c.bf16 %v2913, %v2912
        %v3015 = vpack.c.bf16 %v2915, %v2914
        %v3016 = vpack.c.bf16 %v2917, %v2916
        %v3017 = vpack.c.bf16 %v2919, %v2918
        %v3018 = vpack.c.bf16 %v2921, %v2920
        %v3019 = vpack.c.bf16 %v2923, %v2922
        %v3020 = vpack.c.bf16 %v2925, %v2924
        %v3021 = vpack.c.bf16 %v2927, %v2926
        %v3022 = vpack.c.bf16 %v2929, %v2928
        %v3023 = vpack.c.bf16 %v2931, %v2930
        %v3024 = vpack.c.bf16 %v2933, %v2932
        %v3025 = vpack.c.bf16 %v2935, %v2934
        %v3026 = vpack.c.bf16 %v2937, %v2936
        %v3027 = vpack.c.bf16 %v2939, %v2938
        %v3028 = vpack.c.bf16 %v2941, %v2940
        %v3029 = vpack.c.bf16 %v2943, %v2942
        %v3030 = vpack.c.bf16 %v2945, %v2944
        %v3031 = vpack.c.bf16 %v2947, %v2946
        %v3032 = vpack.c.bf16 %v2949, %v2948
        %v3033 = vpack.c.bf16 %v2951, %v2950
        %v3034 = vpack.c.bf16 %v2953, %v2952
        %v3035 = vpack.c.bf16 %v2955, %v2954
        %v3036 = vpack.c.bf16 %v2957, %v2956
        %v3037 = vpack.c.bf16 %v2959, %v2958
        %v3038 = vpack.c.bf16 %v2961, %v2960
        %v3039 = vpack.c.bf16 %v2963, %v2962
        %v3040 = vpack.c.bf16 %v2965, %v2964
        %v3041 = vpack.c.bf16 %v2967, %v2966
        %v3042 = vpack.c.bf16 %v2969, %v2968
        %v3043 = vpack.c.bf16 %v2971, %v2970
        %v3044 = vpack.c.bf16 %v2973, %v2972
        %v3045 = vpack.c.bf16 %v2975, %v2974
        %v3046 = vpack.c.bf16 %v2977, %v2976
        %v3047 = vpack.c.bf16 %v2979, %v2978
        %v3048 = vpack.c.bf16 %v2981, %v2980
        %v3049 = vpack.c.bf16 %v2983, %v2982
        %v3050 = vpack.c.bf16 %v2985, %v2984
        %v3051 = vpack.c.bf16 %v2987, %v2986
        %v3052 = vld [vmem:[%s6] sm:$0xf]
        %v3053 = vld [vmem:[%s6 + $0x4] sm:$0xf]
        %v3054 = vld [vmem:[%s6 + $0x8] sm:$0xf]
        %v3055 = vld [vmem:[%s6 + $0xc] sm:$0xf]
        %v3056 = vld [vmem:[%s6 + $0x10] sm:$0xf]
        %v3057 = vld [vmem:[%s6 + $0x14] sm:$0xf]
        %v3058 = vld [vmem:[%s6 + $0x18] sm:$0xf]
        %v3059 = vld [vmem:[%s6 + $0x1c] sm:$0xf]
        %v3060 = vld [vmem:[%s7] sm:$0x1]
        %v3062 = vlaneseq
        %v3063 = vshrl.u32 %v3062, 7
        %v3064 = vsub.s32 0, %v3063
        %v3065 = vrot.slane %v3060, %v3064
        %v3075 = vunpack.c.l.b16 %v3052
        %v3076 = vunpack.c.l.b16 %v3053
        %v3077 = vunpack.c.l.b16 %v3054
        %v3078 = vunpack.c.l.b16 %v3055
        %v3079 = vunpack.c.l.b16 %v3056
        %v3080 = vunpack.c.l.b16 %v3057
        %v3081 = vunpack.c.l.b16 %v3058
        %v3082 = vunpack.c.l.b16 %v3059
        %v3083 = vpack.c.b16 %v3076, %v3075
        %v3084 = vpack.c.b16 %v3078, %v3077
        %v3085 = vpack.c.b16 %v3080, %v3079
        %v3086 = vpack.c.b16 %v3082, %v3081
        %v3092 = vsel %vm1994, %v2988, 0
        %v3095 = vsel %vm1994, %v2989, 0
        %v3098 = vsel %vm1994, %v2990, 0
        %v3101 = vsel %vm1994, %v2991, 0
        %v3104 = vsel %vm1994, %v2992, 0
        %v3107 = vsel %vm1994, %v2993, 0
        %v3110 = vsel %vm1994, %v2994, 0
        %v3113 = vsel %vm1994, %v2995, 0
        %v3116 = vsel %vm1994, %v2996, 0
        %v3119 = vsel %vm1994, %v2997, 0
        %v3122 = vsel %vm1994, %v2998, 0
        %v3125 = vsel %vm1994, %v2999, 0
        %v3128 = vsel %vm1994, %v3000, 0
        %v3131 = vsel %vm1994, %v3001, 0
        %v3134 = vsel %vm1994, %v3002, 0
        %v3137 = vsel %vm1994, %v3003, 0
        %v3140 = vsel %vm1994, %v3004, 0
        %v3143 = vsel %vm1994, %v3005, 0
        %v3146 = vsel %vm1994, %v3006, 0
        %v3149 = vsel %vm1994, %v3007, 0
        %v3152 = vsel %vm1994, %v3008, 0
        %v3155 = vsel %vm1994, %v3009, 0
        %v3158 = vsel %vm1994, %v3010, 0
        %v3161 = vsel %vm1994, %v3011, 0
        %v3164 = vsel %vm1994, %v3012, 0
        %v3167 = vsel %vm1994, %v3013, 0
        %v3170 = vsel %vm1994, %v3014, 0
        %v3173 = vsel %vm1994, %v3015, 0
        %v3176 = vsel %vm1994, %v3016, 0
        %v3179 = vsel %vm1994, %v3017, 0
        %v3182 = vsel %vm1994, %v3018, 0
        %v3185 = vsel %vm1994, %v3019, 0
        %v3188 = vsel %vm1994, %v3020, 0
        %v3191 = vsel %vm1994, %v3021, 0
        %v3194 = vsel %vm1994, %v3022, 0
        %v3197 = vsel %vm1994, %v3023, 0
        %v3200 = vsel %vm1994, %v3024, 0
        %v3203 = vsel %vm1994, %v3025, 0
        %v3206 = vsel %vm1994, %v3026, 0
        %v3209 = vsel %vm1994, %v3027, 0
        %v3212 = vsel %vm1994, %v3028, 0
        %v3215 = vsel %vm1994, %v3029, 0
        %v3218 = vsel %vm1994, %v3030, 0
        %v3221 = vsel %vm1994, %v3031, 0
        %v3224 = vsel %vm1994, %v3032, 0
        %v3227 = vsel %vm1994, %v3033, 0
        %v3230 = vsel %vm1994, %v3034, 0
        %v3233 = vsel %vm1994, %v3035, 0
        %v3236 = vsel %vm1994, %v3036, 0
        %v3239 = vsel %vm1994, %v3037, 0
        %v3242 = vsel %vm1994, %v3038, 0
        %v3245 = vsel %vm1994, %v3039, 0
        %v3248 = vsel %vm1994, %v3040, 0
        %v3251 = vsel %vm1994, %v3041, 0
        %v3254 = vsel %vm1994, %v3042, 0
        %v3257 = vsel %vm1994, %v3043, 0
        %v3260 = vsel %vm1994, %v3044, 0
        %v3263 = vsel %vm1994, %v3045, 0
        %v3266 = vsel %vm1994, %v3046, 0
        %v3269 = vsel %vm1994, %v3047, 0
        %v3272 = vsel %vm1994, %v3048, 0
        %v3275 = vsel %vm1994, %v3049, 0
        %v3278 = vsel %vm1994, %v3050, 0
        %v3281 = vsel %vm1994, %v3051, 0
        %3283 = vmatprep.subr.bf16.mxu0 0
        %3284 = vmatpush1.bf16.msra.mxu0 %v3083
        %3285 = vmatprep.subr.bf16.mxu0 0
        %3286 = vmatpush1.bf16.msra.mxu0 %v3084
        %3287 = vmatprep.subr.bf16.mxu0 0
        %3288 = vmatpush1.bf16.msra.mxu0 %v3085
        %3289 = vmatprep.subr.bf16.mxu0 0
        %3290 = vmatpush1.bf16.msra.mxu0 %v3086
        %3291 = vmatprep.subr.bf16.mxu0 0
        %3292 = vmatpush1.bf16.msra.mxu0 0
        %3293 = vmatprep.subr.bf16.mxu0 0
        %3294 = vmatpush1.bf16.msra.mxu0 0
        %3295 = vmatprep.subr.bf16.mxu0 0
        %3296 = vmatpush1.bf16.msra.mxu0 0
        %3297 = vmatprep.subr.bf16.mxu0 0
        %3298 = vmatpush1.bf16.msra.mxu0 0
        %3299 = vmatprep.subr.bf16.mxu0 0
        %3300 = vmatpush1.bf16.msra.mxu0 0
        %3301 = vmatprep.subr.bf16.mxu0 0
        %3302 = vmatpush1.bf16.msra.mxu0 0
        %3303 = vmatprep.subr.bf16.mxu0 0
        %3304 = vmatpush1.bf16.msra.mxu0 0
        %3305 = vmatprep.subr.bf16.mxu0 0
        %3306 = vmatpush1.bf16.msra.mxu0 0
        %3307 = vmatprep.subr.bf16.mxu0 0
        %3308 = vmatpush1.bf16.msra.mxu0 0
        %3309 = vmatprep.subr.bf16.mxu0 0
        %3310 = vmatpush1.bf16.msra.mxu0 0
        %3311 = vmatprep.subr.bf16.mxu0 0
        %3312 = vmatpush1.bf16.msra.mxu0 0
        %3313 = vmatprep.subr.bf16.mxu0 0
        %3314 = vmatpush1.bf16.msra.mxu0 0
        %3315 = vmatprep.mubr.bf16.mxu0 0
        %3316 = vmatmul.mubr.bf16.gmra.mrb[0].mxu0 %v3092
        %v3317 = vpop.f32.mrb[0].mxu0
        %v3318 = vadd.f32 %v3065, %v3317
        %v3319 = vpop.f32.mrb[0].mxu0
        %v3320 = vpop.f32.mrb[0].mxu0
        %v3321 = vadd.f32 %v3065, %v3320
        %v3322 = vpop.f32.mrb[0].mxu0
        %3323 = vmatprep.mubr.bf16.mxu0 0
        %3324 = vmatmul.mubr.bf16.gmra.mrb[0].mxu0 %v3095
        %v3325 = vpop.f32.mrb[0].mxu0
        %v3326 = vadd.f32 %v3065, %v3325
        %v3327 = vpop.f32.mrb[0].mxu0
        %v3328 = vpop.f32.mrb[0].mxu0
        %v3329 = vadd.f32 %v3065, %v3328
        %v3330 = vpop.f32.mrb[0].mxu0
        %3331 = vmatprep.mubr.bf16.mxu0 0
        %3332 = vmatmul.mubr.bf16.gmra.mrb[0].mxu0 %v3098
        %v3333 = vpop.f32.mrb[0].mxu0
        %v3334 = vadd.f32 %v3065, %v3333
        %v3335 = vpop.f32.mrb[0].mxu0
        %v3336 = vpop.f32.mrb[0].mxu0
        %v3337 = vadd.f32 %v3065, %v3336
        %v3338 = vpop.f32.mrb[0].mxu0
        %3339 = vmatprep.mubr.bf16.mxu0 0
        %3340 = vmatmul.mubr.bf16.gmra.mrb[0].mxu0 %v3101
        %v3341 = vpop.f32.mrb[0].mxu0
        %v3342 = vadd.f32 %v3065, %v3341
        %v3343 = vpop.f32.mrb[0].mxu0
        %v3344 = vpop.f32.mrb[0].mxu0
        %v3345 = vadd.f32 %v3065, %v3344
        %v3346 = vpop.f32.mrb[0].mxu0
        %3347 = vmatprep.mubr.bf16.mxu0 0
        %3348 = vmatmul.mubr.bf16.gmra.mrb[0].mxu0 %v3104
        %v3349 = vpop.f32.mrb[0].mxu0
        %v3350 = vadd.f32 %v3065, %v3349
        %v3351 = vpop.f32.mrb[0].mxu0
        %v3352 = vpop.f32.mrb[0].mxu0
        %v3353 = vadd.f32 %v3065, %v3352
        %v3354 = vpop.f32.mrb[0].mxu0
        %3355 = vmatprep.mubr.bf16.mxu0 0
        %3356 = vmatmul.mubr.bf16.gmra.mrb[0].mxu0 %v3107
        %v3357 = vpop.f32.mrb[0].mxu0
        %v3358 = vadd.f32 %v3065, %v3357
        %v3359 = vpop.f32.mrb[0].mxu0
        %v3360 = vpop.f32.mrb[0].mxu0
        %v3361 = vadd.f32 %v3065, %v3360
        %v3362 = vpop.f32.mrb[0].mxu0
        %3363 = vmatprep.mubr.bf16.mxu0 0
        %3364 = vmatmul.mubr.bf16.gmra.mrb[0].mxu0 %v3110
        %v3365 = vpop.f32.mrb[0].mxu0
        %v3366 = vadd.f32 %v3065, %v3365
        %v3367 = vpop.f32.mrb[0].mxu0
        %v3368 = vpop.f32.mrb[0].mxu0
        %v3369 = vadd.f32 %v3065, %v3368
        %v3370 = vpop.f32.mrb[0].mxu0
        %3371 = vmatprep.mubr.bf16.mxu0 0
        %3372 = vmatmul.mubr.bf16.gmra.mrb[0].mxu0 %v3113
        %v3373 = vpop.f32.mrb[0].mxu0
        %v3374 = vadd.f32 %v3065, %v3373
        %v3375 = vpop.f32.mrb[0].mxu0
        %v3376 = vpop.f32.mrb[0].mxu0
        %v3377 = vadd.f32 %v3065, %v3376
        %v3378 = vpop.f32.mrb[0].mxu0
        %3379 = vmatprep.mubr.bf16.mxu0 0
        %3380 = vmatmul.mubr.bf16.gmra.mrb[0].mxu0 %v3116
        %v3381 = vpop.f32.mrb[0].mxu0
        %v3382 = vadd.f32 %v3065, %v3381
        %v3383 = vpop.f32.mrb[0].mxu0
        %v3384 = vpop.f32.mrb[0].mxu0
        %v3385 = vadd.f32 %v3065, %v3384
        %v3386 = vpop.f32.mrb[0].mxu0
        %3387 = vmatprep.mubr.bf16.mxu0 0
        %3388 = vmatmul.mubr.bf16.gmra.mrb[0].mxu0 %v3119
        %v3389 = vpop.f32.mrb[0].mxu0
        %v3390 = vadd.f32 %v3065, %v3389
        %v3391 = vpop.f32.mrb[0].mxu0
        %v3392 = vpop.f32.mrb[0].mxu0
        %v3393 = vadd.f32 %v3065, %v3392
        %v3394 = vpop.f32.mrb[0].mxu0
        %3395 = vmatprep.mubr.bf16.mxu0 0
        %3396 = vmatmul.mubr.bf16.gmra.mrb[0].mxu0 %v3122
        %v3397 = vpop.f32.mrb[0].mxu0
        %v3398 = vadd.f32 %v3065, %v3397
        %v3399 = vpop.f32.mrb[0].mxu0
        %v3400 = vpop.f32.mrb[0].mxu0
        %v3401 = vadd.f32 %v3065, %v3400
        %v3402 = vpop.f32.mrb[0].mxu0
        %3403 = vmatprep.mubr.bf16.mxu0 0
        %3404 = vmatmul.mubr.bf16.gmra.mrb[0].mxu0 %v3125
        %v3405 = vpop.f32.mrb[0].mxu0
        %v3406 = vadd.f32 %v3065, %v3405
        %v3407 = vpop.f32.mrb[0].mxu0
        %v3408 = vpop.f32.mrb[0].mxu0
        %v3409 = vadd.f32 %v3065, %v3408
        %v3410 = vpop.f32.mrb[0].mxu0
        %3411 = vmatprep.mubr.bf16.mxu0 0
        %3412 = vmatmul.mubr.bf16.gmra.mrb[0].mxu0 %v3128
        %v3413 = vpop.f32.mrb[0].mxu0
        %v3414 = vadd.f32 %v3065, %v3413
        %v3415 = vpop.f32.mrb[0].mxu0
        %v3416 = vpop.f32.mrb[0].mxu0
        %v3417 = vadd.f32 %v3065, %v3416
        %v3418 = vpop.f32.mrb[0].mxu0
        %3419 = vmatprep.mubr.bf16.mxu0 0
        %3420 = vmatmul.mubr.bf16.gmra.mrb[0].mxu0 %v3131
        %v3421 = vpop.f32.mrb[0].mxu0
        %v3422 = vadd.f32 %v3065, %v3421
        %v3423 = vpop.f32.mrb[0].mxu0
        %v3424 = vpop.f32.mrb[0].mxu0
        %v3425 = vadd.f32 %v3065, %v3424
        %v3426 = vpop.f32.mrb[0].mxu0
        %3427 = vmatprep.mubr.bf16.mxu0 0
        %3428 = vmatmul.mubr.bf16.gmra.mrb[0].mxu0 %v3134
        %v3429 = vpop.f32.mrb[0].mxu0
        %v3430 = vadd.f32 %v3065, %v3429
        %v3431 = vpop.f32.mrb[0].mxu0
        %v3432 = vpop.f32.mrb[0].mxu0
        %v3433 = vadd.f32 %v3065, %v3432
        %v3434 = vpop.f32.mrb[0].mxu0
        %3435 = vmatprep.mubr.bf16.mxu0 0
        %3436 = vmatmul.mubr.bf16.gmra.mrb[0].mxu0 %v3137
        %v3437 = vpop.f32.mrb[0].mxu0
        %v3438 = vadd.f32 %v3065, %v3437
        %v3439 = vpop.f32.mrb[0].mxu0
        %v3440 = vpop.f32.mrb[0].mxu0
        %v3441 = vadd.f32 %v3065, %v3440
        %v3442 = vpop.f32.mrb[0].mxu0
        %3443 = vmatprep.mubr.bf16.mxu0 0
        %3444 = vmatmul.mubr.bf16.gmra.mrb[0].mxu0 %v3140
        %v3445 = vpop.f32.mrb[0].mxu0
        %v3446 = vadd.f32 %v3065, %v3445
        %v3447 = vpop.f32.mrb[0].mxu0
        %v3448 = vpop.f32.mrb[0].mxu0
        %v3449 = vadd.f32 %v3065, %v3448
        %v3450 = vpop.f32.mrb[0].mxu0
        %3451 = vmatprep.mubr.bf16.mxu0 0
        %3452 = vmatmul.mubr.bf16.gmra.mrb[0].mxu0 %v3143
        %v3453 = vpop.f32.mrb[0].mxu0
        %v3454 = vadd.f32 %v3065, %v3453
        %v3455 = vpop.f32.mrb[0].mxu0
        %v3456 = vpop.f32.mrb[0].mxu0
        %v3457 = vadd.f32 %v3065, %v3456
        %v3458 = vpop.f32.mrb[0].mxu0
        %3459 = vmatprep.mubr.bf16.mxu0 0
        %3460 = vmatmul.mubr.bf16.gmra.mrb[0].mxu0 %v3146
        %v3461 = vpop.f32.mrb[0].mxu0
        %v3462 = vadd.f32 %v3065, %v3461
        %v3463 = vpop.f32.mrb[0].mxu0
        %v3464 = vpop.f32.mrb[0].mxu0
        %v3465 = vadd.f32 %v3065, %v3464
        %v3466 = vpop.f32.mrb[0].mxu0
        %3467 = vmatprep.mubr.bf16.mxu0 0
        %3468 = vmatmul.mubr.bf16.gmra.mrb[0].mxu0 %v3149
        %v3469 = vpop.f32.mrb[0].mxu0
        %v3470 = vadd.f32 %v3065, %v3469
        %v3471 = vpop.f32.mrb[0].mxu0
        %v3472 = vpop.f32.mrb[0].mxu0
        %v3473 = vadd.f32 %v3065, %v3472
        %v3474 = vpop.f32.mrb[0].mxu0
        %3475 = vmatprep.mubr.bf16.mxu0 0
        %3476 = vmatmul.mubr.bf16.gmra.mrb[0].mxu0 %v3152
        %v3477 = vpop.f32.mrb[0].mxu0
        %v3478 = vadd.f32 %v3065, %v3477
        %v3479 = vpop.f32.mrb[0].mxu0
        %v3480 = vpop.f32.mrb[0].mxu0
        %v3481 = vadd.f32 %v3065, %v3480
        %v3482 = vpop.f32.mrb[0].mxu0
        %3483 = vmatprep.mubr.bf16.mxu0 0
        %3484 = vmatmul.mubr.bf16.gmra.mrb[0].mxu0 %v3155
        %v3485 = vpop.f32.mrb[0].mxu0
        %v3486 = vadd.f32 %v3065, %v3485
        %v3487 = vpop.f32.mrb[0].mxu0
        %v3488 = vpop.f32.mrb[0].mxu0
        %v3489 = vadd.f32 %v3065, %v3488
        %v3490 = vpop.f32.mrb[0].mxu0
        %3491 = vmatprep.mubr.bf16.mxu0 0
        %3492 = vmatmul.mubr.bf16.gmra.mrb[0].mxu0 %v3158
        %v3493 = vpop.f32.mrb[0].mxu0
        %v3494 = vadd.f32 %v3065, %v3493
        %v3495 = vpop.f32.mrb[0].mxu0
        %v3496 = vpop.f32.mrb[0].mxu0
        %v3497 = vadd.f32 %v3065, %v3496
        %v3498 = vpop.f32.mrb[0].mxu0
        %3499 = vmatprep.mubr.bf16.mxu0 0
        %3500 = vmatmul.mubr.bf16.gmra.mrb[0].mxu0 %v3161
        %v3501 = vpop.f32.mrb[0].mxu0
        %v3502 = vadd.f32 %v3065, %v3501
        %v3503 = vpop.f32.mrb[0].mxu0
        %v3504 = vpop.f32.mrb[0].mxu0
        %v3505 = vadd.f32 %v3065, %v3504
        %v3506 = vpop.f32.mrb[0].mxu0
        %3507 = vmatprep.mubr.bf16.mxu0 0
        %3508 = vmatmul.mubr.bf16.gmra.mrb[0].mxu0 %v3164
        %v3509 = vpop.f32.mrb[0].mxu0
        %v3510 = vadd.f32 %v3065, %v3509
        %v3511 = vpop.f32.mrb[0].mxu0
        %v3512 = vpop.f32.mrb[0].mxu0
        %v3513 = vadd.f32 %v3065, %v3512
        %v3514 = vpop.f32.mrb[0].mxu0
        %3515 = vmatprep.mubr.bf16.mxu0 0
        %3516 = vmatmul.mubr.bf16.gmra.mrb[0].mxu0 %v3167
        %v3517 = vpop.f32.mrb[0].mxu0
        %v3518 = vadd.f32 %v3065, %v3517
        %v3519 = vpop.f32.mrb[0].mxu0
        %v3520 = vpop.f32.mrb[0].mxu0
        %v3521 = vadd.f32 %v3065, %v3520
        %v3522 = vpop.f32.mrb[0].mxu0
        %3523 = vmatprep.mubr.bf16.mxu0 0
        %3524 = vmatmul.mubr.bf16.gmra.mrb[0].mxu0 %v3170
        %v3525 = vpop.f32.mrb[0].mxu0
        %v3526 = vadd.f32 %v3065, %v3525
        %v3527 = vpop.f32.mrb[0].mxu0
        %v3528 = vpop.f32.mrb[0].mxu0
        %v3529 = vadd.f32 %v3065, %v3528
        %v3530 = vpop.f32.mrb[0].mxu0
        %3531 = vmatprep.mubr.bf16.mxu0 0
        %3532 = vmatmul.mubr.bf16.gmra.mrb[0].mxu0 %v3173
        %v3533 = vpop.f32.mrb[0].mxu0
        %v3534 = vadd.f32 %v3065, %v3533
        %v3535 = vpop.f32.mrb[0].mxu0
        %v3536 = vpop.f32.mrb[0].mxu0
        %v3537 = vadd.f32 %v3065, %v3536
        %v3538 = vpop.f32.mrb[0].mxu0
        %3539 = vmatprep.mubr.bf16.mxu0 0
        %3540 = vmatmul.mubr.bf16.gmra.mrb[0].mxu0 %v3176
        %v3541 = vpop.f32.mrb[0].mxu0
        %v3542 = vadd.f32 %v3065, %v3541
        %v3543 = vpop.f32.mrb[0].mxu0
        %v3544 = vpop.f32.mrb[0].mxu0
        %v3545 = vadd.f32 %v3065, %v3544
        %v3546 = vpop.f32.mrb[0].mxu0
        %3547 = vmatprep.mubr.bf16.mxu0 0
        %3548 = vmatmul.mubr.bf16.gmra.mrb[0].mxu0 %v3179
        %v3549 = vpop.f32.mrb[0].mxu0
        %v3550 = vadd.f32 %v3065, %v3549
        %v3551 = vpop.f32.mrb[0].mxu0
        %v3552 = vpop.f32.mrb[0].mxu0
        %v3553 = vadd.f32 %v3065, %v3552
        %v3554 = vpop.f32.mrb[0].mxu0
        %3555 = vmatprep.mubr.bf16.mxu0 0
        %3556 = vmatmul.mubr.bf16.gmra.mrb[0].mxu0 %v3182
        %v3557 = vpop.f32.mrb[0].mxu0
        %v3558 = vadd.f32 %v3065, %v3557
        %v3559 = vpop.f32.mrb[0].mxu0
        %v3560 = vpop.f32.mrb[0].mxu0
        %v3561 = vadd.f32 %v3065, %v3560
        %v3562 = vpop.f32.mrb[0].mxu0
        %3563 = vmatprep.mubr.bf16.mxu0 0
        %3564 = vmatmul.mubr.bf16.gmra.mrb[0].mxu0 %v3185
        %v3565 = vpop.f32.mrb[0].mxu0
        %v3566 = vadd.f32 %v3065, %v3565
        %v3567 = vpop.f32.mrb[0].mxu0
        %v3568 = vpop.f32.mrb[0].mxu0
        %v3569 = vadd.f32 %v3065, %v3568
        %v3570 = vpop.f32.mrb[0].mxu0
        %3571 = vmatprep.mubr.bf16.mxu0 0
        %3572 = vmatmul.mubr.bf16.gmra.mrb[0].mxu0 %v3188
        %v3573 = vpop.f32.mrb[0].mxu0
        %v3574 = vadd.f32 %v3065, %v3573
        %v3575 = vpop.f32.mrb[0].mxu0
        %v3576 = vpop.f32.mrb[0].mxu0
        %v3577 = vadd.f32 %v3065, %v3576
        %v3578 = vpop.f32.mrb[0].mxu0
        %3579 = vmatprep.mubr.bf16.mxu0 0
        %3580 = vmatmul.mubr.bf16.gmra.mrb[0].mxu0 %v3191
        %v3581 = vpop.f32.mrb[0].mxu0
        %v3582 = vadd.f32 %v3065, %v3581
        %v3583 = vpop.f32.mrb[0].mxu0
        %v3584 = vpop.f32.mrb[0].mxu0
        %v3585 = vadd.f32 %v3065, %v3584
        %v3586 = vpop.f32.mrb[0].mxu0
        %3587 = vmatprep.mubr.bf16.mxu0 0
        %3588 = vmatmul.mubr.bf16.gmra.mrb[0].mxu0 %v3194
        %v3589 = vpop.f32.mrb[0].mxu0
        %v3590 = vadd.f32 %v3065, %v3589
        %v3591 = vpop.f32.mrb[0].mxu0
        %v3592 = vpop.f32.mrb[0].mxu0
        %v3593 = vadd.f32 %v3065, %v3592
        %v3594 = vpop.f32.mrb[0].mxu0
        %3595 = vmatprep.mubr.bf16.mxu0 0
        %3596 = vmatmul.mubr.bf16.gmra.mrb[0].mxu0 %v3197
        %v3597 = vpop.f32.mrb[0].mxu0
        %v3598 = vadd.f32 %v3065, %v3597
        %v3599 = vpop.f32.mrb[0].mxu0
        %v3600 = vpop.f32.mrb[0].mxu0
        %v3601 = vadd.f32 %v3065, %v3600
        %v3602 = vpop.f32.mrb[0].mxu0
        %3603 = vmatprep.mubr.bf16.mxu0 0
        %3604 = vmatmul.mubr.bf16.gmra.mrb[0].mxu0 %v3200
        %v3605 = vpop.f32.mrb[0].mxu0
        %v3606 = vadd.f32 %v3065, %v3605
        %v3607 = vpop.f32.mrb[0].mxu0
        %v3608 = vpop.f32.mrb[0].mxu0
        %v3609 = vadd.f32 %v3065, %v3608
        %v3610 = vpop.f32.mrb[0].mxu0
        %3611 = vmatprep.mubr.bf16.mxu0 0
        %3612 = vmatmul.mubr.bf16.gmra.mrb[0].mxu0 %v3203
        %v3613 = vpop.f32.mrb[0].mxu0
        %v3614 = vadd.f32 %v3065, %v3613
        %v3615 = vpop.f32.mrb[0].mxu0
        %v3616 = vpop.f32.mrb[0].mxu0
        %v3617 = vadd.f32 %v3065, %v3616
        %v3618 = vpop.f32.mrb[0].mxu0
        %3619 = vmatprep.mubr.bf16.mxu0 0
        %3620 = vmatmul.mubr.bf16.gmra.mrb[0].mxu0 %v3206
        %v3621 = vpop.f32.mrb[0].mxu0
        %v3622 = vadd.f32 %v3065, %v3621
        %v3623 = vpop.f32.mrb[0].mxu0
        %v3624 = vpop.f32.mrb[0].mxu0
        %v3625 = vadd.f32 %v3065, %v3624
        %v3626 = vpop.f32.mrb[0].mxu0
        %3627 = vmatprep.mubr.bf16.mxu0 0
        %3628 = vmatmul.mubr.bf16.gmra.mrb[0].mxu0 %v3209
        %v3629 = vpop.f32.mrb[0].mxu0
        %v3630 = vadd.f32 %v3065, %v3629
        %v3631 = vpop.f32.mrb[0].mxu0
        %v3632 = vpop.f32.mrb[0].mxu0
        %v3633 = vadd.f32 %v3065, %v3632
        %v3634 = vpop.f32.mrb[0].mxu0
        %3635 = vmatprep.mubr.bf16.mxu0 0
        %3636 = vmatmul.mubr.bf16.gmra.mrb[0].mxu0 %v3212
        %v3637 = vpop.f32.mrb[0].mxu0
        %v3638 = vadd.f32 %v3065, %v3637
        %v3639 = vpop.f32.mrb[0].mxu0
        %v3640 = vpop.f32.mrb[0].mxu0
        %v3641 = vadd.f32 %v3065, %v3640
        %v3642 = vpop.f32.mrb[0].mxu0
        %3643 = vmatprep.mubr.bf16.mxu0 0
        %3644 = vmatmul.mubr.bf16.gmra.mrb[0].mxu0 %v3215
        %v3645 = vpop.f32.mrb[0].mxu0
        %v3646 = vadd.f32 %v3065, %v3645
        %v3647 = vpop.f32.mrb[0].mxu0
        %v3648 = vpop.f32.mrb[0].mxu0
        %v3649 = vadd.f32 %v3065, %v3648
        %v3650 = vpop.f32.mrb[0].mxu0
        %3651 = vmatprep.mubr.bf16.mxu0 0
        %3652 = vmatmul.mubr.bf16.gmra.mrb[0].mxu0 %v3218
        %v3653 = vpop.f32.mrb[0].mxu0
        %v3654 = vadd.f32 %v3065, %v3653
        %v3655 = vpop.f32.mrb[0].mxu0
        %v3656 = vpop.f32.mrb[0].mxu0
        %v3657 = vadd.f32 %v3065, %v3656
        %v3658 = vpop.f32.mrb[0].mxu0
        %3659 = vmatprep.mubr.bf16.mxu0 0
        %3660 = vmatmul.mubr.bf16.gmra.mrb[0].mxu0 %v3221
        %v3661 = vpop.f32.mrb[0].mxu0
        %v3662 = vadd.f32 %v3065, %v3661
        %v3663 = vpop.f32.mrb[0].mxu0
        %v3664 = vpop.f32.mrb[0].mxu0
        %v3665 = vadd.f32 %v3065, %v3664
        %v3666 = vpop.f32.mrb[0].mxu0
        %3667 = vmatprep.mubr.bf16.mxu0 0
        %3668 = vmatmul.mubr.bf16.gmra.mrb[0].mxu0 %v3224
        %v3669 = vpop.f32.mrb[0].mxu0
        %v3670 = vadd.f32 %v3065, %v3669
        %v3671 = vpop.f32.mrb[0].mxu0
        %v3672 = vpop.f32.mrb[0].mxu0
        %v3673 = vadd.f32 %v3065, %v3672
        %v3674 = vpop.f32.mrb[0].mxu0
        %3675 = vmatprep.mubr.bf16.mxu0 0
        %3676 = vmatmul.mubr.bf16.gmra.mrb[0].mxu0 %v3227
        %v3677 = vpop.f32.mrb[0].mxu0
        %v3678 = vadd.f32 %v3065, %v3677
        %v3679 = vpop.f32.mrb[0].mxu0
        %v3680 = vpop.f32.mrb[0].mxu0
        %v3681 = vadd.f32 %v3065, %v3680
        %v3682 = vpop.f32.mrb[0].mxu0
        %3683 = vmatprep.mubr.bf16.mxu0 0
        %3684 = vmatmul.mubr.bf16.gmra.mrb[0].mxu0 %v3230
        %v3685 = vpop.f32.mrb[0].mxu0
        %v3686 = vadd.f32 %v3065, %v3685
        %v3687 = vpop.f32.mrb[0].mxu0
        %v3688 = vpop.f32.mrb[0].mxu0
        %v3689 = vadd.f32 %v3065, %v3688
        %v3690 = vpop.f32.mrb[0].mxu0
        %3691 = vmatprep.mubr.bf16.mxu0 0
        %3692 = vmatmul.mubr.bf16.gmra.mrb[0].mxu0 %v3233
        %v3693 = vpop.f32.mrb[0].mxu0
        %v3694 = vadd.f32 %v3065, %v3693
        %v3695 = vpop.f32.mrb[0].mxu0
        %v3696 = vpop.f32.mrb[0].mxu0
        %v3697 = vadd.f32 %v3065, %v3696
        %v3698 = vpop.f32.mrb[0].mxu0
        %3699 = vmatprep.mubr.bf16.mxu0 0
        %3700 = vmatmul.mubr.bf16.gmra.mrb[0].mxu0 %v3236
        %v3701 = vpop.f32.mrb[0].mxu0
        %v3702 = vadd.f32 %v3065, %v3701
        %v3703 = vpop.f32.mrb[0].mxu0
        %v3704 = vpop.f32.mrb[0].mxu0
        %v3705 = vadd.f32 %v3065, %v3704
        %v3706 = vpop.f32.mrb[0].mxu0
        %3707 = vmatprep.mubr.bf16.mxu0 0
        %3708 = vmatmul.mubr.bf16.gmra.mrb[0].mxu0 %v3239
        %v3709 = vpop.f32.mrb[0].mxu0
        %v3710 = vadd.f32 %v3065, %v3709
        %v3711 = vpop.f32.mrb[0].mxu0
        %v3712 = vpop.f32.mrb[0].mxu0
        %v3713 = vadd.f32 %v3065, %v3712
        %v3714 = vpop.f32.mrb[0].mxu0
        %3715 = vmatprep.mubr.bf16.mxu0 0
        %3716 = vmatmul.mubr.bf16.gmra.mrb[0].mxu0 %v3242
        %v3717 = vpop.f32.mrb[0].mxu0
        %v3718 = vadd.f32 %v3065, %v3717
        %v3719 = vpop.f32.mrb[0].mxu0
        %v3720 = vpop.f32.mrb[0].mxu0
        %v3721 = vadd.f32 %v3065, %v3720
        %v3722 = vpop.f32.mrb[0].mxu0
        %3723 = vmatprep.mubr.bf16.mxu0 0
        %3724 = vmatmul.mubr.bf16.gmra.mrb[0].mxu0 %v3245
        %v3725 = vpop.f32.mrb[0].mxu0
        %v3726 = vadd.f32 %v3065, %v3725
        %v3727 = vpop.f32.mrb[0].mxu0
        %v3728 = vpop.f32.mrb[0].mxu0
        %v3729 = vadd.f32 %v3065, %v3728
        %v3730 = vpop.f32.mrb[0].mxu0
        %3731 = vmatprep.mubr.bf16.mxu0 0
        %3732 = vmatmul.mubr.bf16.gmra.mrb[0].mxu0 %v3248
        %v3733 = vpop.f32.mrb[0].mxu0
        %v3734 = vadd.f32 %v3065, %v3733
        %v3735 = vpop.f32.mrb[0].mxu0
        %v3736 = vpop.f32.mrb[0].mxu0
        %v3737 = vadd.f32 %v3065, %v3736
        %v3738 = vpop.f32.mrb[0].mxu0
        %3739 = vmatprep.mubr.bf16.mxu0 0
        %3740 = vmatmul.mubr.bf16.gmra.mrb[0].mxu0 %v3251
        %v3741 = vpop.f32.mrb[0].mxu0
        %v3742 = vadd.f32 %v3065, %v3741
        %v3743 = vpop.f32.mrb[0].mxu0
        %v3744 = vpop.f32.mrb[0].mxu0
        %v3745 = vadd.f32 %v3065, %v3744
        %v3746 = vpop.f32.mrb[0].mxu0
        %3747 = vmatprep.mubr.bf16.mxu0 0
        %3748 = vmatmul.mubr.bf16.gmra.mrb[0].mxu0 %v3254
        %v3749 = vpop.f32.mrb[0].mxu0
        %v3750 = vadd.f32 %v3065, %v3749
        %v3751 = vpop.f32.mrb[0].mxu0
        %v3752 = vpop.f32.mrb[0].mxu0
        %v3753 = vadd.f32 %v3065, %v3752
        %v3754 = vpop.f32.mrb[0].mxu0
        %3755 = vmatprep.mubr.bf16.mxu0 0
        %3756 = vmatmul.mubr.bf16.gmra.mrb[0].mxu0 %v3257
        %v3757 = vpop.f32.mrb[0].mxu0
        %v3758 = vadd.f32 %v3065, %v3757
        %v3759 = vpop.f32.mrb[0].mxu0
        %v3760 = vpop.f32.mrb[0].mxu0
        %v3761 = vadd.f32 %v3065, %v3760
        %v3762 = vpop.f32.mrb[0].mxu0
        %3763 = vmatprep.mubr.bf16.mxu0 0
        %3764 = vmatmul.mubr.bf16.gmra.mrb[0].mxu0 %v3260
        %v3765 = vpop.f32.mrb[0].mxu0
        %v3766 = vadd.f32 %v3065, %v3765
        %v3767 = vpop.f32.mrb[0].mxu0
        %v3768 = vpop.f32.mrb[0].mxu0
        %v3769 = vadd.f32 %v3065, %v3768
        %v3770 = vpop.f32.mrb[0].mxu0
        %3771 = vmatprep.mubr.bf16.mxu0 0
        %3772 = vmatmul.mubr.bf16.gmra.mrb[0].mxu0 %v3263
        %v3773 = vpop.f32.mrb[0].mxu0
        %v3774 = vadd.f32 %v3065, %v3773
        %v3775 = vpop.f32.mrb[0].mxu0
        %v3776 = vpop.f32.mrb[0].mxu0
        %v3777 = vadd.f32 %v3065, %v3776
        %v3778 = vpop.f32.mrb[0].mxu0
        %3779 = vmatprep.mubr.bf16.mxu0 0
        %3780 = vmatmul.mubr.bf16.gmra.mrb[0].mxu0 %v3266
        %v3781 = vpop.f32.mrb[0].mxu0
        %v3782 = vadd.f32 %v3065, %v3781
        %v3783 = vpop.f32.mrb[0].mxu0
        %v3784 = vpop.f32.mrb[0].mxu0
        %v3785 = vadd.f32 %v3065, %v3784
        %v3786 = vpop.f32.mrb[0].mxu0
        %3787 = vmatprep.mubr.bf16.mxu0 0
        %3788 = vmatmul.mubr.bf16.gmra.mrb[0].mxu0 %v3269
        %v3789 = vpop.f32.mrb[0].mxu0
        %v3790 = vadd.f32 %v3065, %v3789
        %v3791 = vpop.f32.mrb[0].mxu0
        %v3792 = vpop.f32.mrb[0].mxu0
        %v3793 = vadd.f32 %v3065, %v3792
        %v3794 = vpop.f32.mrb[0].mxu0
        %3795 = vmatprep.mubr.bf16.mxu0 0
        %3796 = vmatmul.mubr.bf16.gmra.mrb[0].mxu0 %v3272
        %v3797 = vpop.f32.mrb[0].mxu0
        %v3798 = vadd.f32 %v3065, %v3797
        %v3799 = vpop.f32.mrb[0].mxu0
        %v3800 = vpop.f32.mrb[0].mxu0
        %v3801 = vadd.f32 %v3065, %v3800
        %v3802 = vpop.f32.mrb[0].mxu0
        %3803 = vmatprep.mubr.bf16.mxu0 0
        %3804 = vmatmul.mubr.bf16.gmra.mrb[0].mxu0 %v3275
        %v3805 = vpop.f32.mrb[0].mxu0
        %v3806 = vadd.f32 %v3065, %v3805
        %v3807 = vpop.f32.mrb[0].mxu0
        %v3808 = vpop.f32.mrb[0].mxu0
        %v3809 = vadd.f32 %v3065, %v3808
        %v3810 = vpop.f32.mrb[0].mxu0
        %3811 = vmatprep.mubr.bf16.mxu0 0
        %3812 = vmatmul.mubr.bf16.gmra.mrb[0].mxu0 %v3278
        %v3813 = vpop.f32.mrb[0].mxu0
        %v3814 = vadd.f32 %v3065, %v3813
        %v3815 = vpop.f32.mrb[0].mxu0
        %v3816 = vpop.f32.mrb[0].mxu0
        %v3817 = vadd.f32 %v3065, %v3816
        %v3818 = vpop.f32.mrb[0].mxu0
        %3819 = vmatprep.mubr.bf16.mxu0 0
        %3820 = vmatmul.mubr.bf16.gmra.mrb[0].mxu0 %v3281
        %v3821 = vpop.f32.mrb[0].mxu0
        %v3822 = vadd.f32 %v3065, %v3821
        %v3823 = vpop.f32.mrb[0].mxu0
        %v3824 = vpop.f32.mrb[0].mxu0
        %v3825 = vadd.f32 %v3065, %v3824
        %v3826 = vpop.f32.mrb[0].mxu0
        %3827 = vdwg.mxu0
        %v3828 = vmul.f32 %v3318, 0.01
        %v3829 = vmul.f32 %v3321, 0.01
        %v3830 = vmul.f32 %v3326, 0.01
        %v3831 = vmul.f32 %v3329, 0.01
        %v3832 = vmul.f32 %v3334, 0.01
        %v3833 = vmul.f32 %v3337, 0.01
        %v3834 = vmul.f32 %v3342, 0.01
        %v3835 = vmul.f32 %v3345, 0.01
        %v3836 = vmul.f32 %v3350, 0.01
        %v3837 = vmul.f32 %v3353, 0.01
        %v3838 = vmul.f32 %v3358, 0.01
        %v3839 = vmul.f32 %v3361, 0.01
        %v3840 = vmul.f32 %v3366, 0.01
        %v3841 = vmul.f32 %v3369, 0.01
        %v3842 = vmul.f32 %v3374, 0.01
        %v3843 = vmul.f32 %v3377, 0.01
        %v3844 = vmul.f32 %v3382, 0.01
        %v3845 = vmul.f32 %v3385, 0.01
        %v3846 = vmul.f32 %v3390, 0.01
        %v3847 = vmul.f32 %v3393, 0.01
        %v3848 = vmul.f32 %v3398, 0.01
        %v3849 = vmul.f32 %v3401, 0.01
        %v3850 = vmul.f32 %v3406, 0.01
        %v3851 = vmul.f32 %v3409, 0.01
        %v3852 = vmul.f32 %v3414, 0.01
        %v3853 = vmul.f32 %v3417, 0.01
        %v3854 = vmul.f32 %v3422, 0.01
        %v3855 = vmul.f32 %v3425, 0.01
        %v3856 = vmul.f32 %v3430, 0.01
        %v3857 = vmul.f32 %v3433, 0.01
        %v3858 = vmul.f32 %v3438, 0.01
        %v3859 = vmul.f32 %v3441, 0.01
        %v3860 = vmul.f32 %v3446, 0.01
        %v3861 = vmul.f32 %v3449, 0.01
        %v3862 = vmul.f32 %v3454, 0.01
        %v3863 = vmul.f32 %v3457, 0.01
        %v3864 = vmul.f32 %v3462, 0.01
        %v3865 = vmul.f32 %v3465, 0.01
        %v3866 = vmul.f32 %v3470, 0.01
        %v3867 = vmul.f32 %v3473, 0.01
        %v3868 = vmul.f32 %v3478, 0.01
        %v3869 = vmul.f32 %v3481, 0.01
        %v3870 = vmul.f32 %v3486, 0.01
        %v3871 = vmul.f32 %v3489, 0.01
        %v3872 = vmul.f32 %v3494, 0.01
        %v3873 = vmul.f32 %v3497, 0.01
        %v3874 = vmul.f32 %v3502, 0.01
        %v3875 = vmul.f32 %v3505, 0.01
        %v3876 = vmul.f32 %v3510, 0.01
        %v3877 = vmul.f32 %v3513, 0.01
        %v3878 = vmul.f32 %v3518, 0.01
        %v3879 = vmul.f32 %v3521, 0.01
        %v3880 = vmul.f32 %v3526, 0.01
        %v3881 = vmul.f32 %v3529, 0.01
        %v3882 = vmul.f32 %v3534, 0.01
        %v3883 = vmul.f32 %v3537, 0.01
        %v3884 = vmul.f32 %v3542, 0.01
        %v3885 = vmul.f32 %v3545, 0.01
        %v3886 = vmul.f32 %v3550, 0.01
        %v3887 = vmul.f32 %v3553, 0.01
        %v3888 = vmul.f32 %v3558, 0.01
        %v3889 = vmul.f32 %v3561, 0.01
        %v3890 = vmul.f32 %v3566, 0.01
        %v3891 = vmul.f32 %v3569, 0.01
        %v3892 = vmul.f32 %v3574, 0.01
        %v3893 = vmul.f32 %v3577, 0.01
        %v3894 = vmul.f32 %v3582, 0.01
        %v3895 = vmul.f32 %v3585, 0.01
        %v3896 = vmul.f32 %v3590, 0.01
        %v3897 = vmul.f32 %v3593, 0.01
        %v3898 = vmul.f32 %v3598, 0.01
        %v3899 = vmul.f32 %v3601, 0.01
        %v3900 = vmul.f32 %v3606, 0.01
        %v3901 = vmul.f32 %v3609, 0.01
        %v3902 = vmul.f32 %v3614, 0.01
        %v3903 = vmul.f32 %v3617, 0.01
        %v3904 = vmul.f32 %v3622, 0.01
        %v3905 = vmul.f32 %v3625, 0.01
        %v3906 = vmul.f32 %v3630, 0.01
        %v3907 = vmul.f32 %v3633, 0.01
        %v3908 = vmul.f32 %v3638, 0.01
        %v3909 = vmul.f32 %v3641, 0.01
        %v3910 = vmul.f32 %v3646, 0.01
        %v3911 = vmul.f32 %v3649, 0.01
        %v3912 = vmul.f32 %v3654, 0.01
        %v3913 = vmul.f32 %v3657, 0.01
        %v3914 = vmul.f32 %v3662, 0.01
        %v3915 = vmul.f32 %v3665, 0.01
        %v3916 = vmul.f32 %v3670, 0.01
        %v3917 = vmul.f32 %v3673, 0.01
        %v3918 = vmul.f32 %v3678, 0.01
        %v3919 = vmul.f32 %v3681, 0.01
        %v3920 = vmul.f32 %v3686, 0.01
        %v3921 = vmul.f32 %v3689, 0.01
        %v3922 = vmul.f32 %v3694, 0.01
        %v3923 = vmul.f32 %v3697, 0.01
        %v3924 = vmul.f32 %v3702, 0.01
        %v3925 = vmul.f32 %v3705, 0.01
        %v3926 = vmul.f32 %v3710, 0.01
        %v3927 = vmul.f32 %v3713, 0.01
        %v3928 = vmul.f32 %v3718, 0.01
        %v3929 = vmul.f32 %v3721, 0.01
        %v3930 = vmul.f32 %v3726, 0.01
        %v3931 = vmul.f32 %v3729, 0.01
        %v3932 = vmul.f32 %v3734, 0.01
        %v3933 = vmul.f32 %v3737, 0.01
        %v3934 = vmul.f32 %v3742, 0.01
        %v3935 = vmul.f32 %v3745, 0.01
        %v3936 = vmul.f32 %v3750, 0.01
        %v3937 = vmul.f32 %v3753, 0.01
        %v3938 = vmul.f32 %v3758, 0.01
        %v3939 = vmul.f32 %v3761, 0.01
        %v3940 = vmul.f32 %v3766, 0.01
        %v3941 = vmul.f32 %v3769, 0.01
        %v3942 = vmul.f32 %v3774, 0.01
        %v3943 = vmul.f32 %v3777, 0.01
        %v3944 = vmul.f32 %v3782, 0.01
        %v3945 = vmul.f32 %v3785, 0.01
        %v3946 = vmul.f32 %v3790, 0.01
        %v3947 = vmul.f32 %v3793, 0.01
        %v3948 = vmul.f32 %v3798, 0.01
        %v3949 = vmul.f32 %v3801, 0.01
        %v3950 = vmul.f32 %v3806, 0.01
        %v3951 = vmul.f32 %v3809, 0.01
        %v3952 = vmul.f32 %v3814, 0.01
        %v3953 = vmul.f32 %v3817, 0.01
        %v3954 = vmul.f32 %v3822, 0.01
        %v3955 = vmul.f32 %v3825, 0.01
        %v3956 = vmax.f32 %v3318, %v3828
        %v3957 = vmax.f32 %v3321, %v3829
        %v3958 = vmax.f32 %v3326, %v3830
        %v3959 = vmax.f32 %v3329, %v3831
        %v3960 = vmax.f32 %v3334, %v3832
        %v3961 = vmax.f32 %v3337, %v3833
        %v3962 = vmax.f32 %v3342, %v3834
        %v3963 = vmax.f32 %v3345, %v3835
        %v3964 = vmax.f32 %v3350, %v3836
        %v3965 = vmax.f32 %v3353, %v3837
        %v3966 = vmax.f32 %v3358, %v3838
        %v3967 = vmax.f32 %v3361, %v3839
        %v3968 = vmax.f32 %v3366, %v3840
        %v3969 = vmax.f32 %v3369, %v3841
        %v3970 = vmax.f32 %v3374, %v3842
        %v3971 = vmax.f32 %v3377, %v3843
        %v3972 = vmax.f32 %v3382, %v3844
        %v3973 = vmax.f32 %v3385, %v3845
        %v3974 = vmax.f32 %v3390, %v3846
        %v3975 = vmax.f32 %v3393, %v3847
        %v3976 = vmax.f32 %v3398, %v3848
        %v3977 = vmax.f32 %v3401, %v3849
        %v3978 = vmax.f32 %v3406, %v3850
        %v3979 = vmax.f32 %v3409, %v3851
        %v3980 = vmax.f32 %v3414, %v3852
        %v3981 = vmax.f32 %v3417, %v3853
        %v3982 = vmax.f32 %v3422, %v3854
        %v3983 = vmax.f32 %v3425, %v3855
        %v3984 = vmax.f32 %v3430, %v3856
        %v3985 = vmax.f32 %v3433, %v3857
        %v3986 = vmax.f32 %v3438, %v3858
        %v3987 = vmax.f32 %v3441, %v3859
        %v3988 = vmax.f32 %v3446, %v3860
        %v3989 = vmax.f32 %v3449, %v3861
        %v3990 = vmax.f32 %v3454, %v3862
        %v3991 = vmax.f32 %v3457, %v3863
        %v3992 = vmax.f32 %v3462, %v3864
        %v3993 = vmax.f32 %v3465, %v3865
        %v3994 = vmax.f32 %v3470, %v3866
        %v3995 = vmax.f32 %v3473, %v3867
        %v3996 = vmax.f32 %v3478, %v3868
        %v3997 = vmax.f32 %v3481, %v3869
        %v3998 = vmax.f32 %v3486, %v3870
        %v3999 = vmax.f32 %v3489, %v3871
        %v4000 = vmax.f32 %v3494, %v3872
        %v4001 = vmax.f32 %v3497, %v3873
        %v4002 = vmax.f32 %v3502, %v3874
        %v4003 = vmax.f32 %v3505, %v3875
        %v4004 = vmax.f32 %v3510, %v3876
        %v4005 = vmax.f32 %v3513, %v3877
        %v4006 = vmax.f32 %v3518, %v3878
        %v4007 = vmax.f32 %v3521, %v3879
        %v4008 = vmax.f32 %v3526, %v3880
        %v4009 = vmax.f32 %v3529, %v3881
        %v4010 = vmax.f32 %v3534, %v3882
        %v4011 = vmax.f32 %v3537, %v3883
        %v4012 = vmax.f32 %v3542, %v3884
        %v4013 = vmax.f32 %v3545, %v3885
        %v4014 = vmax.f32 %v3550, %v3886
        %v4015 = vmax.f32 %v3553, %v3887
        %v4016 = vmax.f32 %v3558, %v3888
        %v4017 = vmax.f32 %v3561, %v3889
        %v4018 = vmax.f32 %v3566, %v3890
        %v4019 = vmax.f32 %v3569, %v3891
        %v4020 = vmax.f32 %v3574, %v3892
        %v4021 = vmax.f32 %v3577, %v3893
        %v4022 = vmax.f32 %v3582, %v3894
        %v4023 = vmax.f32 %v3585, %v3895
        %v4024 = vmax.f32 %v3590, %v3896
        %v4025 = vmax.f32 %v3593, %v3897
        %v4026 = vmax.f32 %v3598, %v3898
        %v4027 = vmax.f32 %v3601, %v3899
        %v4028 = vmax.f32 %v3606, %v3900
        %v4029 = vmax.f32 %v3609, %v3901
        %v4030 = vmax.f32 %v3614, %v3902
        %v4031 = vmax.f32 %v3617, %v3903
        %v4032 = vmax.f32 %v3622, %v3904
        %v4033 = vmax.f32 %v3625, %v3905
        %v4034 = vmax.f32 %v3630, %v3906
        %v4035 = vmax.f32 %v3633, %v3907
        %v4036 = vmax.f32 %v3638, %v3908
        %v4037 = vmax.f32 %v3641, %v3909
        %v4038 = vmax.f32 %v3646, %v3910
        %v4039 = vmax.f32 %v3649, %v3911
        %v4040 = vmax.f32 %v3654, %v3912
        %v4041 = vmax.f32 %v3657, %v3913
        %v4042 = vmax.f32 %v3662, %v3914
        %v4043 = vmax.f32 %v3665, %v3915
        %v4044 = vmax.f32 %v3670, %v3916
        %v4045 = vmax.f32 %v3673, %v3917
        %v4046 = vmax.f32 %v3678, %v3918
        %v4047 = vmax.f32 %v3681, %v3919
        %v4048 = vmax.f32 %v3686, %v3920
        %v4049 = vmax.f32 %v3689, %v3921
        %v4050 = vmax.f32 %v3694, %v3922
        %v4051 = vmax.f32 %v3697, %v3923
        %v4052 = vmax.f32 %v3702, %v3924
        %v4053 = vmax.f32 %v3705, %v3925
        %v4054 = vmax.f32 %v3710, %v3926
        %v4055 = vmax.f32 %v3713, %v3927
        %v4056 = vmax.f32 %v3718, %v3928
        %v4057 = vmax.f32 %v3721, %v3929
        %v4058 = vmax.f32 %v3726, %v3930
        %v4059 = vmax.f32 %v3729, %v3931
        %v4060 = vmax.f32 %v3734, %v3932
        %v4061 = vmax.f32 %v3737, %v3933
        %v4062 = vmax.f32 %v3742, %v3934
        %v4063 = vmax.f32 %v3745, %v3935
        %v4064 = vmax.f32 %v3750, %v3936
        %v4065 = vmax.f32 %v3753, %v3937
        %v4066 = vmax.f32 %v3758, %v3938
        %v4067 = vmax.f32 %v3761, %v3939
        %v4068 = vmax.f32 %v3766, %v3940
        %v4069 = vmax.f32 %v3769, %v3941
        %v4070 = vmax.f32 %v3774, %v3942
        %v4071 = vmax.f32 %v3777, %v3943
        %v4072 = vmax.f32 %v3782, %v3944
        %v4073 = vmax.f32 %v3785, %v3945
        %v4074 = vmax.f32 %v3790, %v3946
        %v4075 = vmax.f32 %v3793, %v3947
        %v4076 = vmax.f32 %v3798, %v3948
        %v4077 = vmax.f32 %v3801, %v3949
        %v4078 = vmax.f32 %v3806, %v3950
        %v4079 = vmax.f32 %v3809, %v3951
        %v4080 = vmax.f32 %v3814, %v3952
        %v4081 = vmax.f32 %v3817, %v3953
        %v4082 = vmax.f32 %v3822, %v3954
        %v4083 = vmax.f32 %v3825, %v3955
        %v4084 = vpack.c.bf16 %v3957, %v3956
        %v4085 = vpack.c.bf16 %v3959, %v3958
        %v4086 = vpack.c.bf16 %v3961, %v3960
        %v4087 = vpack.c.bf16 %v3963, %v3962
        %v4088 = vpack.c.bf16 %v3965, %v3964
        %v4089 = vpack.c.bf16 %v3967, %v3966
        %v4090 = vpack.c.bf16 %v3969, %v3968
        %v4091 = vpack.c.bf16 %v3971, %v3970
        %v4092 = vpack.c.bf16 %v3973, %v3972
        %v4093 = vpack.c.bf16 %v3975, %v3974
        %v4094 = vpack.c.bf16 %v3977, %v3976
        %v4095 = vpack.c.bf16 %v3979, %v3978
        %v4096 = vpack.c.bf16 %v3981, %v3980
        %v4097 = vpack.c.bf16 %v3983, %v3982
        %v4098 = vpack.c.bf16 %v3985, %v3984
        %v4099 = vpack.c.bf16 %v3987, %v3986
        %v4100 = vpack.c.bf16 %v3989, %v3988
        %v4101 = vpack.c.bf16 %v3991, %v3990
        %v4102 = vpack.c.bf16 %v3993, %v3992
        %v4103 = vpack.c.bf16 %v3995, %v3994
        %v4104 = vpack.c.bf16 %v3997, %v3996
        %v4105 = vpack.c.bf16 %v3999, %v3998
        %v4106 = vpack.c.bf16 %v4001, %v4000
        %v4107 = vpack.c.bf16 %v4003, %v4002
        %v4108 = vpack.c.bf16 %v4005, %v4004
        %v4109 = vpack.c.bf16 %v4007, %v4006
        %v4110 = vpack.c.bf16 %v4009, %v4008
        %v4111 = vpack.c.bf16 %v4011, %v4010
        %v4112 = vpack.c.bf16 %v4013, %v4012
        %v4113 = vpack.c.bf16 %v4015, %v4014
        %v4114 = vpack.c.bf16 %v4017, %v4016
        %v4115 = vpack.c.bf16 %v4019, %v4018
        %v4116 = vpack.c.bf16 %v4021, %v4020
        %v4117 = vpack.c.bf16 %v4023, %v4022
        %v4118 = vpack.c.bf16 %v4025, %v4024
        %v4119 = vpack.c.bf16 %v4027, %v4026
        %v4120 = vpack.c.bf16 %v4029, %v4028
        %v4121 = vpack.c.bf16 %v4031, %v4030
        %v4122 = vpack.c.bf16 %v4033, %v4032
        %v4123 = vpack.c.bf16 %v4035, %v4034
        %v4124 = vpack.c.bf16 %v4037, %v4036
        %v4125 = vpack.c.bf16 %v4039, %v4038
        %v4126 = vpack.c.bf16 %v4041, %v4040
        %v4127 = vpack.c.bf16 %v4043, %v4042
        %v4128 = vpack.c.bf16 %v4045, %v4044
        %v4129 = vpack.c.bf16 %v4047, %v4046
        %v4130 = vpack.c.bf16 %v4049, %v4048
        %v4131 = vpack.c.bf16 %v4051, %v4050
        %v4132 = vpack.c.bf16 %v4053, %v4052
        %v4133 = vpack.c.bf16 %v4055, %v4054
        %v4134 = vpack.c.bf16 %v4057, %v4056
        %v4135 = vpack.c.bf16 %v4059, %v4058
        %v4136 = vpack.c.bf16 %v4061, %v4060
        %v4137 = vpack.c.bf16 %v4063, %v4062
        %v4138 = vpack.c.bf16 %v4065, %v4064
        %v4139 = vpack.c.bf16 %v4067, %v4066
        %v4140 = vpack.c.bf16 %v4069, %v4068
        %v4141 = vpack.c.bf16 %v4071, %v4070
        %v4142 = vpack.c.bf16 %v4073, %v4072
        %v4143 = vpack.c.bf16 %v4075, %v4074
        %v4144 = vpack.c.bf16 %v4077, %v4076
        %v4145 = vpack.c.bf16 %v4079, %v4078
        %v4146 = vpack.c.bf16 %v4081, %v4080
        %v4147 = vpack.c.bf16 %v4083, %v4082
        %v4148 = vld [vmem:[%s8] sm:$0xf]
        %v4149 = vld [vmem:[%s8 + $0x4] sm:$0xf]
        %v4150 = vld [vmem:[%s8 + $0x8] sm:$0xf]
        %v4151 = vld [vmem:[%s8 + $0xc] sm:$0xf]
        %v4152 = vld [vmem:[%s9] sm:$0x1]
        %v4154 = vlaneseq
        %v4155 = vshrl.u32 %v4154, 7
        %v4156 = vsub.s32 0, %v4155
        %v4157 = vrot.slane %v4152, %v4156
        %v4163 = vunpack.c.l.b16 %v4148
        %v4164 = vunpack.c.l.b16 %v4149
        %v4165 = vunpack.c.l.b16 %v4150
        %v4166 = vunpack.c.l.b16 %v4151
        %v4167 = vpack.c.b16 %v4164, %v4163
        %v4168 = vpack.c.b16 %v4166, %v4165
        %vm4171 = vcmask 261120
        %v4173 = vsel %vm4171, %v4084, 0
        %v4176 = vsel %vm4171, %v4085, 0
        %v4179 = vsel %vm4171, %v4086, 0
        %v4182 = vsel %vm4171, %v4087, 0
        %v4185 = vsel %vm4171, %v4088, 0
        %v4188 = vsel %vm4171, %v4089, 0
        %v4191 = vsel %vm4171, %v4090, 0
        %v4194 = vsel %vm4171, %v4091, 0
        %v4197 = vsel %vm4171, %v4092, 0
        %v4200 = vsel %vm4171, %v4093, 0
        %v4203 = vsel %vm4171, %v4094, 0
        %v4206 = vsel %vm4171, %v4095, 0
        %v4209 = vsel %vm4171, %v4096, 0
        %v4212 = vsel %vm4171, %v4097, 0
        %v4215 = vsel %vm4171, %v4098, 0
        %v4218 = vsel %vm4171, %v4099, 0
        %v4221 = vsel %vm4171, %v4100, 0
        %v4224 = vsel %vm4171, %v4101, 0
        %v4227 = vsel %vm4171, %v4102, 0
        %v4230 = vsel %vm4171, %v4103, 0
        %v4233 = vsel %vm4171, %v4104, 0
        %v4236 = vsel %vm4171, %v4105, 0
        %v4239 = vsel %vm4171, %v4106, 0
        %v4242 = vsel %vm4171, %v4107, 0
        %v4245 = vsel %vm4171, %v4108, 0
        %v4248 = vsel %vm4171, %v4109, 0
        %v4251 = vsel %vm4171, %v4110, 0
        %v4254 = vsel %vm4171, %v4111, 0
        %v4257 = vsel %vm4171, %v4112, 0
        %v4260 = vsel %vm4171, %v4113, 0
        %v4263 = vsel %vm4171, %v4114, 0
        %v4266 = vsel %vm4171, %v4115, 0
        %v4269 = vsel %vm4171, %v4116, 0
        %v4272 = vsel %vm4171, %v4117, 0
        %v4275 = vsel %vm4171, %v4118, 0
        %v4278 = vsel %vm4171, %v4119, 0
        %v4281 = vsel %vm4171, %v4120, 0
        %v4284 = vsel %vm4171, %v4121, 0
        %v4287 = vsel %vm4171, %v4122, 0
        %v4290 = vsel %vm4171, %v4123, 0
        %v4293 = vsel %vm4171, %v4124, 0
        %v4296 = vsel %vm4171, %v4125, 0
        %v4299 = vsel %vm4171, %v4126, 0
        %v4302 = vsel %vm4171, %v4127, 0
        %v4305 = vsel %vm4171, %v4128, 0
        %v4308 = vsel %vm4171, %v4129, 0
        %v4311 = vsel %vm4171, %v4130, 0
        %v4314 = vsel %vm4171, %v4131, 0
        %v4317 = vsel %vm4171, %v4132, 0
        %v4320 = vsel %vm4171, %v4133, 0
        %v4323 = vsel %vm4171, %v4134, 0
        %v4326 = vsel %vm4171, %v4135, 0
        %v4329 = vsel %vm4171, %v4136, 0
        %v4332 = vsel %vm4171, %v4137, 0
        %v4335 = vsel %vm4171, %v4138, 0
        %v4338 = vsel %vm4171, %v4139, 0
        %v4341 = vsel %vm4171, %v4140, 0
        %v4344 = vsel %vm4171, %v4141, 0
        %v4347 = vsel %vm4171, %v4142, 0
        %v4350 = vsel %vm4171, %v4143, 0
        %v4353 = vsel %vm4171, %v4144, 0
        %v4356 = vsel %vm4171, %v4145, 0
        %v4359 = vsel %vm4171, %v4146, 0
        %v4362 = vsel %vm4171, %v4147, 0
        %4364 = vmatprep.subr.bf16.mxu0 0
        %4365 = vmatpush1.bf16.msra.mxu0 %v4167
        %4366 = vmatprep.subr.bf16.mxu0 0
        %4367 = vmatpush1.bf16.msra.mxu0 %v4168
        %4368 = vmatprep.subr.bf16.mxu0 0
        %4369 = vmatpush1.bf16.msra.mxu0 0
        %4370 = vmatprep.subr.bf16.mxu0 0
        %4371 = vmatpush1.bf16.msra.mxu0 0
        %4372 = vmatprep.subr.bf16.mxu0 0
        %4373 = vmatpush1.bf16.msra.mxu0 0
        %4374 = vmatprep.subr.bf16.mxu0 0
        %4375 = vmatpush1.bf16.msra.mxu0 0
        %4376 = vmatprep.subr.bf16.mxu0 0
        %4377 = vmatpush1.bf16.msra.mxu0 0
        %4378 = vmatprep.subr.bf16.mxu0 0
        %4379 = vmatpush1.bf16.msra.mxu0 0
        %4380 = vmatprep.subr.bf16.mxu0 0
        %4381 = vmatpush1.bf16.msra.mxu0 0
        %4382 = vmatprep.subr.bf16.mxu0 0
        %4383 = vmatpush1.bf16.msra.mxu0 0
        %4384 = vmatprep.subr.bf16.mxu0 0
        %4385 = vmatpush1.bf16.msra.mxu0 0
        %4386 = vmatprep.subr.bf16.mxu0 0
        %4387 = vmatpush1.bf16.msra.mxu0 0
        %4388 = vmatprep.subr.bf16.mxu0 0
        %4389 = vmatpush1.bf16.msra.mxu0 0
        %4390 = vmatprep.subr.bf16.mxu0 0
        %4391 = vmatpush1.bf16.msra.mxu0 0
        %4392 = vmatprep.subr.bf16.mxu0 0
        %4393 = vmatpush1.bf16.msra.mxu0 0
        %4394 = vmatprep.subr.bf16.mxu0 0
        %4395 = vmatpush1.bf16.msra.mxu0 0
        %4396 = vmatprep.mubr.bf16.mxu0 0
        %4397 = vmatmul.mubr.bf16.gmra.mrb[0].mxu0 %v4173
        %v4398 = vpop.f32.mrb[0].mxu0
        %v4399 = vadd.f32 %v4157, %v4398
        %v4400 = vpop.f32.mrb[0].mxu0
        %v4401 = vpop.f32.mrb[0].mxu0
        %v4402 = vadd.f32 %v4157, %v4401
        %v4403 = vpop.f32.mrb[0].mxu0
        %4404 = vmatprep.mubr.bf16.mxu0 0
        %4405 = vmatmul.mubr.bf16.gmra.mrb[0].mxu0 %v4176
        %v4406 = vpop.f32.mrb[0].mxu0
        %v4407 = vadd.f32 %v4157, %v4406
        %v4408 = vpop.f32.mrb[0].mxu0
        %v4409 = vpop.f32.mrb[0].mxu0
        %v4410 = vadd.f32 %v4157, %v4409
        %v4411 = vpop.f32.mrb[0].mxu0
        %4412 = vmatprep.mubr.bf16.mxu0 0
        %4413 = vmatmul.mubr.bf16.gmra.mrb[0].mxu0 %v4179
        %v4414 = vpop.f32.mrb[0].mxu0
        %v4415 = vadd.f32 %v4157, %v4414
        %v4416 = vpop.f32.mrb[0].mxu0
        %v4417 = vpop.f32.mrb[0].mxu0
        %v4418 = vadd.f32 %v4157, %v4417
        %v4419 = vpop.f32.mrb[0].mxu0
        %4420 = vmatprep.mubr.bf16.mxu0 0
        %4421 = vmatmul.mubr.bf16.gmra.mrb[0].mxu0 %v4182
        %v4422 = vpop.f32.mrb[0].mxu0
        %v4423 = vadd.f32 %v4157, %v4422
        %v4424 = vpop.f32.mrb[0].mxu0
        %v4425 = vpop.f32.mrb[0].mxu0
        %v4426 = vadd.f32 %v4157, %v4425
        %v4427 = vpop.f32.mrb[0].mxu0
        %4428 = vmatprep.mubr.bf16.mxu0 0
        %4429 = vmatmul.mubr.bf16.gmra.mrb[0].mxu0 %v4185
        %v4430 = vpop.f32.mrb[0].mxu0
        %v4431 = vadd.f32 %v4157, %v4430
        %v4432 = vpop.f32.mrb[0].mxu0
        %v4433 = vpop.f32.mrb[0].mxu0
        %v4434 = vadd.f32 %v4157, %v4433
        %v4435 = vpop.f32.mrb[0].mxu0
        %4436 = vmatprep.mubr.bf16.mxu0 0
        %4437 = vmatmul.mubr.bf16.gmra.mrb[0].mxu0 %v4188
        %v4438 = vpop.f32.mrb[0].mxu0
        %v4439 = vadd.f32 %v4157, %v4438
        %v4440 = vpop.f32.mrb[0].mxu0
        %v4441 = vpop.f32.mrb[0].mxu0
        %v4442 = vadd.f32 %v4157, %v4441
        %v4443 = vpop.f32.mrb[0].mxu0
        %4444 = vmatprep.mubr.bf16.mxu0 0
        %4445 = vmatmul.mubr.bf16.gmra.mrb[0].mxu0 %v4191
        %v4446 = vpop.f32.mrb[0].mxu0
        %v4447 = vadd.f32 %v4157, %v4446
        %v4448 = vpop.f32.mrb[0].mxu0
        %v4449 = vpop.f32.mrb[0].mxu0
        %v4450 = vadd.f32 %v4157, %v4449
        %v4451 = vpop.f32.mrb[0].mxu0
        %4452 = vmatprep.mubr.bf16.mxu0 0
        %4453 = vmatmul.mubr.bf16.gmra.mrb[0].mxu0 %v4194
        %v4454 = vpop.f32.mrb[0].mxu0
        %v4455 = vadd.f32 %v4157, %v4454
        %v4456 = vpop.f32.mrb[0].mxu0
        %v4457 = vpop.f32.mrb[0].mxu0
        %v4458 = vadd.f32 %v4157, %v4457
        %v4459 = vpop.f32.mrb[0].mxu0
        %4460 = vmatprep.mubr.bf16.mxu0 0
        %4461 = vmatmul.mubr.bf16.gmra.mrb[0].mxu0 %v4197
        %v4462 = vpop.f32.mrb[0].mxu0
        %v4463 = vadd.f32 %v4157, %v4462
        %v4464 = vpop.f32.mrb[0].mxu0
        %v4465 = vpop.f32.mrb[0].mxu0
        %v4466 = vadd.f32 %v4157, %v4465
        %v4467 = vpop.f32.mrb[0].mxu0
        %4468 = vmatprep.mubr.bf16.mxu0 0
        %4469 = vmatmul.mubr.bf16.gmra.mrb[0].mxu0 %v4200
        %v4470 = vpop.f32.mrb[0].mxu0
        %v4471 = vadd.f32 %v4157, %v4470
        %v4472 = vpop.f32.mrb[0].mxu0
        %v4473 = vpop.f32.mrb[0].mxu0
        %v4474 = vadd.f32 %v4157, %v4473
        %v4475 = vpop.f32.mrb[0].mxu0
        %4476 = vmatprep.mubr.bf16.mxu0 0
        %4477 = vmatmul.mubr.bf16.gmra.mrb[0].mxu0 %v4203
        %v4478 = vpop.f32.mrb[0].mxu0
        %v4479 = vadd.f32 %v4157, %v4478
        %v4480 = vpop.f32.mrb[0].mxu0
        %v4481 = vpop.f32.mrb[0].mxu0
        %v4482 = vadd.f32 %v4157, %v4481
        %v4483 = vpop.f32.mrb[0].mxu0
        %4484 = vmatprep.mubr.bf16.mxu0 0
        %4485 = vmatmul.mubr.bf16.gmra.mrb[0].mxu0 %v4206
        %v4486 = vpop.f32.mrb[0].mxu0
        %v4487 = vadd.f32 %v4157, %v4486
        %v4488 = vpop.f32.mrb[0].mxu0
        %v4489 = vpop.f32.mrb[0].mxu0
        %v4490 = vadd.f32 %v4157, %v4489
        %v4491 = vpop.f32.mrb[0].mxu0
        %4492 = vmatprep.mubr.bf16.mxu0 0
        %4493 = vmatmul.mubr.bf16.gmra.mrb[0].mxu0 %v4209
        %v4494 = vpop.f32.mrb[0].mxu0
        %v4495 = vadd.f32 %v4157, %v4494
        %v4496 = vpop.f32.mrb[0].mxu0
        %v4497 = vpop.f32.mrb[0].mxu0
        %v4498 = vadd.f32 %v4157, %v4497
        %v4499 = vpop.f32.mrb[0].mxu0
        %4500 = vmatprep.mubr.bf16.mxu0 0
        %4501 = vmatmul.mubr.bf16.gmra.mrb[0].mxu0 %v4212
        %v4502 = vpop.f32.mrb[0].mxu0
        %v4503 = vadd.f32 %v4157, %v4502
        %v4504 = vpop.f32.mrb[0].mxu0
        %v4505 = vpop.f32.mrb[0].mxu0
        %v4506 = vadd.f32 %v4157, %v4505
        %v4507 = vpop.f32.mrb[0].mxu0
        %4508 = vmatprep.mubr.bf16.mxu0 0
        %4509 = vmatmul.mubr.bf16.gmra.mrb[0].mxu0 %v4215
        %v4510 = vpop.f32.mrb[0].mxu0
        %v4511 = vadd.f32 %v4157, %v4510
        %v4512 = vpop.f32.mrb[0].mxu0
        %v4513 = vpop.f32.mrb[0].mxu0
        %v4514 = vadd.f32 %v4157, %v4513
        %v4515 = vpop.f32.mrb[0].mxu0
        %4516 = vmatprep.mubr.bf16.mxu0 0
        %4517 = vmatmul.mubr.bf16.gmra.mrb[0].mxu0 %v4218
        %v4518 = vpop.f32.mrb[0].mxu0
        %v4519 = vadd.f32 %v4157, %v4518
        %v4520 = vpop.f32.mrb[0].mxu0
        %v4521 = vpop.f32.mrb[0].mxu0
        %v4522 = vadd.f32 %v4157, %v4521
        %v4523 = vpop.f32.mrb[0].mxu0
        %4524 = vmatprep.mubr.bf16.mxu0 0
        %4525 = vmatmul.mubr.bf16.gmra.mrb[0].mxu0 %v4221
        %v4526 = vpop.f32.mrb[0].mxu0
        %v4527 = vadd.f32 %v4157, %v4526
        %v4528 = vpop.f32.mrb[0].mxu0
        %v4529 = vpop.f32.mrb[0].mxu0
        %v4530 = vadd.f32 %v4157, %v4529
        %v4531 = vpop.f32.mrb[0].mxu0
        %4532 = vmatprep.mubr.bf16.mxu0 0
        %4533 = vmatmul.mubr.bf16.gmra.mrb[0].mxu0 %v4224
        %v4534 = vpop.f32.mrb[0].mxu0
        %v4535 = vadd.f32 %v4157, %v4534
        %v4536 = vpop.f32.mrb[0].mxu0
        %v4537 = vpop.f32.mrb[0].mxu0
        %v4538 = vadd.f32 %v4157, %v4537
        %v4539 = vpop.f32.mrb[0].mxu0
        %4540 = vmatprep.mubr.bf16.mxu0 0
        %4541 = vmatmul.mubr.bf16.gmra.mrb[0].mxu0 %v4227
        %v4542 = vpop.f32.mrb[0].mxu0
        %v4543 = vadd.f32 %v4157, %v4542
        %v4544 = vpop.f32.mrb[0].mxu0
        %v4545 = vpop.f32.mrb[0].mxu0
        %v4546 = vadd.f32 %v4157, %v4545
        %v4547 = vpop.f32.mrb[0].mxu0
        %4548 = vmatprep.mubr.bf16.mxu0 0
        %4549 = vmatmul.mubr.bf16.gmra.mrb[0].mxu0 %v4230
        %v4550 = vpop.f32.mrb[0].mxu0
        %v4551 = vadd.f32 %v4157, %v4550
        %v4552 = vpop.f32.mrb[0].mxu0
        %v4553 = vpop.f32.mrb[0].mxu0
        %v4554 = vadd.f32 %v4157, %v4553
        %v4555 = vpop.f32.mrb[0].mxu0
        %4556 = vmatprep.mubr.bf16.mxu0 0
        %4557 = vmatmul.mubr.bf16.gmra.mrb[0].mxu0 %v4233
        %v4558 = vpop.f32.mrb[0].mxu0
        %v4559 = vadd.f32 %v4157, %v4558
        %v4560 = vpop.f32.mrb[0].mxu0
        %v4561 = vpop.f32.mrb[0].mxu0
        %v4562 = vadd.f32 %v4157, %v4561
        %v4563 = vpop.f32.mrb[0].mxu0
        %4564 = vmatprep.mubr.bf16.mxu0 0
        %4565 = vmatmul.mubr.bf16.gmra.mrb[0].mxu0 %v4236
        %v4566 = vpop.f32.mrb[0].mxu0
        %v4567 = vadd.f32 %v4157, %v4566
        %v4568 = vpop.f32.mrb[0].mxu0
        %v4569 = vpop.f32.mrb[0].mxu0
        %v4570 = vadd.f32 %v4157, %v4569
        %v4571 = vpop.f32.mrb[0].mxu0
        %4572 = vmatprep.mubr.bf16.mxu0 0
        %4573 = vmatmul.mubr.bf16.gmra.mrb[0].mxu0 %v4239
        %v4574 = vpop.f32.mrb[0].mxu0
        %v4575 = vadd.f32 %v4157, %v4574
        %v4576 = vpop.f32.mrb[0].mxu0
        %v4577 = vpop.f32.mrb[0].mxu0
        %v4578 = vadd.f32 %v4157, %v4577
        %v4579 = vpop.f32.mrb[0].mxu0
        %4580 = vmatprep.mubr.bf16.mxu0 0
        %4581 = vmatmul.mubr.bf16.gmra.mrb[0].mxu0 %v4242
        %v4582 = vpop.f32.mrb[0].mxu0
        %v4583 = vadd.f32 %v4157, %v4582
        %v4584 = vpop.f32.mrb[0].mxu0
        %v4585 = vpop.f32.mrb[0].mxu0
        %v4586 = vadd.f32 %v4157, %v4585
        %v4587 = vpop.f32.mrb[0].mxu0
        %4588 = vmatprep.mubr.bf16.mxu0 0
        %4589 = vmatmul.mubr.bf16.gmra.mrb[0].mxu0 %v4245
        %v4590 = vpop.f32.mrb[0].mxu0
        %v4591 = vadd.f32 %v4157, %v4590
        %v4592 = vpop.f32.mrb[0].mxu0
        %v4593 = vpop.f32.mrb[0].mxu0
        %v4594 = vadd.f32 %v4157, %v4593
        %v4595 = vpop.f32.mrb[0].mxu0
        %4596 = vmatprep.mubr.bf16.mxu0 0
        %4597 = vmatmul.mubr.bf16.gmra.mrb[0].mxu0 %v4248
        %v4598 = vpop.f32.mrb[0].mxu0
        %v4599 = vadd.f32 %v4157, %v4598
        %v4600 = vpop.f32.mrb[0].mxu0
        %v4601 = vpop.f32.mrb[0].mxu0
        %v4602 = vadd.f32 %v4157, %v4601
        %v4603 = vpop.f32.mrb[0].mxu0
        %4604 = vmatprep.mubr.bf16.mxu0 0
        %4605 = vmatmul.mubr.bf16.gmra.mrb[0].mxu0 %v4251
        %v4606 = vpop.f32.mrb[0].mxu0
        %v4607 = vadd.f32 %v4157, %v4606
        %v4608 = vpop.f32.mrb[0].mxu0
        %v4609 = vpop.f32.mrb[0].mxu0
        %v4610 = vadd.f32 %v4157, %v4609
        %v4611 = vpop.f32.mrb[0].mxu0
        %4612 = vmatprep.mubr.bf16.mxu0 0
        %4613 = vmatmul.mubr.bf16.gmra.mrb[0].mxu0 %v4254
        %v4614 = vpop.f32.mrb[0].mxu0
        %v4615 = vadd.f32 %v4157, %v4614
        %v4616 = vpop.f32.mrb[0].mxu0
        %v4617 = vpop.f32.mrb[0].mxu0
        %v4618 = vadd.f32 %v4157, %v4617
        %v4619 = vpop.f32.mrb[0].mxu0
        %4620 = vmatprep.mubr.bf16.mxu0 0
        %4621 = vmatmul.mubr.bf16.gmra.mrb[0].mxu0 %v4257
        %v4622 = vpop.f32.mrb[0].mxu0
        %v4623 = vadd.f32 %v4157, %v4622
        %v4624 = vpop.f32.mrb[0].mxu0
        %v4625 = vpop.f32.mrb[0].mxu0
        %v4626 = vadd.f32 %v4157, %v4625
        %v4627 = vpop.f32.mrb[0].mxu0
        %4628 = vmatprep.mubr.bf16.mxu0 0
        %4629 = vmatmul.mubr.bf16.gmra.mrb[0].mxu0 %v4260
        %v4630 = vpop.f32.mrb[0].mxu0
        %v4631 = vadd.f32 %v4157, %v4630
        %v4632 = vpop.f32.mrb[0].mxu0
        %v4633 = vpop.f32.mrb[0].mxu0
        %v4634 = vadd.f32 %v4157, %v4633
        %v4635 = vpop.f32.mrb[0].mxu0
        %4636 = vmatprep.mubr.bf16.mxu0 0
        %4637 = vmatmul.mubr.bf16.gmra.mrb[0].mxu0 %v4263
        %v4638 = vpop.f32.mrb[0].mxu0
        %v4639 = vadd.f32 %v4157, %v4638
        %v4640 = vpop.f32.mrb[0].mxu0
        %v4641 = vpop.f32.mrb[0].mxu0
        %v4642 = vadd.f32 %v4157, %v4641
        %v4643 = vpop.f32.mrb[0].mxu0
        %4644 = vmatprep.mubr.bf16.mxu0 0
        %4645 = vmatmul.mubr.bf16.gmra.mrb[0].mxu0 %v4266
        %v4646 = vpop.f32.mrb[0].mxu0
        %v4647 = vadd.f32 %v4157, %v4646
        %v4648 = vpop.f32.mrb[0].mxu0
        %v4649 = vpop.f32.mrb[0].mxu0
        %v4650 = vadd.f32 %v4157, %v4649
        %v4651 = vpop.f32.mrb[0].mxu0
        %4652 = vmatprep.mubr.bf16.mxu0 0
        %4653 = vmatmul.mubr.bf16.gmra.mrb[0].mxu0 %v4269
        %v4654 = vpop.f32.mrb[0].mxu0
        %v4655 = vadd.f32 %v4157, %v4654
        %v4656 = vpop.f32.mrb[0].mxu0
        %v4657 = vpop.f32.mrb[0].mxu0
        %v4658 = vadd.f32 %v4157, %v4657
        %v4659 = vpop.f32.mrb[0].mxu0
        %4660 = vmatprep.mubr.bf16.mxu0 0
        %4661 = vmatmul.mubr.bf16.gmra.mrb[0].mxu0 %v4272
        %v4662 = vpop.f32.mrb[0].mxu0
        %v4663 = vadd.f32 %v4157, %v4662
        %v4664 = vpop.f32.mrb[0].mxu0
        %v4665 = vpop.f32.mrb[0].mxu0
        %v4666 = vadd.f32 %v4157, %v4665
        %v4667 = vpop.f32.mrb[0].mxu0
        %4668 = vmatprep.mubr.bf16.mxu0 0
        %4669 = vmatmul.mubr.bf16.gmra.mrb[0].mxu0 %v4275
        %v4670 = vpop.f32.mrb[0].mxu0
        %v4671 = vadd.f32 %v4157, %v4670
        %v4672 = vpop.f32.mrb[0].mxu0
        %v4673 = vpop.f32.mrb[0].mxu0
        %v4674 = vadd.f32 %v4157, %v4673
        %v4675 = vpop.f32.mrb[0].mxu0
        %4676 = vmatprep.mubr.bf16.mxu0 0
        %4677 = vmatmul.mubr.bf16.gmra.mrb[0].mxu0 %v4278
        %v4678 = vpop.f32.mrb[0].mxu0
        %v4679 = vadd.f32 %v4157, %v4678
        %v4680 = vpop.f32.mrb[0].mxu0
        %v4681 = vpop.f32.mrb[0].mxu0
        %v4682 = vadd.f32 %v4157, %v4681
        %v4683 = vpop.f32.mrb[0].mxu0
        %4684 = vmatprep.mubr.bf16.mxu0 0
        %4685 = vmatmul.mubr.bf16.gmra.mrb[0].mxu0 %v4281
        %v4686 = vpop.f32.mrb[0].mxu0
        %v4687 = vadd.f32 %v4157, %v4686
        %v4688 = vpop.f32.mrb[0].mxu0
        %v4689 = vpop.f32.mrb[0].mxu0
        %v4690 = vadd.f32 %v4157, %v4689
        %v4691 = vpop.f32.mrb[0].mxu0
        %4692 = vmatprep.mubr.bf16.mxu0 0
        %4693 = vmatmul.mubr.bf16.gmra.mrb[0].mxu0 %v4284
        %v4694 = vpop.f32.mrb[0].mxu0
        %v4695 = vadd.f32 %v4157, %v4694
        %v4696 = vpop.f32.mrb[0].mxu0
        %v4697 = vpop.f32.mrb[0].mxu0
        %v4698 = vadd.f32 %v4157, %v4697
        %v4699 = vpop.f32.mrb[0].mxu0
        %4700 = vmatprep.mubr.bf16.mxu0 0
        %4701 = vmatmul.mubr.bf16.gmra.mrb[0].mxu0 %v4287
        %v4702 = vpop.f32.mrb[0].mxu0
        %v4703 = vadd.f32 %v4157, %v4702
        %v4704 = vpop.f32.mrb[0].mxu0
        %v4705 = vpop.f32.mrb[0].mxu0
        %v4706 = vadd.f32 %v4157, %v4705
        %v4707 = vpop.f32.mrb[0].mxu0
        %4708 = vmatprep.mubr.bf16.mxu0 0
        %4709 = vmatmul.mubr.bf16.gmra.mrb[0].mxu0 %v4290
        %v4710 = vpop.f32.mrb[0].mxu0
        %v4711 = vadd.f32 %v4157, %v4710
        %v4712 = vpop.f32.mrb[0].mxu0
        %v4713 = vpop.f32.mrb[0].mxu0
        %v4714 = vadd.f32 %v4157, %v4713
        %v4715 = vpop.f32.mrb[0].mxu0
        %4716 = vmatprep.mubr.bf16.mxu0 0
        %4717 = vmatmul.mubr.bf16.gmra.mrb[0].mxu0 %v4293
        %v4718 = vpop.f32.mrb[0].mxu0
        %v4719 = vadd.f32 %v4157, %v4718
        %v4720 = vpop.f32.mrb[0].mxu0
        %v4721 = vpop.f32.mrb[0].mxu0
        %v4722 = vadd.f32 %v4157, %v4721
        %v4723 = vpop.f32.mrb[0].mxu0
        %4724 = vmatprep.mubr.bf16.mxu0 0
        %4725 = vmatmul.mubr.bf16.gmra.mrb[0].mxu0 %v4296
        %v4726 = vpop.f32.mrb[0].mxu0
        %v4727 = vadd.f32 %v4157, %v4726
        %v4728 = vpop.f32.mrb[0].mxu0
        %v4729 = vpop.f32.mrb[0].mxu0
        %v4730 = vadd.f32 %v4157, %v4729
        %v4731 = vpop.f32.mrb[0].mxu0
        %4732 = vmatprep.mubr.bf16.mxu0 0
        %4733 = vmatmul.mubr.bf16.gmra.mrb[0].mxu0 %v4299
        %v4734 = vpop.f32.mrb[0].mxu0
        %v4735 = vadd.f32 %v4157, %v4734
        %v4736 = vpop.f32.mrb[0].mxu0
        %v4737 = vpop.f32.mrb[0].mxu0
        %v4738 = vadd.f32 %v4157, %v4737
        %v4739 = vpop.f32.mrb[0].mxu0
        %4740 = vmatprep.mubr.bf16.mxu0 0
        %4741 = vmatmul.mubr.bf16.gmra.mrb[0].mxu0 %v4302
        %v4742 = vpop.f32.mrb[0].mxu0
        %v4743 = vadd.f32 %v4157, %v4742
        %v4744 = vpop.f32.mrb[0].mxu0
        %v4745 = vpop.f32.mrb[0].mxu0
        %v4746 = vadd.f32 %v4157, %v4745
        %v4747 = vpop.f32.mrb[0].mxu0
        %4748 = vmatprep.mubr.bf16.mxu0 0
        %4749 = vmatmul.mubr.bf16.gmra.mrb[0].mxu0 %v4305
        %v4750 = vpop.f32.mrb[0].mxu0
        %v4751 = vadd.f32 %v4157, %v4750
        %v4752 = vpop.f32.mrb[0].mxu0
        %v4753 = vpop.f32.mrb[0].mxu0
        %v4754 = vadd.f32 %v4157, %v4753
        %v4755 = vpop.f32.mrb[0].mxu0
        %4756 = vmatprep.mubr.bf16.mxu0 0
        %4757 = vmatmul.mubr.bf16.gmra.mrb[0].mxu0 %v4308
        %v4758 = vpop.f32.mrb[0].mxu0
        %v4759 = vadd.f32 %v4157, %v4758
        %v4760 = vpop.f32.mrb[0].mxu0
        %v4761 = vpop.f32.mrb[0].mxu0
        %v4762 = vadd.f32 %v4157, %v4761
        %v4763 = vpop.f32.mrb[0].mxu0
        %4764 = vmatprep.mubr.bf16.mxu0 0
        %4765 = vmatmul.mubr.bf16.gmra.mrb[0].mxu0 %v4311
        %v4766 = vpop.f32.mrb[0].mxu0
        %v4767 = vadd.f32 %v4157, %v4766
        %v4768 = vpop.f32.mrb[0].mxu0
        %v4769 = vpop.f32.mrb[0].mxu0
        %v4770 = vadd.f32 %v4157, %v4769
        %v4771 = vpop.f32.mrb[0].mxu0
        %4772 = vmatprep.mubr.bf16.mxu0 0
        %4773 = vmatmul.mubr.bf16.gmra.mrb[0].mxu0 %v4314
        %v4774 = vpop.f32.mrb[0].mxu0
        %v4775 = vadd.f32 %v4157, %v4774
        %v4776 = vpop.f32.mrb[0].mxu0
        %v4777 = vpop.f32.mrb[0].mxu0
        %v4778 = vadd.f32 %v4157, %v4777
        %v4779 = vpop.f32.mrb[0].mxu0
        %4780 = vmatprep.mubr.bf16.mxu0 0
        %4781 = vmatmul.mubr.bf16.gmra.mrb[0].mxu0 %v4317
        %v4782 = vpop.f32.mrb[0].mxu0
        %v4783 = vadd.f32 %v4157, %v4782
        %v4784 = vpop.f32.mrb[0].mxu0
        %v4785 = vpop.f32.mrb[0].mxu0
        %v4786 = vadd.f32 %v4157, %v4785
        %v4787 = vpop.f32.mrb[0].mxu0
        %4788 = vmatprep.mubr.bf16.mxu0 0
        %4789 = vmatmul.mubr.bf16.gmra.mrb[0].mxu0 %v4320
        %v4790 = vpop.f32.mrb[0].mxu0
        %v4791 = vadd.f32 %v4157, %v4790
        %v4792 = vpop.f32.mrb[0].mxu0
        %v4793 = vpop.f32.mrb[0].mxu0
        %v4794 = vadd.f32 %v4157, %v4793
        %v4795 = vpop.f32.mrb[0].mxu0
        %4796 = vmatprep.mubr.bf16.mxu0 0
        %4797 = vmatmul.mubr.bf16.gmra.mrb[0].mxu0 %v4323
        %v4798 = vpop.f32.mrb[0].mxu0
        %v4799 = vadd.f32 %v4157, %v4798
        %v4800 = vpop.f32.mrb[0].mxu0
        %v4801 = vpop.f32.mrb[0].mxu0
        %v4802 = vadd.f32 %v4157, %v4801
        %v4803 = vpop.f32.mrb[0].mxu0
        %4804 = vmatprep.mubr.bf16.mxu0 0
        %4805 = vmatmul.mubr.bf16.gmra.mrb[0].mxu0 %v4326
        %v4806 = vpop.f32.mrb[0].mxu0
        %v4807 = vadd.f32 %v4157, %v4806
        %v4808 = vpop.f32.mrb[0].mxu0
        %v4809 = vpop.f32.mrb[0].mxu0
        %v4810 = vadd.f32 %v4157, %v4809
        %v4811 = vpop.f32.mrb[0].mxu0
        %4812 = vmatprep.mubr.bf16.mxu0 0
        %4813 = vmatmul.mubr.bf16.gmra.mrb[0].mxu0 %v4329
        %v4814 = vpop.f32.mrb[0].mxu0
        %v4815 = vadd.f32 %v4157, %v4814
        %v4816 = vpop.f32.mrb[0].mxu0
        %v4817 = vpop.f32.mrb[0].mxu0
        %v4818 = vadd.f32 %v4157, %v4817
        %v4819 = vpop.f32.mrb[0].mxu0
        %4820 = vmatprep.mubr.bf16.mxu0 0
        %4821 = vmatmul.mubr.bf16.gmra.mrb[0].mxu0 %v4332
        %v4822 = vpop.f32.mrb[0].mxu0
        %v4823 = vadd.f32 %v4157, %v4822
        %v4824 = vpop.f32.mrb[0].mxu0
        %v4825 = vpop.f32.mrb[0].mxu0
        %v4826 = vadd.f32 %v4157, %v4825
        %v4827 = vpop.f32.mrb[0].mxu0
        %4828 = vmatprep.mubr.bf16.mxu0 0
        %4829 = vmatmul.mubr.bf16.gmra.mrb[0].mxu0 %v4335
        %v4830 = vpop.f32.mrb[0].mxu0
        %v4831 = vadd.f32 %v4157, %v4830
        %v4832 = vpop.f32.mrb[0].mxu0
        %v4833 = vpop.f32.mrb[0].mxu0
        %v4834 = vadd.f32 %v4157, %v4833
        %v4835 = vpop.f32.mrb[0].mxu0
        %4836 = vmatprep.mubr.bf16.mxu0 0
        %4837 = vmatmul.mubr.bf16.gmra.mrb[0].mxu0 %v4338
        %v4838 = vpop.f32.mrb[0].mxu0
        %v4839 = vadd.f32 %v4157, %v4838
        %v4840 = vpop.f32.mrb[0].mxu0
        %v4841 = vpop.f32.mrb[0].mxu0
        %v4842 = vadd.f32 %v4157, %v4841
        %v4843 = vpop.f32.mrb[0].mxu0
        %4844 = vmatprep.mubr.bf16.mxu0 0
        %4845 = vmatmul.mubr.bf16.gmra.mrb[0].mxu0 %v4341
        %v4846 = vpop.f32.mrb[0].mxu0
        %v4847 = vadd.f32 %v4157, %v4846
        %v4848 = vpop.f32.mrb[0].mxu0
        %v4849 = vpop.f32.mrb[0].mxu0
        %v4850 = vadd.f32 %v4157, %v4849
        %v4851 = vpop.f32.mrb[0].mxu0
        %4852 = vmatprep.mubr.bf16.mxu0 0
        %4853 = vmatmul.mubr.bf16.gmra.mrb[0].mxu0 %v4344
        %v4854 = vpop.f32.mrb[0].mxu0
        %v4855 = vadd.f32 %v4157, %v4854
        %v4856 = vpop.f32.mrb[0].mxu0
        %v4857 = vpop.f32.mrb[0].mxu0
        %v4858 = vadd.f32 %v4157, %v4857
        %v4859 = vpop.f32.mrb[0].mxu0
        %4860 = vmatprep.mubr.bf16.mxu0 0
        %4861 = vmatmul.mubr.bf16.gmra.mrb[0].mxu0 %v4347
        %v4862 = vpop.f32.mrb[0].mxu0
        %v4863 = vadd.f32 %v4157, %v4862
        %v4864 = vpop.f32.mrb[0].mxu0
        %v4865 = vpop.f32.mrb[0].mxu0
        %v4866 = vadd.f32 %v4157, %v4865
        %v4867 = vpop.f32.mrb[0].mxu0
        %4868 = vmatprep.mubr.bf16.mxu0 0
        %4869 = vmatmul.mubr.bf16.gmra.mrb[0].mxu0 %v4350
        %v4870 = vpop.f32.mrb[0].mxu0
        %v4871 = vadd.f32 %v4157, %v4870
        %v4872 = vpop.f32.mrb[0].mxu0
        %v4873 = vpop.f32.mrb[0].mxu0
        %v4874 = vadd.f32 %v4157, %v4873
        %v4875 = vpop.f32.mrb[0].mxu0
        %4876 = vmatprep.mubr.bf16.mxu0 0
        %4877 = vmatmul.mubr.bf16.gmra.mrb[0].mxu0 %v4353
        %v4878 = vpop.f32.mrb[0].mxu0
        %v4879 = vadd.f32 %v4157, %v4878
        %v4880 = vpop.f32.mrb[0].mxu0
        %v4881 = vpop.f32.mrb[0].mxu0
        %v4882 = vadd.f32 %v4157, %v4881
        %v4883 = vpop.f32.mrb[0].mxu0
        %4884 = vmatprep.mubr.bf16.mxu0 0
        %4885 = vmatmul.mubr.bf16.gmra.mrb[0].mxu0 %v4356
        %v4886 = vpop.f32.mrb[0].mxu0
        %v4887 = vadd.f32 %v4157, %v4886
        %v4888 = vpop.f32.mrb[0].mxu0
        %v4889 = vpop.f32.mrb[0].mxu0
        %v4890 = vadd.f32 %v4157, %v4889
        %v4891 = vpop.f32.mrb[0].mxu0
        %4892 = vmatprep.mubr.bf16.mxu0 0
        %4893 = vmatmul.mubr.bf16.gmra.mrb[0].mxu0 %v4359
        %v4894 = vpop.f32.mrb[0].mxu0
        %v4895 = vadd.f32 %v4157, %v4894
        %v4896 = vpop.f32.mrb[0].mxu0
        %v4897 = vpop.f32.mrb[0].mxu0
        %v4898 = vadd.f32 %v4157, %v4897
        %v4899 = vpop.f32.mrb[0].mxu0
        %4900 = vmatprep.mubr.bf16.mxu0 0
        %4901 = vmatmul.mubr.bf16.gmra.mrb[0].mxu0 %v4362
        %v4902 = vpop.f32.mrb[0].mxu0
        %v4903 = vadd.f32 %v4157, %v4902
        %v4904 = vpop.f32.mrb[0].mxu0
        %v4905 = vpop.f32.mrb[0].mxu0
        %v4906 = vadd.f32 %v4157, %v4905
        %v4907 = vpop.f32.mrb[0].mxu0
        %4908 = vdwg.mxu0
        %v4909 = vmul.f32 %v4399, 0.01
        %v4910 = vmul.f32 %v4402, 0.01
        %v4911 = vmul.f32 %v4407, 0.01
        %v4912 = vmul.f32 %v4410, 0.01
        %v4913 = vmul.f32 %v4415, 0.01
        %v4914 = vmul.f32 %v4418, 0.01
        %v4915 = vmul.f32 %v4423, 0.01
        %v4916 = vmul.f32 %v4426, 0.01
        %v4917 = vmul.f32 %v4431, 0.01
        %v4918 = vmul.f32 %v4434, 0.01
        %v4919 = vmul.f32 %v4439, 0.01
        %v4920 = vmul.f32 %v4442, 0.01
        %v4921 = vmul.f32 %v4447, 0.01
        %v4922 = vmul.f32 %v4450, 0.01
        %v4923 = vmul.f32 %v4455, 0.01
        %v4924 = vmul.f32 %v4458, 0.01
        %v4925 = vmul.f32 %v4463, 0.01
        %v4926 = vmul.f32 %v4466, 0.01
        %v4927 = vmul.f32 %v4471, 0.01
        %v4928 = vmul.f32 %v4474, 0.01
        %v4929 = vmul.f32 %v4479, 0.01
        %v4930 = vmul.f32 %v4482, 0.01
        %v4931 = vmul.f32 %v4487, 0.01
        %v4932 = vmul.f32 %v4490, 0.01
        %v4933 = vmul.f32 %v4495, 0.01
        %v4934 = vmul.f32 %v4498, 0.01
        %v4935 = vmul.f32 %v4503, 0.01
        %v4936 = vmul.f32 %v4506, 0.01
        %v4937 = vmul.f32 %v4511, 0.01
        %v4938 = vmul.f32 %v4514, 0.01
        %v4939 = vmul.f32 %v4519, 0.01
        %v4940 = vmul.f32 %v4522, 0.01
        %v4941 = vmul.f32 %v4527, 0.01
        %v4942 = vmul.f32 %v4530, 0.01
        %v4943 = vmul.f32 %v4535, 0.01
        %v4944 = vmul.f32 %v4538, 0.01
        %v4945 = vmul.f32 %v4543, 0.01
        %v4946 = vmul.f32 %v4546, 0.01
        %v4947 = vmul.f32 %v4551, 0.01
        %v4948 = vmul.f32 %v4554, 0.01
        %v4949 = vmul.f32 %v4559, 0.01
        %v4950 = vmul.f32 %v4562, 0.01
        %v4951 = vmul.f32 %v4567, 0.01
        %v4952 = vmul.f32 %v4570, 0.01
        %v4953 = vmul.f32 %v4575, 0.01
        %v4954 = vmul.f32 %v4578, 0.01
        %v4955 = vmul.f32 %v4583, 0.01
        %v4956 = vmul.f32 %v4586, 0.01
        %v4957 = vmul.f32 %v4591, 0.01
        %v4958 = vmul.f32 %v4594, 0.01
        %v4959 = vmul.f32 %v4599, 0.01
        %v4960 = vmul.f32 %v4602, 0.01
        %v4961 = vmul.f32 %v4607, 0.01
        %v4962 = vmul.f32 %v4610, 0.01
        %v4963 = vmul.f32 %v4615, 0.01
        %v4964 = vmul.f32 %v4618, 0.01
        %v4965 = vmul.f32 %v4623, 0.01
        %v4966 = vmul.f32 %v4626, 0.01
        %v4967 = vmul.f32 %v4631, 0.01
        %v4968 = vmul.f32 %v4634, 0.01
        %v4969 = vmul.f32 %v4639, 0.01
        %v4970 = vmul.f32 %v4642, 0.01
        %v4971 = vmul.f32 %v4647, 0.01
        %v4972 = vmul.f32 %v4650, 0.01
        %v4973 = vmul.f32 %v4655, 0.01
        %v4974 = vmul.f32 %v4658, 0.01
        %v4975 = vmul.f32 %v4663, 0.01
        %v4976 = vmul.f32 %v4666, 0.01
        %v4977 = vmul.f32 %v4671, 0.01
        %v4978 = vmul.f32 %v4674, 0.01
        %v4979 = vmul.f32 %v4679, 0.01
        %v4980 = vmul.f32 %v4682, 0.01
        %v4981 = vmul.f32 %v4687, 0.01
        %v4982 = vmul.f32 %v4690, 0.01
        %v4983 = vmul.f32 %v4695, 0.01
        %v4984 = vmul.f32 %v4698, 0.01
        %v4985 = vmul.f32 %v4703, 0.01
        %v4986 = vmul.f32 %v4706, 0.01
        %v4987 = vmul.f32 %v4711, 0.01
        %v4988 = vmul.f32 %v4714, 0.01
        %v4989 = vmul.f32 %v4719, 0.01
        %v4990 = vmul.f32 %v4722, 0.01
        %v4991 = vmul.f32 %v4727, 0.01
        %v4992 = vmul.f32 %v4730, 0.01
        %v4993 = vmul.f32 %v4735, 0.01
        %v4994 = vmul.f32 %v4738, 0.01
        %v4995 = vmul.f32 %v4743, 0.01
        %v4996 = vmul.f32 %v4746, 0.01
        %v4997 = vmul.f32 %v4751, 0.01
        %v4998 = vmul.f32 %v4754, 0.01
        %v4999 = vmul.f32 %v4759, 0.01
        %v5000 = vmul.f32 %v4762, 0.01
        %v5001 = vmul.f32 %v4767, 0.01
        %v5002 = vmul.f32 %v4770, 0.01
        %v5003 = vmul.f32 %v4775, 0.01
        %v5004 = vmul.f32 %v4778, 0.01
        %v5005 = vmul.f32 %v4783, 0.01
        %v5006 = vmul.f32 %v4786, 0.01
        %v5007 = vmul.f32 %v4791, 0.01
        %v5008 = vmul.f32 %v4794, 0.01
        %v5009 = vmul.f32 %v4799, 0.01
        %v5010 = vmul.f32 %v4802, 0.01
        %v5011 = vmul.f32 %v4807, 0.01
        %v5012 = vmul.f32 %v4810, 0.01
        %v5013 = vmul.f32 %v4815, 0.01
        %v5014 = vmul.f32 %v4818, 0.01
        %v5015 = vmul.f32 %v4823, 0.01
        %v5016 = vmul.f32 %v4826, 0.01
        %v5017 = vmul.f32 %v4831, 0.01
        %v5018 = vmul.f32 %v4834, 0.01
        %v5019 = vmul.f32 %v4839, 0.01
        %v5020 = vmul.f32 %v4842, 0.01
        %v5021 = vmul.f32 %v4847, 0.01
        %v5022 = vmul.f32 %v4850, 0.01
        %v5023 = vmul.f32 %v4855, 0.01
        %v5024 = vmul.f32 %v4858, 0.01
        %v5025 = vmul.f32 %v4863, 0.01
        %v5026 = vmul.f32 %v4866, 0.01
        %v5027 = vmul.f32 %v4871, 0.01
        %v5028 = vmul.f32 %v4874, 0.01
        %v5029 = vmul.f32 %v4879, 0.01
        %v5030 = vmul.f32 %v4882, 0.01
        %v5031 = vmul.f32 %v4887, 0.01
        %v5032 = vmul.f32 %v4890, 0.01
        %v5033 = vmul.f32 %v4895, 0.01
        %v5034 = vmul.f32 %v4898, 0.01
        %v5035 = vmul.f32 %v4903, 0.01
        %v5036 = vmul.f32 %v4906, 0.01
        %v5037 = vmax.f32 %v4399, %v4909
        %v5038 = vmax.f32 %v4402, %v4910
        %v5039 = vmax.f32 %v4407, %v4911
        %v5040 = vmax.f32 %v4410, %v4912
        %v5041 = vmax.f32 %v4415, %v4913
        %v5042 = vmax.f32 %v4418, %v4914
        %v5043 = vmax.f32 %v4423, %v4915
        %v5044 = vmax.f32 %v4426, %v4916
        %v5045 = vmax.f32 %v4431, %v4917
        %v5046 = vmax.f32 %v4434, %v4918
        %v5047 = vmax.f32 %v4439, %v4919
        %v5048 = vmax.f32 %v4442, %v4920
        %v5049 = vmax.f32 %v4447, %v4921
        %v5050 = vmax.f32 %v4450, %v4922
        %v5051 = vmax.f32 %v4455, %v4923
        %v5052 = vmax.f32 %v4458, %v4924
        %v5053 = vmax.f32 %v4463, %v4925
        %v5054 = vmax.f32 %v4466, %v4926
        %v5055 = vmax.f32 %v4471, %v4927
        %v5056 = vmax.f32 %v4474, %v4928
        %v5057 = vmax.f32 %v4479, %v4929
        %v5058 = vmax.f32 %v4482, %v4930
        %v5059 = vmax.f32 %v4487, %v4931
        %v5060 = vmax.f32 %v4490, %v4932
        %v5061 = vmax.f32 %v4495, %v4933
        %v5062 = vmax.f32 %v4498, %v4934
        %v5063 = vmax.f32 %v4503, %v4935
        %v5064 = vmax.f32 %v4506, %v4936
        %v5065 = vmax.f32 %v4511, %v4937
        %v5066 = vmax.f32 %v4514, %v4938
        %v5067 = vmax.f32 %v4519, %v4939
        %v5068 = vmax.f32 %v4522, %v4940
        %v5069 = vmax.f32 %v4527, %v4941
        %v5070 = vmax.f32 %v4530, %v4942
        %v5071 = vmax.f32 %v4535, %v4943
        %v5072 = vmax.f32 %v4538, %v4944
        %v5073 = vmax.f32 %v4543, %v4945
        %v5074 = vmax.f32 %v4546, %v4946
        %v5075 = vmax.f32 %v4551, %v4947
        %v5076 = vmax.f32 %v4554, %v4948
        %v5077 = vmax.f32 %v4559, %v4949
        %v5078 = vmax.f32 %v4562, %v4950
        %v5079 = vmax.f32 %v4567, %v4951
        %v5080 = vmax.f32 %v4570, %v4952
        %v5081 = vmax.f32 %v4575, %v4953
        %v5082 = vmax.f32 %v4578, %v4954
        %v5083 = vmax.f32 %v4583, %v4955
        %v5084 = vmax.f32 %v4586, %v4956
        %v5085 = vmax.f32 %v4591, %v4957
        %v5086 = vmax.f32 %v4594, %v4958
        %v5087 = vmax.f32 %v4599, %v4959
        %v5088 = vmax.f32 %v4602, %v4960
        %v5089 = vmax.f32 %v4607, %v4961
        %v5090 = vmax.f32 %v4610, %v4962
        %v5091 = vmax.f32 %v4615, %v4963
        %v5092 = vmax.f32 %v4618, %v4964
        %v5093 = vmax.f32 %v4623, %v4965
        %v5094 = vmax.f32 %v4626, %v4966
        %v5095 = vmax.f32 %v4631, %v4967
        %v5096 = vmax.f32 %v4634, %v4968
        %v5097 = vmax.f32 %v4639, %v4969
        %v5098 = vmax.f32 %v4642, %v4970
        %v5099 = vmax.f32 %v4647, %v4971
        %v5100 = vmax.f32 %v4650, %v4972
        %v5101 = vmax.f32 %v4655, %v4973
        %v5102 = vmax.f32 %v4658, %v4974
        %v5103 = vmax.f32 %v4663, %v4975
        %v5104 = vmax.f32 %v4666, %v4976
        %v5105 = vmax.f32 %v4671, %v4977
        %v5106 = vmax.f32 %v4674, %v4978
        %v5107 = vmax.f32 %v4679, %v4979
        %v5108 = vmax.f32 %v4682, %v4980
        %v5109 = vmax.f32 %v4687, %v4981
        %v5110 = vmax.f32 %v4690, %v4982
        %v5111 = vmax.f32 %v4695, %v4983
        %v5112 = vmax.f32 %v4698, %v4984
        %v5113 = vmax.f32 %v4703, %v4985
        %v5114 = vmax.f32 %v4706, %v4986
        %v5115 = vmax.f32 %v4711, %v4987
        %v5116 = vmax.f32 %v4714, %v4988
        %v5117 = vmax.f32 %v4719, %v4989
        %v5118 = vmax.f32 %v4722, %v4990
        %v5119 = vmax.f32 %v4727, %v4991
        %v5120 = vmax.f32 %v4730, %v4992
        %v5121 = vmax.f32 %v4735, %v4993
        %v5122 = vmax.f32 %v4738, %v4994
        %v5123 = vmax.f32 %v4743, %v4995
        %v5124 = vmax.f32 %v4746, %v4996
        %v5125 = vmax.f32 %v4751, %v4997
        %v5126 = vmax.f32 %v4754, %v4998
        %v5127 = vmax.f32 %v4759, %v4999
        %v5128 = vmax.f32 %v4762, %v5000
        %v5129 = vmax.f32 %v4767, %v5001
        %v5130 = vmax.f32 %v4770, %v5002
        %v5131 = vmax.f32 %v4775, %v5003
        %v5132 = vmax.f32 %v4778, %v5004
        %v5133 = vmax.f32 %v4783, %v5005
        %v5134 = vmax.f32 %v4786, %v5006
        %v5135 = vmax.f32 %v4791, %v5007
        %v5136 = vmax.f32 %v4794, %v5008
        %v5137 = vmax.f32 %v4799, %v5009
        %v5138 = vmax.f32 %v4802, %v5010
        %v5139 = vmax.f32 %v4807, %v5011
        %v5140 = vmax.f32 %v4810, %v5012
        %v5141 = vmax.f32 %v4815, %v5013
        %v5142 = vmax.f32 %v4818, %v5014
        %v5143 = vmax.f32 %v4823, %v5015
        %v5144 = vmax.f32 %v4826, %v5016
        %v5145 = vmax.f32 %v4831, %v5017
        %v5146 = vmax.f32 %v4834, %v5018
        %v5147 = vmax.f32 %v4839, %v5019
        %v5148 = vmax.f32 %v4842, %v5020
        %v5149 = vmax.f32 %v4847, %v5021
        %v5150 = vmax.f32 %v4850, %v5022
        %v5151 = vmax.f32 %v4855, %v5023
        %v5152 = vmax.f32 %v4858, %v5024
        %v5153 = vmax.f32 %v4863, %v5025
        %v5154 = vmax.f32 %v4866, %v5026
        %v5155 = vmax.f32 %v4871, %v5027
        %v5156 = vmax.f32 %v4874, %v5028
        %v5157 = vmax.f32 %v4879, %v5029
        %v5158 = vmax.f32 %v4882, %v5030
        %v5159 = vmax.f32 %v4887, %v5031
        %v5160 = vmax.f32 %v4890, %v5032
        %v5161 = vmax.f32 %v4895, %v5033
        %v5162 = vmax.f32 %v4898, %v5034
        %v5163 = vmax.f32 %v4903, %v5035
        %v5164 = vmax.f32 %v4906, %v5036
        %v5165 = vld [vmem:[%s10] sm:$0x1]
        %v5166 = vld [vmem:[#allocation2] sm:$0x1]
        %5168 = vset.pattern.permute.xlu0 0
        %5169 = vperm.xlu0 %5168, %v5166
        %v5170 = vpop.permute.xlu0 %5169
        %v5172 = vlaneseq
        %v5173 = vshrl.u32 %v5172, 7
        %v5174 = vsub.s32 0, %v5173
        %v5175 = vrot.slane %v5170, %v5174
        %v5177 = vsel %vm4171, %v5165, 0
        %v5180 = vsel %vm4171, %v5037, 0
        %v5183 = vsel %vm4171, %v5038, 0
        %v5186 = vsel %vm4171, %v5039, 0
        %v5189 = vsel %vm4171, %v5040, 0
        %v5192 = vsel %vm4171, %v5041, 0
        %v5195 = vsel %vm4171, %v5042, 0
        %v5198 = vsel %vm4171, %v5043, 0
        %v5201 = vsel %vm4171, %v5044, 0
        %v5204 = vsel %vm4171, %v5045, 0
        %v5207 = vsel %vm4171, %v5046, 0
        %v5210 = vsel %vm4171, %v5047, 0
        %v5213 = vsel %vm4171, %v5048, 0
        %v5216 = vsel %vm4171, %v5049, 0
        %v5219 = vsel %vm4171, %v5050, 0
        %v5222 = vsel %vm4171, %v5051, 0
        %v5225 = vsel %vm4171, %v5052, 0
        %5227 = vmatprep.subr.mxu0 0.0
        %5228 = vmatpush1.xpose.msra.mxu0 %v5180
        %5229 = vmatprep.subr.mxu0 0.0
        %5230 = vmatpush1.xpose.msra.mxu0 %v5183
        %5231 = vmatprep.subr.mxu0 0.0
        %5232 = vmatpush1.xpose.msra.mxu0 %v5186
        %5233 = vmatprep.subr.mxu0 0.0
        %5234 = vmatpush1.xpose.msra.mxu0 %v5189
        %5235 = vmatprep.subr.mxu0 0.0
        %5236 = vmatpush1.xpose.msra.mxu0 %v5192
        %5237 = vmatprep.subr.mxu0 0.0
        %5238 = vmatpush1.xpose.msra.mxu0 %v5195
        %5239 = vmatprep.subr.mxu0 0.0
        %5240 = vmatpush1.xpose.msra.mxu0 %v5198
        %5241 = vmatprep.subr.mxu0 0.0
        %5242 = vmatpush1.xpose.msra.mxu0 %v5201
        %5243 = vmatprep.subr.mxu0 0.0
        %5244 = vmatpush1.xpose.msra.mxu0 %v5204
        %5245 = vmatprep.subr.mxu0 0.0
        %5246 = vmatpush1.xpose.msra.mxu0 %v5207
        %5247 = vmatprep.subr.mxu0 0.0
        %5248 = vmatpush1.xpose.msra.mxu0 %v5210
        %5249 = vmatprep.subr.mxu0 0.0
        %5250 = vmatpush1.xpose.msra.mxu0 %v5213
        %5251 = vmatprep.subr.mxu0 0.0
        %5252 = vmatpush1.xpose.msra.mxu0 %v5216
        %5253 = vmatprep.subr.mxu0 0.0
        %5254 = vmatpush1.xpose.msra.mxu0 %v5219
        %5255 = vmatprep.subr.mxu0 0.0
        %5256 = vmatpush1.xpose.msra.mxu0 %v5222
        %5257 = vmatprep.subr.mxu0 0.0
        %5258 = vmatpush1.xpose.msra.mxu0 %v5225
        %5259 = vmatprep.subr.mxu0 0.0
        %5260 = vmatpush1.xpose.msra.mxu0 0.0
        %5261 = vmatprep.subr.mxu0 0.0
        %5262 = vmatpush1.xpose.msra.mxu0 0.0
        %5263 = vmatprep.subr.mxu0 0.0
        %5264 = vmatpush1.xpose.msra.mxu0 0.0
        %5265 = vmatprep.subr.mxu0 0.0
        %5266 = vmatpush1.xpose.msra.mxu0 0.0
        %5267 = vmatprep.subr.mxu0 0.0
        %5268 = vmatpush1.xpose.msra.mxu0 0.0
        %5269 = vmatprep.subr.mxu0 0.0
        %5270 = vmatpush1.xpose.msra.mxu0 0.0
        %5271 = vmatprep.subr.mxu0 0.0
        %5272 = vmatpush1.xpose.msra.mxu0 0.0
        %5273 = vmatprep.subr.mxu0 0.0
        %5274 = vmatpush1.xpose.msra.mxu0 0.0
        %5275 = vmatprep.subr.mxu0 0.0
        %5276 = vmatpush1.xpose.msra.mxu0 0.0
        %5277 = vmatprep.subr.mxu0 0.0
        %5278 = vmatpush1.xpose.msra.mxu0 0.0
        %5279 = vmatprep.subr.mxu0 0.0
        %5280 = vmatpush1.xpose.msra.mxu0 0.0
        %5281 = vmatprep.subr.mxu0 0.0
        %5282 = vmatpush1.xpose.msra.mxu0 0.0
        %5283 = vmatprep.subr.mxu0 0.0
        %5284 = vmatpush1.xpose.msra.mxu0 0.0
        %5285 = vmatprep.subr.mxu0 0.0
        %5286 = vmatpush1.xpose.msra.mxu0 0.0
        %5287 = vmatprep.subr.mxu0 0.0
        %5288 = vmatpush1.xpose.msra.mxu0 0.0
        %5289 = vmatprep.subr.mxu0 0.0
        %5290 = vmatpush1.xpose.msra.mxu0 0.0
        %5291 = vmatprep.mubr.f32.mxu0 0.0
        %5292 = vmatmul.mubr.f32.gmra.mrb[0].mxu0 %v5177
        %v5293 = vpop.f32.mrb[0].mxu0
        %v5294 = vadd.f32 %v5175, %v5293
        %v5295 = vpop.f32.mrb[0].mxu0
        %5296 = vdwg.mxu0
        %v5298 = vsel %vm4171, %v5053, 0
        %v5301 = vsel %vm4171, %v5054, 0
        %v5304 = vsel %vm4171, %v5055, 0
        %v5307 = vsel %vm4171, %v5056, 0
        %v5310 = vsel %vm4171, %v5057, 0
        %v5313 = vsel %vm4171, %v5058, 0
        %v5316 = vsel %vm4171, %v5059, 0
        %v5319 = vsel %vm4171, %v5060, 0
        %v5322 = vsel %vm4171, %v5061, 0
        %v5325 = vsel %vm4171, %v5062, 0
        %v5328 = vsel %vm4171, %v5063, 0
        %v5331 = vsel %vm4171, %v5064, 0
        %v5334 = vsel %vm4171, %v5065, 0
        %v5337 = vsel %vm4171, %v5066, 0
        %v5340 = vsel %vm4171, %v5067, 0
        %v5343 = vsel %vm4171, %v5068, 0
        %5345 = vmatprep.subr.mxu0 0.0
        %5346 = vmatpush1.xpose.msra.mxu0 %v5298
        %5347 = vmatprep.subr.mxu0 0.0
        %5348 = vmatpush1.xpose.msra.mxu0 %v5301
        %5349 = vmatprep.subr.mxu0 0.0
        %5350 = vmatpush1.xpose.msra.mxu0 %v5304
        %5351 = vmatprep.subr.mxu0 0.0
        %5352 = vmatpush1.xpose.msra.mxu0 %v5307
        %5353 = vmatprep.subr.mxu0 0.0
        %5354 = vmatpush1.xpose.msra.mxu0 %v5310
        %5355 = vmatprep.subr.mxu0 0.0
        %5356 = vmatpush1.xpose.msra.mxu0 %v5313
        %5357 = vmatprep.subr.mxu0 0.0
        %5358 = vmatpush1.xpose.msra.mxu0 %v5316
        %5359 = vmatprep.subr.mxu0 0.0
        %5360 = vmatpush1.xpose.msra.mxu0 %v5319
        %5361 = vmatprep.subr.mxu0 0.0
        %5362 = vmatpush1.xpose.msra.mxu0 %v5322
        %5363 = vmatprep.subr.mxu0 0.0
        %5364 = vmatpush1.xpose.msra.mxu0 %v5325
        %5365 = vmatprep.subr.mxu0 0.0
        %5366 = vmatpush1.xpose.msra.mxu0 %v5328
        %5367 = vmatprep.subr.mxu0 0.0
        %5368 = vmatpush1.xpose.msra.mxu0 %v5331
        %5369 = vmatprep.subr.mxu0 0.0
        %5370 = vmatpush1.xpose.msra.mxu0 %v5334
        %5371 = vmatprep.subr.mxu0 0.0
        %5372 = vmatpush1.xpose.msra.mxu0 %v5337
        %5373 = vmatprep.subr.mxu0 0.0
        %5374 = vmatpush1.xpose.msra.mxu0 %v5340
        %5375 = vmatprep.subr.mxu0 0.0
        %5376 = vmatpush1.xpose.msra.mxu0 %v5343
        %5377 = vmatprep.subr.mxu0 0.0
        %5378 = vmatpush1.xpose.msra.mxu0 0.0
        %5379 = vmatprep.subr.mxu0 0.0
        %5380 = vmatpush1.xpose.msra.mxu0 0.0
        %5381 = vmatprep.subr.mxu0 0.0
        %5382 = vmatpush1.xpose.msra.mxu0 0.0
        %5383 = vmatprep.subr.mxu0 0.0
        %5384 = vmatpush1.xpose.msra.mxu0 0.0
        %5385 = vmatprep.subr.mxu0 0.0
        %5386 = vmatpush1.xpose.msra.mxu0 0.0
        %5387 = vmatprep.subr.mxu0 0.0
        %5388 = vmatpush1.xpose.msra.mxu0 0.0
        %5389 = vmatprep.subr.mxu0 0.0
        %5390 = vmatpush1.xpose.msra.mxu0 0.0
        %5391 = vmatprep.subr.mxu0 0.0
        %5392 = vmatpush1.xpose.msra.mxu0 0.0
        %5393 = vmatprep.subr.mxu0 0.0
        %5394 = vmatpush1.xpose.msra.mxu0 0.0
        %5395 = vmatprep.subr.mxu0 0.0
        %5396 = vmatpush1.xpose.msra.mxu0 0.0
        %5397 = vmatprep.subr.mxu0 0.0
        %5398 = vmatpush1.xpose.msra.mxu0 0.0
        %5399 = vmatprep.subr.mxu0 0.0
        %5400 = vmatpush1.xpose.msra.mxu0 0.0
        %5401 = vmatprep.subr.mxu0 0.0
        %5402 = vmatpush1.xpose.msra.mxu0 0.0
        %5403 = vmatprep.subr.mxu0 0.0
        %5404 = vmatpush1.xpose.msra.mxu0 0.0
        %5405 = vmatprep.subr.mxu0 0.0
        %5406 = vmatpush1.xpose.msra.mxu0 0.0
        %5407 = vmatprep.subr.mxu0 0.0
        %5408 = vmatpush1.xpose.msra.mxu0 0.0
        %5409 = vmatprep.mubr.f32.mxu0 0.0
        %5410 = vmatmul.mubr.f32.gmra.mrb[0].mxu0 %v5177
        %v5411 = vpop.f32.mrb[0].mxu0
        %v5412 = vadd.f32 %v5175, %v5411
        %v5413 = vpop.f32.mrb[0].mxu0
        %5414 = vdwg.mxu0
        %v5416 = vsel %vm4171, %v5069, 0
        %v5419 = vsel %vm4171, %v5070, 0
        %v5422 = vsel %vm4171, %v5071, 0
        %v5425 = vsel %vm4171, %v5072, 0
        %v5428 = vsel %vm4171, %v5073, 0
        %v5431 = vsel %vm4171, %v5074, 0
        %v5434 = vsel %vm4171, %v5075, 0
        %v5437 = vsel %vm4171, %v5076, 0
        %v5440 = vsel %vm4171, %v5077, 0
        %v5443 = vsel %vm4171, %v5078, 0
        %v5446 = vsel %vm4171, %v5079, 0
        %v5449 = vsel %vm4171, %v5080, 0
        %v5452 = vsel %vm4171, %v5081, 0
        %v5455 = vsel %vm4171, %v5082, 0
        %v5458 = vsel %vm4171, %v5083, 0
        %v5461 = vsel %vm4171, %v5084, 0
        %5463 = vmatprep.subr.mxu0 0.0
        %5464 = vmatpush1.xpose.msra.mxu0 %v5416
        %5465 = vmatprep.subr.mxu0 0.0
        %5466 = vmatpush1.xpose.msra.mxu0 %v5419
        %5467 = vmatprep.subr.mxu0 0.0
        %5468 = vmatpush1.xpose.msra.mxu0 %v5422
        %5469 = vmatprep.subr.mxu0 0.0
        %5470 = vmatpush1.xpose.msra.mxu0 %v5425
        %5471 = vmatprep.subr.mxu0 0.0
        %5472 = vmatpush1.xpose.msra.mxu0 %v5428
        %5473 = vmatprep.subr.mxu0 0.0
        %5474 = vmatpush1.xpose.msra.mxu0 %v5431
        %5475 = vmatprep.subr.mxu0 0.0
        %5476 = vmatpush1.xpose.msra.mxu0 %v5434
        %5477 = vmatprep.subr.mxu0 0.0
        %5478 = vmatpush1.xpose.msra.mxu0 %v5437
        %5479 = vmatprep.subr.mxu0 0.0
        %5480 = vmatpush1.xpose.msra.mxu0 %v5440
        %5481 = vmatprep.subr.mxu0 0.0
        %5482 = vmatpush1.xpose.msra.mxu0 %v5443
        %5483 = vmatprep.subr.mxu0 0.0
        %5484 = vmatpush1.xpose.msra.mxu0 %v5446
        %5485 = vmatprep.subr.mxu0 0.0
        %5486 = vmatpush1.xpose.msra.mxu0 %v5449
        %5487 = vmatprep.subr.mxu0 0.0
        %5488 = vmatpush1.xpose.msra.mxu0 %v5452
        %5489 = vmatprep.subr.mxu0 0.0
        %5490 = vmatpush1.xpose.msra.mxu0 %v5455
        %5491 = vmatprep.subr.mxu0 0.0
        %5492 = vmatpush1.xpose.msra.mxu0 %v5458
        %5493 = vmatprep.subr.mxu0 0.0
        %5494 = vmatpush1.xpose.msra.mxu0 %v5461
        %5495 = vmatprep.subr.mxu0 0.0
        %5496 = vmatpush1.xpose.msra.mxu0 0.0
        %5497 = vmatprep.subr.mxu0 0.0
        %5498 = vmatpush1.xpose.msra.mxu0 0.0
        %5499 = vmatprep.subr.mxu0 0.0
        %5500 = vmatpush1.xpose.msra.mxu0 0.0
        %5501 = vmatprep.subr.mxu0 0.0
        %5502 = vmatpush1.xpose.msra.mxu0 0.0
        %5503 = vmatprep.subr.mxu0 0.0
        %5504 = vmatpush1.xpose.msra.mxu0 0.0
        %5505 = vmatprep.subr.mxu0 0.0
        %5506 = vmatpush1.xpose.msra.mxu0 0.0
        %5507 = vmatprep.subr.mxu0 0.0
        %5508 = vmatpush1.xpose.msra.mxu0 0.0
        %5509 = vmatprep.subr.mxu0 0.0
        %5510 = vmatpush1.xpose.msra.mxu0 0.0
        %5511 = vmatprep.subr.mxu0 0.0
        %5512 = vmatpush1.xpose.msra.mxu0 0.0
        %5513 = vmatprep.subr.mxu0 0.0
        %5514 = vmatpush1.xpose.msra.mxu0 0.0
        %5515 = vmatprep.subr.mxu0 0.0
        %5516 = vmatpush1.xpose.msra.mxu0 0.0
        %5517 = vmatprep.subr.mxu0 0.0
        %5518 = vmatpush1.xpose.msra.mxu0 0.0
        %5519 = vmatprep.subr.mxu0 0.0
        %5520 = vmatpush1.xpose.msra.mxu0 0.0
        %5521 = vmatprep.subr.mxu0 0.0
        %5522 = vmatpush1.xpose.msra.mxu0 0.0
        %5523 = vmatprep.subr.mxu0 0.0
        %5524 = vmatpush1.xpose.msra.mxu0 0.0
        %5525 = vmatprep.subr.mxu0 0.0
        %5526 = vmatpush1.xpose.msra.mxu0 0.0
        %5527 = vmatprep.mubr.f32.mxu0 0.0
        %5528 = vmatmul.mubr.f32.gmra.mrb[0].mxu0 %v5177
        %v5529 = vpop.f32.mrb[0].mxu0
        %v5530 = vadd.f32 %v5175, %v5529
        %v5531 = vpop.f32.mrb[0].mxu0
        %5532 = vdwg.mxu0
        %v5534 = vsel %vm4171, %v5085, 0
        %v5537 = vsel %vm4171, %v5086, 0
        %v5540 = vsel %vm4171, %v5087, 0
        %v5543 = vsel %vm4171, %v5088, 0
        %v5546 = vsel %vm4171, %v5089, 0
        %v5549 = vsel %vm4171, %v5090, 0
        %v5552 = vsel %vm4171, %v5091, 0
        %v5555 = vsel %vm4171, %v5092, 0
        %v5558 = vsel %vm4171, %v5093, 0
        %v5561 = vsel %vm4171, %v5094, 0
        %v5564 = vsel %vm4171, %v5095, 0
        %v5567 = vsel %vm4171, %v5096, 0
        %v5570 = vsel %vm4171, %v5097, 0
        %v5573 = vsel %vm4171, %v5098, 0
        %v5576 = vsel %vm4171, %v5099, 0
        %v5579 = vsel %vm4171, %v5100, 0
        %5581 = vmatprep.subr.mxu0 0.0
        %5582 = vmatpush1.xpose.msra.mxu0 %v5534
        %5583 = vmatprep.subr.mxu0 0.0
        %5584 = vmatpush1.xpose.msra.mxu0 %v5537
        %5585 = vmatprep.subr.mxu0 0.0
        %5586 = vmatpush1.xpose.msra.mxu0 %v5540
        %5587 = vmatprep.subr.mxu0 0.0
        %5588 = vmatpush1.xpose.msra.mxu0 %v5543
        %5589 = vmatprep.subr.mxu0 0.0
        %5590 = vmatpush1.xpose.msra.mxu0 %v5546
        %5591 = vmatprep.subr.mxu0 0.0
        %5592 = vmatpush1.xpose.msra.mxu0 %v5549
        %5593 = vmatprep.subr.mxu0 0.0
        %5594 = vmatpush1.xpose.msra.mxu0 %v5552
        %5595 = vmatprep.subr.mxu0 0.0
        %5596 = vmatpush1.xpose.msra.mxu0 %v5555
        %5597 = vmatprep.subr.mxu0 0.0
        %5598 = vmatpush1.xpose.msra.mxu0 %v5558
        %5599 = vmatprep.subr.mxu0 0.0
        %5600 = vmatpush1.xpose.msra.mxu0 %v5561
        %5601 = vmatprep.subr.mxu0 0.0
        %5602 = vmatpush1.xpose.msra.mxu0 %v5564
        %5603 = vmatprep.subr.mxu0 0.0
        %5604 = vmatpush1.xpose.msra.mxu0 %v5567
        %5605 = vmatprep.subr.mxu0 0.0
        %5606 = vmatpush1.xpose.msra.mxu0 %v5570
        %5607 = vmatprep.subr.mxu0 0.0
        %5608 = vmatpush1.xpose.msra.mxu0 %v5573
        %5609 = vmatprep.subr.mxu0 0.0
        %5610 = vmatpush1.xpose.msra.mxu0 %v5576
        %5611 = vmatprep.subr.mxu0 0.0
        %5612 = vmatpush1.xpose.msra.mxu0 %v5579
        %5613 = vmatprep.subr.mxu0 0.0
        %5614 = vmatpush1.xpose.msra.mxu0 0.0
        %5615 = vmatprep.subr.mxu0 0.0
        %5616 = vmatpush1.xpose.msra.mxu0 0.0
        %5617 = vmatprep.subr.mxu0 0.0
        %5618 = vmatpush1.xpose.msra.mxu0 0.0
        %5619 = vmatprep.subr.mxu0 0.0
        %5620 = vmatpush1.xpose.msra.mxu0 0.0
        %5621 = vmatprep.subr.mxu0 0.0
        %5622 = vmatpush1.xpose.msra.mxu0 0.0
        %5623 = vmatprep.subr.mxu0 0.0
        %5624 = vmatpush1.xpose.msra.mxu0 0.0
        %5625 = vmatprep.subr.mxu0 0.0
        %5626 = vmatpush1.xpose.msra.mxu0 0.0
        %5627 = vmatprep.subr.mxu0 0.0
        %5628 = vmatpush1.xpose.msra.mxu0 0.0
        %5629 = vmatprep.subr.mxu0 0.0
        %5630 = vmatpush1.xpose.msra.mxu0 0.0
        %5631 = vmatprep.subr.mxu0 0.0
        %5632 = vmatpush1.xpose.msra.mxu0 0.0
        %5633 = vmatprep.subr.mxu0 0.0
        %5634 = vmatpush1.xpose.msra.mxu0 0.0
        %5635 = vmatprep.subr.mxu0 0.0
        %5636 = vmatpush1.xpose.msra.mxu0 0.0
        %5637 = vmatprep.subr.mxu0 0.0
        %5638 = vmatpush1.xpose.msra.mxu0 0.0
        %5639 = vmatprep.subr.mxu0 0.0
        %5640 = vmatpush1.xpose.msra.mxu0 0.0
        %5641 = vmatprep.subr.mxu0 0.0
        %5642 = vmatpush1.xpose.msra.mxu0 0.0
        %5643 = vmatprep.subr.mxu0 0.0
        %5644 = vmatpush1.xpose.msra.mxu0 0.0
        %5645 = vmatprep.mubr.f32.mxu0 0.0
        %5646 = vmatmul.mubr.f32.gmra.mrb[0].mxu0 %v5177
        %v5647 = vpop.f32.mrb[0].mxu0
        %v5648 = vadd.f32 %v5175, %v5647
        %v5649 = vpop.f32.mrb[0].mxu0
        %5650 = vdwg.mxu0
        %v5652 = vsel %vm4171, %v5101, 0
        %v5655 = vsel %vm4171, %v5102, 0
        %v5658 = vsel %vm4171, %v5103, 0
        %v5661 = vsel %vm4171, %v5104, 0
        %v5664 = vsel %vm4171, %v5105, 0
        %v5667 = vsel %vm4171, %v5106, 0
        %v5670 = vsel %vm4171, %v5107, 0
        %v5673 = vsel %vm4171, %v5108, 0
        %v5676 = vsel %vm4171, %v5109, 0
        %v5679 = vsel %vm4171, %v5110, 0
        %v5682 = vsel %vm4171, %v5111, 0
        %v5685 = vsel %vm4171, %v5112, 0
        %v5688 = vsel %vm4171, %v5113, 0
        %v5691 = vsel %vm4171, %v5114, 0
        %v5694 = vsel %vm4171, %v5115, 0
        %v5697 = vsel %vm4171, %v5116, 0
        %5699 = vmatprep.subr.mxu0 0.0
        %5700 = vmatpush1.xpose.msra.mxu0 %v5652
        %5701 = vmatprep.subr.mxu0 0.0
        %5702 = vmatpush1.xpose.msra.mxu0 %v5655
        %5703 = vmatprep.subr.mxu0 0.0
        %5704 = vmatpush1.xpose.msra.mxu0 %v5658
        %5705 = vmatprep.subr.mxu0 0.0
        %5706 = vmatpush1.xpose.msra.mxu0 %v5661
        %5707 = vmatprep.subr.mxu0 0.0
        %5708 = vmatpush1.xpose.msra.mxu0 %v5664
        %5709 = vmatprep.subr.mxu0 0.0
        %5710 = vmatpush1.xpose.msra.mxu0 %v5667
        %5711 = vmatprep.subr.mxu0 0.0
        %5712 = vmatpush1.xpose.msra.mxu0 %v5670
        %5713 = vmatprep.subr.mxu0 0.0
        %5714 = vmatpush1.xpose.msra.mxu0 %v5673
        %5715 = vmatprep.subr.mxu0 0.0
        %5716 = vmatpush1.xpose.msra.mxu0 %v5676
        %5717 = vmatprep.subr.mxu0 0.0
        %5718 = vmatpush1.xpose.msra.mxu0 %v5679
        %5719 = vmatprep.subr.mxu0 0.0
        %5720 = vmatpush1.xpose.msra.mxu0 %v5682
        %5721 = vmatprep.subr.mxu0 0.0
        %5722 = vmatpush1.xpose.msra.mxu0 %v5685
        %5723 = vmatprep.subr.mxu0 0.0
        %5724 = vmatpush1.xpose.msra.mxu0 %v5688
        %5725 = vmatprep.subr.mxu0 0.0
        %5726 = vmatpush1.xpose.msra.mxu0 %v5691
        %5727 = vmatprep.subr.mxu0 0.0
        %5728 = vmatpush1.xpose.msra.mxu0 %v5694
        %5729 = vmatprep.subr.mxu0 0.0
        %5730 = vmatpush1.xpose.msra.mxu0 %v5697
        %5731 = vmatprep.subr.mxu0 0.0
        %5732 = vmatpush1.xpose.msra.mxu0 0.0
        %5733 = vmatprep.subr.mxu0 0.0
        %5734 = vmatpush1.xpose.msra.mxu0 0.0
        %5735 = vmatprep.subr.mxu0 0.0
        %5736 = vmatpush1.xpose.msra.mxu0 0.0
        %5737 = vmatprep.subr.mxu0 0.0
        %5738 = vmatpush1.xpose.msra.mxu0 0.0
        %5739 = vmatprep.subr.mxu0 0.0
        %5740 = vmatpush1.xpose.msra.mxu0 0.0
        %5741 = vmatprep.subr.mxu0 0.0
        %5742 = vmatpush1.xpose.msra.mxu0 0.0
        %5743 = vmatprep.subr.mxu0 0.0
        %5744 = vmatpush1.xpose.msra.mxu0 0.0
        %5745 = vmatprep.subr.mxu0 0.0
        %5746 = vmatpush1.xpose.msra.mxu0 0.0
        %5747 = vmatprep.subr.mxu0 0.0
        %5748 = vmatpush1.xpose.msra.mxu0 0.0
        %5749 = vmatprep.subr.mxu0 0.0
        %5750 = vmatpush1.xpose.msra.mxu0 0.0
        %5751 = vmatprep.subr.mxu0 0.0
        %5752 = vmatpush1.xpose.msra.mxu0 0.0
        %5753 = vmatprep.subr.mxu0 0.0
        %5754 = vmatpush1.xpose.msra.mxu0 0.0
        %5755 = vmatprep.subr.mxu0 0.0
        %5756 = vmatpush1.xpose.msra.mxu0 0.0
        %5757 = vmatprep.subr.mxu0 0.0
        %5758 = vmatpush1.xpose.msra.mxu0 0.0
        %5759 = vmatprep.subr.mxu0 0.0
        %5760 = vmatpush1.xpose.msra.mxu0 0.0
        %5761 = vmatprep.subr.mxu0 0.0
        %5762 = vmatpush1.xpose.msra.mxu0 0.0
        %5763 = vmatprep.mubr.f32.mxu0 0.0
        %5764 = vmatmul.mubr.f32.gmra.mrb[0].mxu0 %v5177
        %v5765 = vpop.f32.mrb[0].mxu0
        %v5766 = vadd.f32 %v5175, %v5765
        %v5767 = vpop.f32.mrb[0].mxu0
        %5768 = vdwg.mxu0
        %v5770 = vsel %vm4171, %v5117, 0
        %v5773 = vsel %vm4171, %v5118, 0
        %v5776 = vsel %vm4171, %v5119, 0
        %v5779 = vsel %vm4171, %v5120, 0
        %v5782 = vsel %vm4171, %v5121, 0
        %v5785 = vsel %vm4171, %v5122, 0
        %v5788 = vsel %vm4171, %v5123, 0
        %v5791 = vsel %vm4171, %v5124, 0
        %v5794 = vsel %vm4171, %v5125, 0
        %v5797 = vsel %vm4171, %v5126, 0
        %v5800 = vsel %vm4171, %v5127, 0
        %v5803 = vsel %vm4171, %v5128, 0
        %v5806 = vsel %vm4171, %v5129, 0
        %v5809 = vsel %vm4171, %v5130, 0
        %v5812 = vsel %vm4171, %v5131, 0
        %v5815 = vsel %vm4171, %v5132, 0
        %5817 = vmatprep.subr.mxu0 0.0
        %5818 = vmatpush1.xpose.msra.mxu0 %v5770
        %5819 = vmatprep.subr.mxu0 0.0
        %5820 = vmatpush1.xpose.msra.mxu0 %v5773
        %5821 = vmatprep.subr.mxu0 0.0
        %5822 = vmatpush1.xpose.msra.mxu0 %v5776
        %5823 = vmatprep.subr.mxu0 0.0
        %5824 = vmatpush1.xpose.msra.mxu0 %v5779
        %5825 = vmatprep.subr.mxu0 0.0
        %5826 = vmatpush1.xpose.msra.mxu0 %v5782
        %5827 = vmatprep.subr.mxu0 0.0
        %5828 = vmatpush1.xpose.msra.mxu0 %v5785
        %5829 = vmatprep.subr.mxu0 0.0
        %5830 = vmatpush1.xpose.msra.mxu0 %v5788
        %5831 = vmatprep.subr.mxu0 0.0
        %5832 = vmatpush1.xpose.msra.mxu0 %v5791
        %5833 = vmatprep.subr.mxu0 0.0
        %5834 = vmatpush1.xpose.msra.mxu0 %v5794
        %5835 = vmatprep.subr.mxu0 0.0
        %5836 = vmatpush1.xpose.msra.mxu0 %v5797
        %5837 = vmatprep.subr.mxu0 0.0
        %5838 = vmatpush1.xpose.msra.mxu0 %v5800
        %5839 = vmatprep.subr.mxu0 0.0
        %5840 = vmatpush1.xpose.msra.mxu0 %v5803
        %5841 = vmatprep.subr.mxu0 0.0
        %5842 = vmatpush1.xpose.msra.mxu0 %v5806
        %5843 = vmatprep.subr.mxu0 0.0
        %5844 = vmatpush1.xpose.msra.mxu0 %v5809
        %5845 = vmatprep.subr.mxu0 0.0
        %5846 = vmatpush1.xpose.msra.mxu0 %v5812
        %5847 = vmatprep.subr.mxu0 0.0
        %5848 = vmatpush1.xpose.msra.mxu0 %v5815
        %5849 = vmatprep.subr.mxu0 0.0
        %5850 = vmatpush1.xpose.msra.mxu0 0.0
        %5851 = vmatprep.subr.mxu0 0.0
        %5852 = vmatpush1.xpose.msra.mxu0 0.0
        %5853 = vmatprep.subr.mxu0 0.0
        %5854 = vmatpush1.xpose.msra.mxu0 0.0
        %5855 = vmatprep.subr.mxu0 0.0
        %5856 = vmatpush1.xpose.msra.mxu0 0.0
        %5857 = vmatprep.subr.mxu0 0.0
        %5858 = vmatpush1.xpose.msra.mxu0 0.0
        %5859 = vmatprep.subr.mxu0 0.0
        %5860 = vmatpush1.xpose.msra.mxu0 0.0
        %5861 = vmatprep.subr.mxu0 0.0
        %5862 = vmatpush1.xpose.msra.mxu0 0.0
        %5863 = vmatprep.subr.mxu0 0.0
        %5864 = vmatpush1.xpose.msra.mxu0 0.0
        %5865 = vmatprep.subr.mxu0 0.0
        %5866 = vmatpush1.xpose.msra.mxu0 0.0
        %5867 = vmatprep.subr.mxu0 0.0
        %5868 = vmatpush1.xpose.msra.mxu0 0.0
        %5869 = vmatprep.subr.mxu0 0.0
        %5870 = vmatpush1.xpose.msra.mxu0 0.0
        %5871 = vmatprep.subr.mxu0 0.0
        %5872 = vmatpush1.xpose.msra.mxu0 0.0
        %5873 = vmatprep.subr.mxu0 0.0
        %5874 = vmatpush1.xpose.msra.mxu0 0.0
        %5875 = vmatprep.subr.mxu0 0.0
        %5876 = vmatpush1.xpose.msra.mxu0 0.0
        %5877 = vmatprep.subr.mxu0 0.0
        %5878 = vmatpush1.xpose.msra.mxu0 0.0
        %5879 = vmatprep.subr.mxu0 0.0
        %5880 = vmatpush1.xpose.msra.mxu0 0.0
        %5881 = vmatprep.mubr.f32.mxu0 0.0
        %5882 = vmatmul.mubr.f32.gmra.mrb[0].mxu0 %v5177
        %v5883 = vpop.f32.mrb[0].mxu0
        %v5884 = vadd.f32 %v5175, %v5883
        %v5885 = vpop.f32.mrb[0].mxu0
        %5886 = vdwg.mxu0
        %v5888 = vsel %vm4171, %v5133, 0
        %v5891 = vsel %vm4171, %v5134, 0
        %v5894 = vsel %vm4171, %v5135, 0
        %v5897 = vsel %vm4171, %v5136, 0
        %v5900 = vsel %vm4171, %v5137, 0
        %v5903 = vsel %vm4171, %v5138, 0
        %v5906 = vsel %vm4171, %v5139, 0
        %v5909 = vsel %vm4171, %v5140, 0
        %v5912 = vsel %vm4171, %v5141, 0
        %v5915 = vsel %vm4171, %v5142, 0
        %v5918 = vsel %vm4171, %v5143, 0
        %v5921 = vsel %vm4171, %v5144, 0
        %v5924 = vsel %vm4171, %v5145, 0
        %v5927 = vsel %vm4171, %v5146, 0
        %v5930 = vsel %vm4171, %v5147, 0
        %v5933 = vsel %vm4171, %v5148, 0
        %5935 = vmatprep.subr.mxu0 0.0
        %5936 = vmatpush1.xpose.msra.mxu0 %v5888
        %5937 = vmatprep.subr.mxu0 0.0
        %5938 = vmatpush1.xpose.msra.mxu0 %v5891
        %5939 = vmatprep.subr.mxu0 0.0
        %5940 = vmatpush1.xpose.msra.mxu0 %v5894
        %5941 = vmatprep.subr.mxu0 0.0
        %5942 = vmatpush1.xpose.msra.mxu0 %v5897
        %5943 = vmatprep.subr.mxu0 0.0
        %5944 = vmatpush1.xpose.msra.mxu0 %v5900
        %5945 = vmatprep.subr.mxu0 0.0
        %5946 = vmatpush1.xpose.msra.mxu0 %v5903
        %5947 = vmatprep.subr.mxu0 0.0
        %5948 = vmatpush1.xpose.msra.mxu0 %v5906
        %5949 = vmatprep.subr.mxu0 0.0
        %5950 = vmatpush1.xpose.msra.mxu0 %v5909
        %5951 = vmatprep.subr.mxu0 0.0
        %5952 = vmatpush1.xpose.msra.mxu0 %v5912
        %5953 = vmatprep.subr.mxu0 0.0
        %5954 = vmatpush1.xpose.msra.mxu0 %v5915
        %5955 = vmatprep.subr.mxu0 0.0
        %5956 = vmatpush1.xpose.msra.mxu0 %v5918
        %5957 = vmatprep.subr.mxu0 0.0
        %5958 = vmatpush1.xpose.msra.mxu0 %v5921
        %5959 = vmatprep.subr.mxu0 0.0
        %5960 = vmatpush1.xpose.msra.mxu0 %v5924
        %5961 = vmatprep.subr.mxu0 0.0
        %5962 = vmatpush1.xpose.msra.mxu0 %v5927
        %5963 = vmatprep.subr.mxu0 0.0
        %5964 = vmatpush1.xpose.msra.mxu0 %v5930
        %5965 = vmatprep.subr.mxu0 0.0
        %5966 = vmatpush1.xpose.msra.mxu0 %v5933
        %5967 = vmatprep.subr.mxu0 0.0
        %5968 = vmatpush1.xpose.msra.mxu0 0.0
        %5969 = vmatprep.subr.mxu0 0.0
        %5970 = vmatpush1.xpose.msra.mxu0 0.0
        %5971 = vmatprep.subr.mxu0 0.0
        %5972 = vmatpush1.xpose.msra.mxu0 0.0
        %5973 = vmatprep.subr.mxu0 0.0
        %5974 = vmatpush1.xpose.msra.mxu0 0.0
        %5975 = vmatprep.subr.mxu0 0.0
        %5976 = vmatpush1.xpose.msra.mxu0 0.0
        %5977 = vmatprep.subr.mxu0 0.0
        %5978 = vmatpush1.xpose.msra.mxu0 0.0
        %5979 = vmatprep.subr.mxu0 0.0
        %5980 = vmatpush1.xpose.msra.mxu0 0.0
        %5981 = vmatprep.subr.mxu0 0.0
        %5982 = vmatpush1.xpose.msra.mxu0 0.0
        %5983 = vmatprep.subr.mxu0 0.0
        %5984 = vmatpush1.xpose.msra.mxu0 0.0
        %5985 = vmatprep.subr.mxu0 0.0
        %5986 = vmatpush1.xpose.msra.mxu0 0.0
        %5987 = vmatprep.subr.mxu0 0.0
        %5988 = vmatpush1.xpose.msra.mxu0 0.0
        %5989 = vmatprep.subr.mxu0 0.0
        %5990 = vmatpush1.xpose.msra.mxu0 0.0
        %5991 = vmatprep.subr.mxu0 0.0
        %5992 = vmatpush1.xpose.msra.mxu0 0.0
        %5993 = vmatprep.subr.mxu0 0.0
        %5994 = vmatpush1.xpose.msra.mxu0 0.0
        %5995 = vmatprep.subr.mxu0 0.0
        %5996 = vmatpush1.xpose.msra.mxu0 0.0
        %5997 = vmatprep.subr.mxu0 0.0
        %5998 = vmatpush1.xpose.msra.mxu0 0.0
        %5999 = vmatprep.mubr.f32.mxu0 0.0
        %6000 = vmatmul.mubr.f32.gmra.mrb[0].mxu0 %v5177
        %v6001 = vpop.f32.mrb[0].mxu0
        %v6002 = vadd.f32 %v5175, %v6001
        %v6003 = vpop.f32.mrb[0].mxu0
        %6004 = vdwg.mxu0
        %v6006 = vsel %vm4171, %v5149, 0
        %v6009 = vsel %vm4171, %v5150, 0
        %v6012 = vsel %vm4171, %v5151, 0
        %v6015 = vsel %vm4171, %v5152, 0
        %v6018 = vsel %vm4171, %v5153, 0
        %v6021 = vsel %vm4171, %v5154, 0
        %v6024 = vsel %vm4171, %v5155, 0
        %v6027 = vsel %vm4171, %v5156, 0
        %v6030 = vsel %vm4171, %v5157, 0
        %v6033 = vsel %vm4171, %v5158, 0
        %v6036 = vsel %vm4171, %v5159, 0
        %v6039 = vsel %vm4171, %v5160, 0
        %v6042 = vsel %vm4171, %v5161, 0
        %v6045 = vsel %vm4171, %v5162, 0
        %v6048 = vsel %vm4171, %v5163, 0
        %v6051 = vsel %vm4171, %v5164, 0
        %6053 = vmatprep.subr.mxu0 0.0
        %6054 = vmatpush1.xpose.msra.mxu0 %v6006
        %6055 = vmatprep.subr.mxu0 0.0
        %6056 = vmatpush1.xpose.msra.mxu0 %v6009
        %6057 = vmatprep.subr.mxu0 0.0
        %6058 = vmatpush1.xpose.msra.mxu0 %v6012
        %6059 = vmatprep.subr.mxu0 0.0
        %6060 = vmatpush1.xpose.msra.mxu0 %v6015
        %6061 = vmatprep.subr.mxu0 0.0
        %6062 = vmatpush1.xpose.msra.mxu0 %v6018
        %6063 = vmatprep.subr.mxu0 0.0
        %6064 = vmatpush1.xpose.msra.mxu0 %v6021
        %6065 = vmatprep.subr.mxu0 0.0
        %6066 = vmatpush1.xpose.msra.mxu0 %v6024
        %6067 = vmatprep.subr.mxu0 0.0
        %6068 = vmatpush1.xpose.msra.mxu0 %v6027
        %6069 = vmatprep.subr.mxu0 0.0
        %6070 = vmatpush1.xpose.msra.mxu0 %v6030
        %6071 = vmatprep.subr.mxu0 0.0
        %6072 = vmatpush1.xpose.msra.mxu0 %v6033
        %6073 = vmatprep.subr.mxu0 0.0
        %6074 = vmatpush1.xpose.msra.mxu0 %v6036
        %6075 = vmatprep.subr.mxu0 0.0
        %6076 = vmatpush1.xpose.msra.mxu0 %v6039
        %6077 = vmatprep.subr.mxu0 0.0
        %6078 = vmatpush1.xpose.msra.mxu0 %v6042
        %6079 = vmatprep.subr.mxu0 0.0
        %6080 = vmatpush1.xpose.msra.mxu0 %v6045
        %6081 = vmatprep.subr.mxu0 0.0
        %6082 = vmatpush1.xpose.msra.mxu0 %v6048
        %6083 = vmatprep.subr.mxu0 0.0
        %6084 = vmatpush1.xpose.msra.mxu0 %v6051
        %6085 = vmatprep.subr.mxu0 0.0
        %6086 = vmatpush1.xpose.msra.mxu0 0.0
        %6087 = vmatprep.subr.mxu0 0.0
        %6088 = vmatpush1.xpose.msra.mxu0 0.0
        %6089 = vmatprep.subr.mxu0 0.0
        %6090 = vmatpush1.xpose.msra.mxu0 0.0
        %6091 = vmatprep.subr.mxu0 0.0
        %6092 = vmatpush1.xpose.msra.mxu0 0.0
        %6093 = vmatprep.subr.mxu0 0.0
        %6094 = vmatpush1.xpose.msra.mxu0 0.0
        %6095 = vmatprep.subr.mxu0 0.0
        %6096 = vmatpush1.xpose.msra.mxu0 0.0
        %6097 = vmatprep.subr.mxu0 0.0
        %6098 = vmatpush1.xpose.msra.mxu0 0.0
        %6099 = vmatprep.subr.mxu0 0.0
        %6100 = vmatpush1.xpose.msra.mxu0 0.0
        %6101 = vmatprep.subr.mxu0 0.0
        %6102 = vmatpush1.xpose.msra.mxu0 0.0
        %6103 = vmatprep.subr.mxu0 0.0
        %6104 = vmatpush1.xpose.msra.mxu0 0.0
        %6105 = vmatprep.subr.mxu0 0.0
        %6106 = vmatpush1.xpose.msra.mxu0 0.0
        %6107 = vmatprep.subr.mxu0 0.0
        %6108 = vmatpush1.xpose.msra.mxu0 0.0
        %6109 = vmatprep.subr.mxu0 0.0
        %6110 = vmatpush1.xpose.msra.mxu0 0.0
        %6111 = vmatprep.subr.mxu0 0.0
        %6112 = vmatpush1.xpose.msra.mxu0 0.0
        %6113 = vmatprep.subr.mxu0 0.0
        %6114 = vmatpush1.xpose.msra.mxu0 0.0
        %6115 = vmatprep.subr.mxu0 0.0
        %6116 = vmatpush1.xpose.msra.mxu0 0.0
        %6117 = vmatprep.mubr.f32.mxu0 0.0
        %6118 = vmatmul.mubr.f32.gmra.mrb[0].mxu0 %v5177
        %v6119 = vpop.f32.mrb[0].mxu0
        %v6120 = vadd.f32 %v5175, %v6119
        %v6121 = vpop.f32.mrb[0].mxu0
        %6122 = vdwg.mxu0
        %v6123 = vlaneseq
        %v6124 = vand.u32 %v6123, 127
        %vm6125 = vcmp.lt.s32.totalorder %v6124, 8
        %v6126 = vsel %vm6125, %v5294, -1e+30
        %v6127 = vsel %vm6125, %v5412, -1e+30
        %v6128 = vsel %vm6125, %v5530, -1e+30
        %v6129 = vsel %vm6125, %v5648, -1e+30
        %v6130 = vsel %vm6125, %v5766, -1e+30
        %v6131 = vsel %vm6125, %v5884, -1e+30
        %v6132 = vsel %vm6125, %v6002, -1e+30
        %v6133 = vsel %vm6125, %v6120, -1e+30
        %vm6134 = vcmask 1040384
        %v6135 = vsel %vm6134, %v6126, -inf
        %6136 = vmax.xlane.f32.xlu0 %v6135
        %v6137 = vpop.xlane.xlu0 %6136
        %v6138 = vsel %vm6134, %v6127, -inf
        %6139 = vmax.xlane.f32.xlu0 %v6138
        %v6140 = vpop.xlane.xlu0 %6139
        %v6141 = vsel %vm6134, %v6128, -inf
        %6142 = vmax.xlane.f32.xlu0 %v6141
        %v6143 = vpop.xlane.xlu0 %6142
        %v6144 = vsel %vm6134, %v6129, -inf
        %6145 = vmax.xlane.f32.xlu0 %v6144
        %v6146 = vpop.xlane.xlu0 %6145
        %v6147 = vsel %vm6134, %v6130, -inf
        %6148 = vmax.xlane.f32.xlu0 %v6147
        %v6149 = vpop.xlane.xlu0 %6148
        %v6150 = vsel %vm6134, %v6131, -inf
        %6151 = vmax.xlane.f32.xlu0 %v6150
        %v6152 = vpop.xlane.xlu0 %6151
        %v6153 = vsel %vm6134, %v6132, -inf
        %6154 = vmax.xlane.f32.xlu0 %v6153
        %v6155 = vpop.xlane.xlu0 %6154
        %v6156 = vsel %vm6134, %v6133, -inf
        %6157 = vmax.xlane.f32.xlu0 %v6156
        %v6158 = vpop.xlane.xlu0 %6157
        %v6159 = vsub.f32 %v6126, %v6137
        %v6160 = vsub.f32 %v6127, %v6140
        %v6161 = vsub.f32 %v6128, %v6143
        %v6162 = vsub.f32 %v6129, %v6146
        %v6163 = vsub.f32 %v6130, %v6149
        %v6164 = vsub.f32 %v6131, %v6152
        %v6165 = vsub.f32 %v6132, %v6155
        %v6166 = vsub.f32 %v6133, %v6158
        %v6167 = vmul.f32 %v6159, 1.442695
        %v6168 = vpow.pop %v6167
        %v6169 = vmul.f32 %v6160, 1.442695
        %v6170 = vpow.pop %v6169
        %v6171 = vmul.f32 %v6161, 1.442695
        %v6172 = vpow.pop %v6171
        %v6173 = vmul.f32 %v6162, 1.442695
        %v6174 = vpow.pop %v6173
        %v6175 = vmul.f32 %v6163, 1.442695
        %v6176 = vpow.pop %v6175
        %v6177 = vmul.f32 %v6164, 1.442695
        %v6178 = vpow.pop %v6177
        %v6179 = vmul.f32 %v6165, 1.442695
        %v6180 = vpow.pop %v6179
        %v6181 = vmul.f32 %v6166, 1.442695
        %v6182 = vpow.pop %v6181
        %v6183 = vsel %vm6134, %v6168, 0.0
        %6184 = vadd.xlane.f32.xlu0 %v6183
        %v6185 = vpop.xlane.xlu0 %6184
        %v6186 = vsel %vm6134, %v6170, 0.0
        %6187 = vadd.xlane.f32.xlu0 %v6186
        %v6188 = vpop.xlane.xlu0 %6187
        %v6189 = vsel %vm6134, %v6172, 0.0
        %6190 = vadd.xlane.f32.xlu0 %v6189
        %v6191 = vpop.xlane.xlu0 %6190
        %v6192 = vsel %vm6134, %v6174, 0.0
        %6193 = vadd.xlane.f32.xlu0 %v6192
        %v6194 = vpop.xlane.xlu0 %6193
        %v6195 = vsel %vm6134, %v6176, 0.0
        %6196 = vadd.xlane.f32.xlu0 %v6195
        %v6197 = vpop.xlane.xlu0 %6196
        %v6198 = vsel %vm6134, %v6178, 0.0
        %6199 = vadd.xlane.f32.xlu0 %v6198
        %v6200 = vpop.xlane.xlu0 %6199
        %v6201 = vsel %vm6134, %v6180, 0.0
        %6202 = vadd.xlane.f32.xlu0 %v6201
        %v6203 = vpop.xlane.xlu0 %6202
        %v6204 = vsel %vm6134, %v6182, 0.0
        %6205 = vadd.xlane.f32.xlu0 %v6204
        %v6206 = vpop.xlane.xlu0 %6205
        %v6207 = vrcp.pop %v6185
        %v6208 = vrcp.pop %v6188
        %v6209 = vrcp.pop %v6191
        %v6210 = vrcp.pop %v6194
        %v6211 = vrcp.pop %v6197
        %v6212 = vrcp.pop %v6200
        %v6213 = vrcp.pop %v6203
        %v6214 = vrcp.pop %v6206
        %v6215 = vmul.f32 %v6168, %v6207
        %v6216 = vmul.f32 %v6170, %v6208
        %v6217 = vmul.f32 %v6172, %v6209
        %v6218 = vmul.f32 %v6174, %v6210
        %v6219 = vmul.f32 %v6176, %v6211
        %v6220 = vmul.f32 %v6178, %v6212
        %v6221 = vmul.f32 %v6180, %v6213
        %v6222 = vmul.f32 %v6182, %v6214
        %6223 = vst [vmem:[%s443] sm:$0x1] %v6215
        %6224 = vst [vmem:[%s443 + $0x1] sm:$0x1] %v6216
        %6225 = vst [vmem:[%s443 + $0x2] sm:$0x1] %v6217
        %6226 = vst [vmem:[%s443 + $0x3] sm:$0x1] %v6218
        %6227 = vst [vmem:[%s443 + $0x4] sm:$0x1] %v6219
        %6228 = vst [vmem:[%s443 + $0x5] sm:$0x1] %v6220
        %6229 = vst [vmem:[%s443 + $0x6] sm:$0x1] %v6221
        %6230 = vst [vmem:[%s443 + $0x7] sm:$0x1] %v6222
        %s6231 = sand.u32 %s314, 1
        %s6232 = scalar_lea.sflag [#allocation4], %s6231
        %s6233 = sand.u32 %s314, 1
        %s6234 = smul.addr %s6233, 8
        %s6235 = scalar_lea.vmem [#allocation3], %s6234
        // Predicated region
        $region69: #{tpu_custom_call.1} parent=67 // pred_check
          %p6236 = pneg %p324
        $region70: #{tpu_custom_call.1} parent=67 // pred_check_branch
          %6238 = sbr.rel (%p6236) target = $region72
        $region71: #{tpu_custom_call.1} parent=67 // pred_region
          %s6239 = smul.u32 8, %s33
          %s6241 = ssub.s32 128, 128
          %6242 = vsyncadd %s6232, %s6241
          %s6243 = smul.addr %s32, 8
          %s6244 = sadd.s32 %s6239, %s6243
          %s6245 = smul.addr %s6244, 16
          %s6246 = scalar_lea.hbm %s12, %s6245
          %s6247 = sshll.u32 %s6235, 4
          %s6248 = int_to_ptr.vmem [resolvable:$true] %s6247
          %6253 = dma.vmem_to_hbm [thread:$0]  %s6248, 128, %s6246, %s6232, 16, 16, 1
        $region72: #{tpu_custom_call.1} parent=67 // pred_fallthru
          _
      $region68: #{tpu_custom_call.1} parent=5 // pred_fallthru
        _
      %p6254 = scmp.le.s32.totalorder 2, %s23
      // Predicated region
      $region73: #{tpu_custom_call.1} parent=5 // pred_check
        %p6255 = pneg %p6254
      $region74: #{tpu_custom_call.1} parent=5 // pred_check_branch
        %6257 = sbr.rel (%p6255) target = $region76
      $region75: #{tpu_custom_call.1} parent=5 // pred_region
        %s6258 = ssub.s32 %s23, 2
        // Predicated region
        $region77: #{tpu_custom_call.1} parent=75 // pred_check
          %p6259 = pneg %p330
        $region78: #{tpu_custom_call.1} parent=75 // pred_check_branch
          %6261 = sbr.rel (%p6259) target = $region80
        $region79: #{tpu_custom_call.1} parent=75 // pred_region
          %s6262 = sand.u32 %s315, 1
          %s6263 = scalar_lea.sflag [#allocation4], %s6262
          %s6264 = sand.u32 %s315, 1
          %s6265 = smul.addr %s6264, 8
          %s6266 = scalar_lea.vmem [#allocation3], %s6265
          %6267 = dma.done %s6263, 128
        $region80: #{tpu_custom_call.1} parent=75 // pred_fallthru
          _
      $region76: #{tpu_custom_call.1} parent=5 // pred_fallthru
        _
    $region6: #{tpu_custom_call.1} parent=1 // loop_footer
      %s27 = sadd.s32 1, %s23
    $region7: #{tpu_custom_call.1} parent=1 // loop_footer_branch
      %22 = sbr.rel target = $region3
    $region8: #{tpu_custom_call.1} parent=1 // loop_exit
      _
    %6268 = vsyncpa [#allocation4], 1
    %s6269 = scalar_lea.sflag [#allocation4], 1
    %6270 = vsyncpa %s6269, 1

</llo_original>
